<compile_context>
chip_gen: v5e
topology: v5e:2x2
jax: 0.10.0
libtpu: 0.0.40
codegen_flags: <defaults>
</compile_context>

<pallas_src>
import functools

import jax
import jax.numpy as jnp
from jax.experimental import pallas as pl
from jax.experimental.pallas import tpu as pltpu


# ------------------------------------------------------------------ kernel math


def _gatv2(x, ea, soh, doh, doht, w_lr, b_lr, w_e, att_bd, bias, *, heads, out_ch):
    """Fused GATv2Conv on VMEM-resident values. Returns (N, heads*out_ch) float32."""
    HC = heads * out_ch
    # fused lin_l | lin_r projection: one lane-dense (N, K) @ (K, 2*HC) matmul
    xlr = jnp.dot(x, w_lr, preferred_element_type=jnp.float32) + b_lr
    xl = xlr[:, :HC]                 # lin_l(x): source / value projection
    xr = xlr[:, HC:]                 # lin_r(x): target projection
    ep = jnp.dot(ea, w_e, preferred_element_type=jnp.float32)            # (E, HC)

    # per-edge pre-activation: gathers expressed as one-hot matmuls (MXU)
    s = (jnp.dot(soh, xl, preferred_element_type=jnp.float32)            # lin_l(x_src)
         + jnp.dot(doh, xr, preferred_element_type=jnp.float32)          # lin_r(x_dst)
         + ep)
    s = jnp.where(s > 0, s, 0.2 * s)                                     # leaky_relu(0.2)

    # per-edge per-head logits: block-diagonal attention matmul (E, HC) @ (HC, H)
    logit = jnp.dot(s, att_bd, preferred_element_type=jnp.float32)       # (E, H)

    # dense (N, N) adjacency mask [dst, src], built on the (otherwise idle) MXU
    mask = jnp.dot(doht, soh, preferred_element_type=jnp.float32) > 0.5
    neg = jnp.float32(-1e30)

    outs = []
    for h in range(heads):           # static unroll; heads is small
        # scatter per-edge logits into dense [dst, src] via matmul (edges are unique)
        dense = jnp.dot(doht, logit[:, h:h + 1] * soh,
                        preferred_element_type=jnp.float32)              # (N, N)
        lg = jnp.where(mask, dense, neg)
        mx = jnp.max(lg, axis=1, keepdims=True)
        p = jnp.where(mask, jnp.exp(lg - mx), 0.0)
        denom = jnp.sum(p, axis=1, keepdims=True) + 1e-16                # PyG softmax eps
        alpha = p * pl.reciprocal(denom, approx=True)                    # EUP, not VPU div
        outs.append(jnp.dot(alpha, xl[:, h * out_ch:(h + 1) * out_ch],
                            preferred_element_type=jnp.float32))         # (N, C)
    # single lane-dense (N, HC) result (one unmasked store by the caller)
    return jnp.concatenate(outs, axis=1) + bias


def _bn_silu(x, g, b, mu, var):
    y = (x - mu) * jax.lax.rsqrt(var + 1e-5) * g + b
    return y * jax.nn.sigmoid(y)


# ------------------------------------------------------------------ fused layer kernels


def conv1_kernel(x_ref, ea_ref, soh_ref, doh_ref, doht_ref,
                 w1_ref, b1_ref, wlr_ref, blr_ref, we_ref, att_ref, gb_ref,
                 g_ref, b_ref, mu_ref, var_ref, o_ref, *, heads, out_ch):
    # linear1 prologue
    x1 = jnp.dot(x_ref[...], w1_ref[...], preferred_element_type=jnp.float32) + b1_ref[...]
    h = _gatv2(x1, ea_ref[...], soh_ref[...], doh_ref[...], doht_ref[...],
               wlr_ref[...], blr_ref[...], we_ref[...], att_ref[...], gb_ref[...],
               heads=heads, out_ch=out_ch)
    o_ref[...] = _bn_silu(h, g_ref[...], b_ref[...], mu_ref[...], var_ref[...])


def conv_mid_kernel(x_ref, ea_ref, soh_ref, doh_ref, doht_ref,
                    wlr_ref, blr_ref, we_ref, att_ref, gb_ref,
                    g_ref, b_ref, mu_ref, var_ref, o_ref, *, heads, out_ch):
    h = _gatv2(x_ref[...], ea_ref[...], soh_ref[...], doh_ref[...], doht_ref[...],
               wlr_ref[...], blr_ref[...], we_ref[...], att_ref[...], gb_ref[...],
               heads=heads, out_ch=out_ch)
    o_ref[...] = _bn_silu(h, g_ref[...], b_ref[...], mu_ref[...], var_ref[...])


def conv_last_kernel(x_ref, ea_ref, soh_ref, doh_ref, doht_ref,
                     wlr_ref, blr_ref, we_ref, att_ref, gb_ref,
                     w2_ref, b2_ref, h_ref, o_ref, *, heads, out_ch):
    h = _gatv2(x_ref[...], ea_ref[...], soh_ref[...], doh_ref[...], doht_ref[...],
               wlr_ref[...], blr_ref[...], we_ref[...], att_ref[...], gb_ref[...],
               heads=heads, out_ch=out_ch)
    h = h * jax.nn.sigmoid(h)                                            # SiLU
    h_ref[...] = h
    # linear2 epilogue
    o_ref[...] = jnp.dot(h, w2_ref[...], preferred_element_type=jnp.float32) + b2_ref[...]


# ------------------------------------------------------------------ pallas_call plumbing


def _full_spec(shape):
    nd = len(shape)
    return pl.BlockSpec(shape, lambda i, _nd=nd: (0,) * _nd)


def _call(kernel, args, out_shapes):
    in_specs = [_full_spec(a.shape) for a in args]
    multi = isinstance(out_shapes, (list, tuple))
    out_specs = ([_full_spec(s.shape) for s in out_shapes] if multi
                 else _full_spec(out_shapes.shape))
    return pl.pallas_call(
        kernel,
        grid=(1,),
        in_specs=in_specs,
        out_specs=out_specs,
        out_shape=out_shapes,
        compiler_params=pltpu.CompilerParams(dimension_semantics=("arbitrary",)),
    )(*args)


# ------------------------------------------------------------------ model


def init_params(key, feature_dim, hidden_dim, out_dim, edge_dim, heads):
    keys = jax.random.split(key, 64)
    it = iter(range(64))

    def w(shape):
        return 0.1 * jax.random.normal(keys[next(it)], shape, jnp.float32)

    HC = hidden_dim * heads

    def gat(in_dim):
        att = w((heads, hidden_dim))                                     # (H, C)
        eye = jnp.eye(heads, dtype=jnp.float32)
        # block-diagonal (HC, H): column h carries att[h] on rows h*C:(h+1)*C
        att_bd = (att[:, :, None] * eye[:, None, :]).reshape(HC, heads)
        return dict(
            w_lr=jnp.concatenate([w((in_dim, HC)), w((in_dim, HC))], axis=1),  # lin_l | lin_r
            b_lr=jnp.concatenate([w((1, HC)), w((1, HC))], axis=1),
            w_e=w((edge_dim, HC)),                                       # lin_edge (no bias)
            att_bd=att_bd,
            bias=w((1, HC)),
        )

    return dict(
        lin1_w=w((feature_dim, hidden_dim)), lin1_b=w((1, hidden_dim)),
        conv1=gat(hidden_dim), conv2=gat(HC), conv3=gat(HC),
        # single shared BatchNorm (the reference module reuses self.batchnorm)
        bn_gamma=1.0 + w((1, HC)), bn_beta=w((1, HC)),
        bn_mean=w((1, HC)), bn_var=1.0 + jnp.abs(w((1, HC))),
        lin2_w=w((HC, out_dim)), lin2_b=w((1, out_dim)),
    )


def gcn_forward(params, x, edge_index, edge_attr, *, heads, hidden_dim):
    N = x.shape[0]
    HC = heads * hidden_dim

    # graph-structure plumbing, built ONCE per forward (hoisted out of the layers):
    # one-hot gather/scatter matrices so all edge gathers/scatters become MXU matmuls.
    ids = jnp.arange(N, dtype=edge_index.dtype)
    src_oh = (edge_index[0][:, None] == ids[None, :]).astype(jnp.float32)    # (E, N)
    dst_oh = (edge_index[1][:, None] == ids[None, :]).astype(jnp.float32)    # (E, N)
    dst_oh_t = dst_oh.T                                                      # (N, E)
    ek = (edge_attr, src_oh, dst_oh, dst_oh_t)

    c1, c2, c3 = params["conv1"], params["conv2"], params["conv3"]
    bn = (params["bn_gamma"], params["bn_beta"], params["bn_mean"], params["bn_var"])

    # layer 1: linear1 + conv1 + bn + silu   (one pallas_call)
    k1 = functools.partial(conv1_kernel, heads=heads, out_ch=hidden_dim)
    h = _call(k1,
              (x, *ek, params["lin1_w"], params["lin1_b"],
               c1["w_lr"], c1["b_lr"], c1["w_e"], c1["att_bd"], c1["bias"], *bn),
              jax.ShapeDtypeStruct((N, HC), jnp.float32))

    # layer 2: conv2 + bn + silu             (one pallas_call)
    k2 = functools.partial(conv_mid_kernel, heads=heads, out_ch=hidden_dim)
    h = _call(k2,
              (h, *ek, c2["w_lr"], c2["b_lr"], c2["w_e"], c2["att_bd"], c2["bias"], *bn),
              jax.ShapeDtypeStruct((N, HC), jnp.float32))

    # layer 3: conv3 + silu + linear2        (one pallas_call, two outputs)
    out_dim = params["lin2_w"].shape[1]
    k3 = functools.partial(conv_last_kernel, heads=heads, out_ch=hidden_dim)
    h, o = _call(k3,
                 (h, *ek, c3["w_lr"], c3["b_lr"], c3["w_e"], c3["att_bd"], c3["bias"],
                  params["lin2_w"], params["lin2_b"]),
                 (jax.ShapeDtypeStruct((N, HC), jnp.float32),
                  jax.ShapeDtypeStruct((N, out_dim), jnp.float32)))
    return h, o


# ------------------------------------------------------------------ main


if __name__ == "__main__":
    feature_dim, hidden_dim, out_dim, edge_feature_dim, heads = 16, 32, 8, 4, 2
    N = 32  # nodes

    key = jax.random.PRNGKey(0)
    k_x, k_e, k_p = jax.random.split(key, 3)

    x = jax.random.normal(k_x, (N, feature_dim), jnp.float32)

    # deterministic unique edge list (no self loops), 2 incoming edges per node
    idx = jnp.arange(N)
    src = jnp.concatenate([idx, idx])
    dst = jnp.concatenate([(idx + 1) % N, (idx + 5) % N])
    edge_index = jnp.stack([src, dst]).astype(jnp.int32)        # (2, 64)
    E = edge_index.shape[1]
    edge_attr = jax.random.normal(k_e, (E, edge_feature_dim), jnp.float32)

    params = init_params(k_p, feature_dim, hidden_dim, out_dim,
                         edge_feature_dim, heads)

    fwd = jax.jit(functools.partial(gcn_forward, heads=heads,
                                    hidden_dim=hidden_dim))
    h, o = fwd(params, x, edge_index, edge_attr)
    jax.block_until_ready((h, o))

    assert h.shape == (N, hidden_dim * heads)
    assert o.shape == (N, out_dim)
    assert bool(jnp.all(jnp.isfinite(h))) and bool(jnp.all(jnp.isfinite(o)))
    print("KERNEL_OK")
</pallas_src>

<mosaic_0001>
module attributes {stable_mosaic.version = 11 : i64} {
  func.func @conv_mid_kernel(%arg0: i32, %arg1: memref<32x64xf32, #tpu.memory_space<vmem>>, %arg2: memref<64x4xf32, #tpu.memory_space<vmem>>, %arg3: memref<64x32xf32, #tpu.memory_space<vmem>>, %arg4: memref<64x32xf32, #tpu.memory_space<vmem>>, %arg5: memref<32x64xf32, #tpu.memory_space<vmem>>, %arg6: memref<64x128xf32, #tpu.memory_space<vmem>>, %arg7: memref<1x128xf32, #tpu.memory_space<vmem>>, %arg8: memref<4x64xf32, #tpu.memory_space<vmem>>, %arg9: memref<64x2xf32, #tpu.memory_space<vmem>>, %arg10: memref<1x64xf32, #tpu.memory_space<vmem>>, %arg11: memref<1x64xf32, #tpu.memory_space<vmem>>, %arg12: memref<1x64xf32, #tpu.memory_space<vmem>>, %arg13: memref<1x64xf32, #tpu.memory_space<vmem>>, %arg14: memref<1x64xf32, #tpu.memory_space<vmem>>, %arg15: memref<32x64xf32, #tpu.memory_space<vmem>>) attributes {dimension_semantics = [#tpu.dimension_semantics<arbitrary>], iteration_bounds = array<i64: 1>, scalar_prefetch = 0 : i64, scratch_operands = 0 : i64, tpu.core_type = #tpu.core_type<tc>, window_params = [{pipeline_mode = #tpu.pipeline_mode<synchronous>, transform_indices = @transform_0, window_bounds = array<i64: 32, 64>}, {pipeline_mode = #tpu.pipeline_mode<synchronous>, transform_indices = @transform_1, window_bounds = array<i64: 64, 4>}, {pipeline_mode = #tpu.pipeline_mode<synchronous>, transform_indices = @transform_2, window_bounds = array<i64: 64, 32>}, {pipeline_mode = #tpu.pipeline_mode<synchronous>, transform_indices = @transform_3, window_bounds = array<i64: 64, 32>}, {pipeline_mode = #tpu.pipeline_mode<synchronous>, transform_indices = @transform_4, window_bounds = array<i64: 32, 64>}, {pipeline_mode = #tpu.pipeline_mode<synchronous>, transform_indices = @transform_5, window_bounds = array<i64: 64, 128>}, {pipeline_mode = #tpu.pipeline_mode<synchronous>, transform_indices = @transform_6, window_bounds = array<i64: 1, 128>}, {pipeline_mode = #tpu.pipeline_mode<synchronous>, transform_indices = @transform_7, window_bounds = array<i64: 4, 64>}, {pipeline_mode = #tpu.pipeline_mode<synchronous>, transform_indices = @transform_8, window_bounds = array<i64: 64, 2>}, {pipeline_mode = #tpu.pipeline_mode<synchronous>, transform_indices = @transform_9, window_bounds = array<i64: 1, 64>}, {pipeline_mode = #tpu.pipeline_mode<synchronous>, transform_indices = @transform_10, window_bounds = array<i64: 1, 64>}, {pipeline_mode = #tpu.pipeline_mode<synchronous>, transform_indices = @transform_11, window_bounds = array<i64: 1, 64>}, {pipeline_mode = #tpu.pipeline_mode<synchronous>, transform_indices = @transform_12, window_bounds = array<i64: 1, 64>}, {pipeline_mode = #tpu.pipeline_mode<synchronous>, transform_indices = @transform_13, window_bounds = array<i64: 1, 64>}, {pipeline_mode = #tpu.pipeline_mode<synchronous>, transform_indices = @transform_14, window_bounds = array<i64: 32, 64>}]} {
    %c0 = arith.constant 0 : index
    %c0_0 = arith.constant 0 : index
    %0 = vector.load %arg1[%c0, %c0_0] : memref<32x64xf32, #tpu.memory_space<vmem>>, vector<32x64xf32>
    %c0_1 = arith.constant 0 : index
    %c0_2 = arith.constant 0 : index
    %1 = vector.load %arg2[%c0_1, %c0_2] : memref<64x4xf32, #tpu.memory_space<vmem>>, vector<64x4xf32>
    %c0_3 = arith.constant 0 : index
    %c0_4 = arith.constant 0 : index
    %2 = vector.load %arg3[%c0_3, %c0_4] : memref<64x32xf32, #tpu.memory_space<vmem>>, vector<64x32xf32>
    %c0_5 = arith.constant 0 : index
    %c0_6 = arith.constant 0 : index
    %3 = vector.load %arg4[%c0_5, %c0_6] : memref<64x32xf32, #tpu.memory_space<vmem>>, vector<64x32xf32>
    %c0_7 = arith.constant 0 : index
    %c0_8 = arith.constant 0 : index
    %4 = vector.load %arg5[%c0_7, %c0_8] : memref<32x64xf32, #tpu.memory_space<vmem>>, vector<32x64xf32>
    %c0_9 = arith.constant 0 : index
    %c0_10 = arith.constant 0 : index
    %5 = vector.load %arg6[%c0_9, %c0_10] : memref<64x128xf32, #tpu.memory_space<vmem>>, vector<64x128xf32>
    %c0_11 = arith.constant 0 : index
    %c0_12 = arith.constant 0 : index
    %6 = vector.load %arg7[%c0_11, %c0_12] : memref<1x128xf32, #tpu.memory_space<vmem>>, vector<1x128xf32>
    %c0_13 = arith.constant 0 : index
    %c0_14 = arith.constant 0 : index
    %7 = vector.load %arg8[%c0_13, %c0_14] : memref<4x64xf32, #tpu.memory_space<vmem>>, vector<4x64xf32>
    %c0_15 = arith.constant 0 : index
    %c0_16 = arith.constant 0 : index
    %8 = vector.load %arg9[%c0_15, %c0_16] : memref<64x2xf32, #tpu.memory_space<vmem>>, vector<64x2xf32>
    %c0_17 = arith.constant 0 : index
    %c0_18 = arith.constant 0 : index
    %9 = vector.load %arg10[%c0_17, %c0_18] : memref<1x64xf32, #tpu.memory_space<vmem>>, vector<1x64xf32>
    %cst = arith.constant dense<0.000000e+00> : vector<32x128xf32>
    %10 = tpu.matmul %0, %5, %cst {dimension_numbers = #tpu.dot_dimension_numbers<[1], [0], [0], [1], [0, 0, 1, 1], [], []>} : vector<32x64xf32>, vector<64x128xf32>, vector<32x128xf32> -> vector<32x128xf32>
    %11 = vector.broadcast %6 : vector<1x128xf32> to vector<32x128xf32>
    %12 = arith.addf %10, %11 : vector<32x128xf32>
    %13 = vector.extract_strided_slice %12 {offsets = [0, 0], sizes = [32, 64], strides = [1, 1]} : vector<32x128xf32> to vector<32x64xf32>
    %14 = vector.extract_strided_slice %12 {offsets = [0, 64], sizes = [32, 64], strides = [1, 1]} : vector<32x128xf32> to vector<32x64xf32>
    %cst_19 = arith.constant dense<0.000000e+00> : vector<64x64xf32>
    %15 = tpu.matmul %1, %7, %cst_19 {dimension_numbers = #tpu.dot_dimension_numbers<[1], [0], [0], [1], [0, 0, 1, 1], [], []>} : vector<64x4xf32>, vector<4x64xf32>, vector<64x64xf32> -> vector<64x64xf32>
    %cst_20 = arith.constant dense<0.000000e+00> : vector<64x64xf32>
    %16 = tpu.matmul %2, %13, %cst_20 {dimension_numbers = #tpu.dot_dimension_numbers<[1], [0], [0], [1], [0, 0, 1, 1], [], []>} : vector<64x32xf32>, vector<32x64xf32>, vector<64x64xf32> -> vector<64x64xf32>
    %cst_21 = arith.constant dense<0.000000e+00> : vector<64x64xf32>
    %17 = tpu.matmul %3, %14, %cst_21 {dimension_numbers = #tpu.dot_dimension_numbers<[1], [0], [0], [1], [0, 0, 1, 1], [], []>} : vector<64x32xf32>, vector<32x64xf32>, vector<64x64xf32> -> vector<64x64xf32>
    %18 = arith.addf %16, %17 : vector<64x64xf32>
    %19 = arith.addf %18, %15 : vector<64x64xf32>
    %cst_22 = arith.constant 0.000000e+00 : f32
    %20 = vector.broadcast %cst_22 : f32 to vector<64x64xf32>
    %21 = arith.cmpf ogt, %19, %20 : vector<64x64xf32>
    %cst_23 = arith.constant 2.000000e-01 : f32
    %22 = vector.broadcast %cst_23 : f32 to vector<64x64xf32>
    %23 = arith.mulf %22, %19 : vector<64x64xf32>
    %24 = arith.select %21, %19, %23 : vector<64x64xi1>, vector<64x64xf32>
    %cst_24 = arith.constant dense<0.000000e+00> : vector<64x2xf32>
    %25 = tpu.matmul %24, %8, %cst_24 {dimension_numbers = #tpu.dot_dimension_numbers<[1], [0], [0], [1], [0, 0, 1, 1], [], []>} : vector<64x64xf32>, vector<64x2xf32>, vector<64x2xf32> -> vector<64x2xf32>
    %cst_25 = arith.constant dense<0.000000e+00> : vector<32x32xf32>
    %26 = tpu.matmul %4, %2, %cst_25 {dimension_numbers = #tpu.dot_dimension_numbers<[1], [0], [0], [1], [0, 0, 1, 1], [], []>} : vector<32x64xf32>, vector<64x32xf32>, vector<32x32xf32> -> vector<32x32xf32>
    %cst_26 = arith.constant 5.000000e-01 : f32
    %27 = vector.broadcast %cst_26 : f32 to vector<32x32xf32>
    %28 = arith.cmpf ogt, %26, %27 : vector<32x32xf32>
    %29 = vector.extract_strided_slice %25 {offsets = [0, 0], sizes = [64, 1], strides = [1, 1]} : vector<64x2xf32> to vector<64x1xf32>
    %30 = vector.broadcast %29 : vector<64x1xf32> to vector<64x32xf32>
    %31 = arith.mulf %30, %2 : vector<64x32xf32>
    %cst_27 = arith.constant dense<0.000000e+00> : vector<32x32xf32>
    %32 = tpu.matmul %4, %31, %cst_27 {dimension_numbers = #tpu.dot_dimension_numbers<[1], [0], [0], [1], [0, 0, 1, 1], [], []>} : vector<32x64xf32>, vector<64x32xf32>, vector<32x32xf32> -> vector<32x32xf32>
    %cst_28 = arith.constant -1.000000e+30 : f32
    %33 = vector.broadcast %cst_28 : f32 to vector<32x32xf32>
    %34 = arith.select %28, %32, %33 : vector<32x32xi1>, vector<32x32xf32>
    %cst_29 = arith.constant dense<0xFF800000> : vector<32xf32>
    %35 = vector.multi_reduction <maximumf>, %34, %cst_29 [1] : vector<32x32xf32> to vector<32xf32>
    %36 = vector.shape_cast %35 : vector<32xf32> to vector<32x1xf32>
    %37 = vector.broadcast %36 : vector<32x1xf32> to vector<32x32xf32>
    %38 = arith.subf %34, %37 : vector<32x32xf32>
    %39 = math.exp %38 : vector<32x32xf32>
    %cst_30 = arith.constant 0.000000e+00 : f32
    %40 = vector.broadcast %cst_30 : f32 to vector<32x32xf32>
    %41 = arith.select %28, %39, %40 : vector<32x32xi1>, vector<32x32xf32>
    %cst_31 = arith.constant dense<0.000000e+00> : vector<32xf32>
    %42 = vector.multi_reduction <add>, %41, %cst_31 [1] : vector<32x32xf32> to vector<32xf32>
    %43 = vector.shape_cast %42 : vector<32xf32> to vector<32x1xf32>
    %cst_32 = arith.constant 1.000000e-16 : f32
    %44 = vector.broadcast %cst_32 : f32 to vector<32x1xf32>
    %45 = arith.addf %43, %44 : vector<32x1xf32>
    %46 = tpu.reciprocal %45 {approx = true} : vector<32x1xf32> -> vector<32x1xf32>
    %47 = vector.broadcast %46 : vector<32x1xf32> to vector<32x32xf32>
    %48 = arith.mulf %41, %47 : vector<32x32xf32>
    %49 = vector.extract_strided_slice %13 {offsets = [0, 0], sizes = [32, 32], strides = [1, 1]} : vector<32x64xf32> to vector<32x32xf32>
    %cst_33 = arith.constant dense<0.000000e+00> : vector<32x32xf32>
    %50 = tpu.matmul %48, %49, %cst_33 {dimension_numbers = #tpu.dot_dimension_numbers<[1], [0], [0], [1], [0, 0, 1, 1], [], []>} : vector<32x32xf32>, vector<32x32xf32>, vector<32x32xf32> -> vector<32x32xf32>
    %51 = vector.extract_strided_slice %25 {offsets = [0, 1], sizes = [64, 1], strides = [1, 1]} : vector<64x2xf32> to vector<64x1xf32>
    %52 = vector.broadcast %51 : vector<64x1xf32> to vector<64x32xf32>
    %53 = arith.mulf %52, %2 : vector<64x32xf32>
    %cst_34 = arith.constant dense<0.000000e+00> : vector<32x32xf32>
    %54 = tpu.matmul %4, %53, %cst_34 {dimension_numbers = #tpu.dot_dimension_numbers<[1], [0], [0], [1], [0, 0, 1, 1], [], []>} : vector<32x64xf32>, vector<64x32xf32>, vector<32x32xf32> -> vector<32x32xf32>
    %cst_35 = arith.constant -1.000000e+30 : f32
    %55 = vector.broadcast %cst_35 : f32 to vector<32x32xf32>
    %56 = arith.select %28, %54, %55 : vector<32x32xi1>, vector<32x32xf32>
    %cst_36 = arith.constant dense<0xFF800000> : vector<32xf32>
    %57 = vector.multi_reduction <maximumf>, %56, %cst_36 [1] : vector<32x32xf32> to vector<32xf32>
    %58 = vector.shape_cast %57 : vector<32xf32> to vector<32x1xf32>
    %59 = vector.broadcast %58 : vector<32x1xf32> to vector<32x32xf32>
    %60 = arith.subf %56, %59 : vector<32x32xf32>
    %61 = math.exp %60 : vector<32x32xf32>
    %cst_37 = arith.constant 0.000000e+00 : f32
    %62 = vector.broadcast %cst_37 : f32 to vector<32x32xf32>
    %63 = arith.select %28, %61, %62 : vector<32x32xi1>, vector<32x32xf32>
    %cst_38 = arith.constant dense<0.000000e+00> : vector<32xf32>
    %64 = vector.multi_reduction <add>, %63, %cst_38 [1] : vector<32x32xf32> to vector<32xf32>
    %65 = vector.shape_cast %64 : vector<32xf32> to vector<32x1xf32>
    %cst_39 = arith.constant 1.000000e-16 : f32
    %66 = vector.broadcast %cst_39 : f32 to vector<32x1xf32>
    %67 = arith.addf %65, %66 : vector<32x1xf32>
    %68 = tpu.reciprocal %67 {approx = true} : vector<32x1xf32> -> vector<32x1xf32>
    %69 = vector.broadcast %68 : vector<32x1xf32> to vector<32x32xf32>
    %70 = arith.mulf %63, %69 : vector<32x32xf32>
    %71 = vector.extract_strided_slice %13 {offsets = [0, 32], sizes = [32, 32], strides = [1, 1]} : vector<32x64xf32> to vector<32x32xf32>
    %cst_40 = arith.constant dense<0.000000e+00> : vector<32x32xf32>
    %72 = tpu.matmul %70, %71, %cst_40 {dimension_numbers = #tpu.dot_dimension_numbers<[1], [0], [0], [1], [0, 0, 1, 1], [], []>} : vector<32x32xf32>, vector<32x32xf32>, vector<32x32xf32> -> vector<32x32xf32>
    %73 = tpu.concatenate %50, %72 in 1 : vector<32x32xf32>, vector<32x32xf32> -> vector<32x64xf32>
    %74 = vector.broadcast %9 : vector<1x64xf32> to vector<32x64xf32>
    %75 = arith.addf %73, %74 : vector<32x64xf32>
    %c0_41 = arith.constant 0 : index
    %c0_42 = arith.constant 0 : index
    %76 = vector.load %arg11[%c0_41, %c0_42] : memref<1x64xf32, #tpu.memory_space<vmem>>, vector<1x64xf32>
    %c0_43 = arith.constant 0 : index
    %c0_44 = arith.constant 0 : index
    %77 = vector.load %arg12[%c0_43, %c0_44] : memref<1x64xf32, #tpu.memory_space<vmem>>, vector<1x64xf32>
    %c0_45 = arith.constant 0 : index
    %c0_46 = arith.constant 0 : index
    %78 = vector.load %arg13[%c0_45, %c0_46] : memref<1x64xf32, #tpu.memory_space<vmem>>, vector<1x64xf32>
    %c0_47 = arith.constant 0 : index
    %c0_48 = arith.constant 0 : index
    %79 = vector.load %arg14[%c0_47, %c0_48] : memref<1x64xf32, #tpu.memory_space<vmem>>, vector<1x64xf32>
    %80 = vector.broadcast %78 : vector<1x64xf32> to vector<32x64xf32>
    %81 = arith.subf %75, %80 : vector<32x64xf32>
    %cst_49 = arith.constant 9.99999974E-6 : f32
    %82 = vector.broadcast %cst_49 : f32 to vector<1x64xf32>
    %83 = arith.addf %79, %82 : vector<1x64xf32>
    %84 = math.rsqrt %83 : vector<1x64xf32>
    %85 = vector.broadcast %84 : vector<1x64xf32> to vector<32x64xf32>
    %86 = arith.mulf %81, %85 : vector<32x64xf32>
    %87 = vector.broadcast %76 : vector<1x64xf32> to vector<32x64xf32>
    %88 = arith.mulf %86, %87 : vector<32x64xf32>
    %89 = vector.broadcast %77 : vector<1x64xf32> to vector<32x64xf32>
    %90 = arith.addf %88, %89 : vector<32x64xf32>
    %91 = arith.negf %90 : vector<32x64xf32>
    %92 = math.exp %91 : vector<32x64xf32>
    %cst_50 = arith.constant 1.000000e+00 : f32
    %93 = vector.broadcast %cst_50 : f32 to vector<32x64xf32>
    %94 = arith.addf %93, %92 : vector<32x64xf32>
    %95 = arith.divf %93, %94 : vector<32x64xf32>
    %96 = arith.mulf %90, %95 : vector<32x64xf32>
    %c0_51 = arith.constant 0 : index
    %c0_52 = arith.constant 0 : index
    %97 = vector.load %arg15[%c0_51, %c0_52] : memref<32x64xf32, #tpu.memory_space<vmem>>, vector<32x64xf32>
    tpu.vector_store %arg15[%c0_51, %c0_52], %96 {strides = array<i32>} : memref<32x64xf32, #tpu.memory_space<vmem>>, vector<32x64xf32>,
    return
  }
  func.func @transform_0(%arg0: i32) -> (i32, i32) {
    %c0_i32 = arith.constant 0 : i32
    %c0_i32_0 = arith.constant 0 : i32
    %c0_i32_1 = arith.constant 0 : i32
    return %c0_i32, %c0_i32_0 : i32, i32
  }
  func.func @transform_1(%arg0: i32) -> (i32, i32) {
    %c0_i32 = arith.constant 0 : i32
    %c0_i32_0 = arith.constant 0 : i32
    %c0_i32_1 = arith.constant 0 : i32
    return %c0_i32, %c0_i32_0 : i32, i32
  }
  func.func @transform_2(%arg0: i32) -> (i32, i32) {
    %c0_i32 = arith.constant 0 : i32
    %c0_i32_0 = arith.constant 0 : i32
    %c0_i32_1 = arith.constant 0 : i32
    return %c0_i32, %c0_i32_0 : i32, i32
  }
  func.func @transform_3(%arg0: i32) -> (i32, i32) {
    %c0_i32 = arith.constant 0 : i32
    %c0_i32_0 = arith.constant 0 : i32
    %c0_i32_1 = arith.constant 0 : i32
    return %c0_i32, %c0_i32_0 : i32, i32
  }
  func.func @transform_4(%arg0: i32) -> (i32, i32) {
    %c0_i32 = arith.constant 0 : i32
    %c0_i32_0 = arith.constant 0 : i32
    %c0_i32_1 = arith.constant 0 : i32
    return %c0_i32, %c0_i32_0 : i32, i32
  }
  func.func @transform_5(%arg0: i32) -> (i32, i32) {
    %c0_i32 = arith.constant 0 : i32
    %c0_i32_0 = arith.constant 0 : i32
    %c0_i32_1 = arith.constant 0 : i32
    return %c0_i32, %c0_i32_0 : i32, i32
  }
  func.func @transform_6(%arg0: i32) -> (i32, i32) {
    %c0_i32 = arith.constant 0 : i32
    %c0_i32_0 = arith.constant 0 : i32
    %c0_i32_1 = arith.constant 0 : i32
    return %c0_i32, %c0_i32_0 : i32, i32
  }
  func.func @transform_7(%arg0: i32) -> (i32, i32) {
    %c0_i32 = arith.constant 0 : i32
    %c0_i32_0 = arith.constant 0 : i32
    %c0_i32_1 = arith.constant 0 : i32
    return %c0_i32, %c0_i32_0 : i32, i32
  }
  func.func @transform_8(%arg0: i32) -> (i32, i32) {
    %c0_i32 = arith.constant 0 : i32
    %c0_i32_0 = arith.constant 0 : i32
    %c0_i32_1 = arith.constant 0 : i32
    return %c0_i32, %c0_i32_0 : i32, i32
  }
  func.func @transform_9(%arg0: i32) -> (i32, i32) {
    %c0_i32 = arith.constant 0 : i32
    %c0_i32_0 = arith.constant 0 : i32
    %c0_i32_1 = arith.constant 0 : i32
    return %c0_i32, %c0_i32_0 : i32, i32
  }
  func.func @transform_10(%arg0: i32) -> (i32, i32) {
    %c0_i32 = arith.constant 0 : i32
    %c0_i32_0 = arith.constant 0 : i32
    %c0_i32_1 = arith.constant 0 : i32
    return %c0_i32, %c0_i32_0 : i32, i32
  }
  func.func @transform_11(%arg0: i32) -> (i32, i32) {
    %c0_i32 = arith.constant 0 : i32
    %c0_i32_0 = arith.constant 0 : i32
    %c0_i32_1 = arith.constant 0 : i32
    return %c0_i32, %c0_i32_0 : i32, i32
  }
  func.func @transform_12(%arg0: i32) -> (i32, i32) {
    %c0_i32 = arith.constant 0 : i32
    %c0_i32_0 = arith.constant 0 : i32
    %c0_i32_1 = arith.constant 0 : i32
    return %c0_i32, %c0_i32_0 : i32, i32
  }
  func.func @transform_13(%arg0: i32) -> (i32, i32) {
    %c0_i32 = arith.constant 0 : i32
    %c0_i32_0 = arith.constant 0 : i32
    %c0_i32_1 = arith.constant 0 : i32
    return %c0_i32, %c0_i32_0 : i32, i32
  }
  func.func @transform_14(%arg0: i32) -> (i32, i32) {
    %c0_i32 = arith.constant 0 : i32
    %c0_i32_0 = arith.constant 0 : i32
    %c0_i32_1 = arith.constant 0 : i32
    return %c0_i32, %c0_i32_0 : i32, i32
  }
}

module attributes {stable_mosaic.version = 11 : i64} {
  func.func @conv_last_kernel(%arg0: i32, %arg1: memref<32x64xf32, #tpu.memory_space<vmem>>, %arg2: memref<64x4xf32, #tpu.memory_space<vmem>>, %arg3: memref<64x32xf32, #tpu.memory_space<vmem>>, %arg4: memref<64x32xf32, #tpu.memory_space<vmem>>, %arg5: memref<32x64xf32, #tpu.memory_space<vmem>>, %arg6: memref<64x128xf32, #tpu.memory_space<vmem>>, %arg7: memref<1x128xf32, #tpu.memory_space<vmem>>, %arg8: memref<4x64xf32, #tpu.memory_space<vmem>>, %arg9: memref<64x2xf32, #tpu.memory_space<vmem>>, %arg10: memref<1x64xf32, #tpu.memory_space<vmem>>, %arg11: memref<64x8xf32, #tpu.memory_space<vmem>>, %arg12: memref<1x8xf32, #tpu.memory_space<vmem>>, %arg13: memref<32x64xf32, #tpu.memory_space<vmem>>, %arg14: memref<32x8xf32, #tpu.memory_space<vmem>>) attributes {dimension_semantics = [#tpu.dimension_semantics<arbitrary>], iteration_bounds = array<i64: 1>, scalar_prefetch = 0 : i64, scratch_operands = 0 : i64, tpu.core_type = #tpu.core_type<tc>, window_params = [{pipeline_mode = #tpu.pipeline_mode<synchronous>, transform_indices = @transform_0, window_bounds = array<i64: 32, 64>}, {pipeline_mode = #tpu.pipeline_mode<synchronous>, transform_indices = @transform_1, window_bounds = array<i64: 64, 4>}, {pipeline_mode = #tpu.pipeline_mode<synchronous>, transform_indices = @transform_2, window_bounds = array<i64: 64, 32>}, {pipeline_mode = #tpu.pipeline_mode<synchronous>, transform_indices = @transform_3, window_bounds = array<i64: 64, 32>}, {pipeline_mode = #tpu.pipeline_mode<synchronous>, transform_indices = @transform_4, window_bounds = array<i64: 32, 64>}, {pipeline_mode = #tpu.pipeline_mode<synchronous>, transform_indices = @transform_5, window_bounds = array<i64: 64, 128>}, {pipeline_mode = #tpu.pipeline_mode<synchronous>, transform_indices = @transform_6, window_bounds = array<i64: 1, 128>}, {pipeline_mode = #tpu.pipeline_mode<synchronous>, transform_indices = @transform_7, window_bounds = array<i64: 4, 64>}, {pipeline_mode = #tpu.pipeline_mode<synchronous>, transform_indices = @transform_8, window_bounds = array<i64: 64, 2>}, {pipeline_mode = #tpu.pipeline_mode<synchronous>, transform_indices = @transform_9, window_bounds = array<i64: 1, 64>}, {pipeline_mode = #tpu.pipeline_mode<synchronous>, transform_indices = @transform_10, window_bounds = array<i64: 64, 8>}, {pipeline_mode = #tpu.pipeline_mode<synchronous>, transform_indices = @transform_11, window_bounds = array<i64: 1, 8>}, {pipeline_mode = #tpu.pipeline_mode<synchronous>, transform_indices = @transform_12, window_bounds = array<i64: 32, 64>}, {pipeline_mode = #tpu.pipeline_mode<synchronous>, transform_indices = @transform_13, window_bounds = array<i64: 32, 8>}]} {
    %c0 = arith.constant 0 : index
    %c0_0 = arith.constant 0 : index
    %0 = vector.load %arg1[%c0, %c0_0] : memref<32x64xf32, #tpu.memory_space<vmem>>, vector<32x64xf32>
    %c0_1 = arith.constant 0 : index
    %c0_2 = arith.constant 0 : index
    %1 = vector.load %arg2[%c0_1, %c0_2] : memref<64x4xf32, #tpu.memory_space<vmem>>, vector<64x4xf32>
    %c0_3 = arith.constant 0 : index
    %c0_4 = arith.constant 0 : index
    %2 = vector.load %arg3[%c0_3, %c0_4] : memref<64x32xf32, #tpu.memory_space<vmem>>, vector<64x32xf32>
    %c0_5 = arith.constant 0 : index
    %c0_6 = arith.constant 0 : index
    %3 = vector.load %arg4[%c0_5, %c0_6] : memref<64x32xf32, #tpu.memory_space<vmem>>, vector<64x32xf32>
    %c0_7 = arith.constant 0 : index
    %c0_8 = arith.constant 0 : index
    %4 = vector.load %arg5[%c0_7, %c0_8] : memref<32x64xf32, #tpu.memory_space<vmem>>, vector<32x64xf32>
    %c0_9 = arith.constant 0 : index
    %c0_10 = arith.constant 0 : index
    %5 = vector.load %arg6[%c0_9, %c0_10] : memref<64x128xf32, #tpu.memory_space<vmem>>, vector<64x128xf32>
    %c0_11 = arith.constant 0 : index
    %c0_12 = arith.constant 0 : index
    %6 = vector.load %arg7[%c0_11, %c0_12] : memref<1x128xf32, #tpu.memory_space<vmem>>, vector<1x128xf32>
    %c0_13 = arith.constant 0 : index
    %c0_14 = arith.constant 0 : index
    %7 = vector.load %arg8[%c0_13, %c0_14] : memref<4x64xf32, #tpu.memory_space<vmem>>, vector<4x64xf32>
    %c0_15 = arith.constant 0 : index
    %c0_16 = arith.constant 0 : index
    %8 = vector.load %arg9[%c0_15, %c0_16] : memref<64x2xf32, #tpu.memory_space<vmem>>, vector<64x2xf32>
    %c0_17 = arith.constant 0 : index
    %c0_18 = arith.constant 0 : index
    %9 = vector.load %arg10[%c0_17, %c0_18] : memref<1x64xf32, #tpu.memory_space<vmem>>, vector<1x64xf32>
    %cst = arith.constant dense<0.000000e+00> : vector<32x128xf32>
    %10 = tpu.matmul %0, %5, %cst {dimension_numbers = #tpu.dot_dimension_numbers<[1], [0], [0], [1], [0, 0, 1, 1], [], []>} : vector<32x64xf32>, vector<64x128xf32>, vector<32x128xf32> -> vector<32x128xf32>
    %11 = vector.broadcast %6 : vector<1x128xf32> to vector<32x128xf32>
    %12 = arith.addf %10, %11 : vector<32x128xf32>
    %13 = vector.extract_strided_slice %12 {offsets = [0, 0], sizes = [32, 64], strides = [1, 1]} : vector<32x128xf32> to vector<32x64xf32>
    %14 = vector.extract_strided_slice %12 {offsets = [0, 64], sizes = [32, 64], strides = [1, 1]} : vector<32x128xf32> to vector<32x64xf32>
    %cst_19 = arith.constant dense<0.000000e+00> : vector<64x64xf32>
    %15 = tpu.matmul %1, %7, %cst_19 {dimension_numbers = #tpu.dot_dimension_numbers<[1], [0], [0], [1], [0, 0, 1, 1], [], []>} : vector<64x4xf32>, vector<4x64xf32>, vector<64x64xf32> -> vector<64x64xf32>
    %cst_20 = arith.constant dense<0.000000e+00> : vector<64x64xf32>
    %16 = tpu.matmul %2, %13, %cst_20 {dimension_numbers = #tpu.dot_dimension_numbers<[1], [0], [0], [1], [0, 0, 1, 1], [], []>} : vector<64x32xf32>, vector<32x64xf32>, vector<64x64xf32> -> vector<64x64xf32>
    %cst_21 = arith.constant dense<0.000000e+00> : vector<64x64xf32>
    %17 = tpu.matmul %3, %14, %cst_21 {dimension_numbers = #tpu.dot_dimension_numbers<[1], [0], [0], [1], [0, 0, 1, 1], [], []>} : vector<64x32xf32>, vector<32x64xf32>, vector<64x64xf32> -> vector<64x64xf32>
    %18 = arith.addf %16, %17 : vector<64x64xf32>
    %19 = arith.addf %18, %15 : vector<64x64xf32>
    %cst_22 = arith.constant 0.000000e+00 : f32
    %20 = vector.broadcast %cst_22 : f32 to vector<64x64xf32>
    %21 = arith.cmpf ogt, %19, %20 : vector<64x64xf32>
    %cst_23 = arith.constant 2.000000e-01 : f32
    %22 = vector.broadcast %cst_23 : f32 to vector<64x64xf32>
    %23 = arith.mulf %22, %19 : vector<64x64xf32>
    %24 = arith.select %21, %19, %23 : vector<64x64xi1>, vector<64x64xf32>
    %cst_24 = arith.constant dense<0.000000e+00> : vector<64x2xf32>
    %25 = tpu.matmul %24, %8, %cst_24 {dimension_numbers = #tpu.dot_dimension_numbers<[1], [0], [0], [1], [0, 0, 1, 1], [], []>} : vector<64x64xf32>, vector<64x2xf32>, vector<64x2xf32> -> vector<64x2xf32>
    %cst_25 = arith.constant dense<0.000000e+00> : vector<32x32xf32>
    %26 = tpu.matmul %4, %2, %cst_25 {dimension_numbers = #tpu.dot_dimension_numbers<[1], [0], [0], [1], [0, 0, 1, 1], [], []>} : vector<32x64xf32>, vector<64x32xf32>, vector<32x32xf32> -> vector<32x32xf32>
    %cst_26 = arith.constant 5.000000e-01 : f32
    %27 = vector.broadcast %cst_26 : f32 to vector<32x32xf32>
    %28 = arith.cmpf ogt, %26, %27 : vector<32x32xf32>
    %29 = vector.extract_strided_slice %25 {offsets = [0, 0], sizes = [64, 1], strides = [1, 1]} : vector<64x2xf32> to vector<64x1xf32>
    %30 = vector.broadcast %29 : vector<64x1xf32> to vector<64x32xf32>
    %31 = arith.mulf %30, %2 : vector<64x32xf32>
    %cst_27 = arith.constant dense<0.000000e+00> : vector<32x32xf32>
    %32 = tpu.matmul %4, %31, %cst_27 {dimension_numbers = #tpu.dot_dimension_numbers<[1], [0], [0], [1], [0, 0, 1, 1], [], []>} : vector<32x64xf32>, vector<64x32xf32>, vector<32x32xf32> -> vector<32x32xf32>
    %cst_28 = arith.constant -1.000000e+30 : f32
    %33 = vector.broadcast %cst_28 : f32 to vector<32x32xf32>
    %34 = arith.select %28, %32, %33 : vector<32x32xi1>, vector<32x32xf32>
    %cst_29 = arith.constant dense<0xFF800000> : vector<32xf32>
    %35 = vector.multi_reduction <maximumf>, %34, %cst_29 [1] : vector<32x32xf32> to vector<32xf32>
    %36 = vector.shape_cast %35 : vector<32xf32> to vector<32x1xf32>
    %37 = vector.broadcast %36 : vector<32x1xf32> to vector<32x32xf32>
    %38 = arith.subf %34, %37 : vector<32x32xf32>
    %39 = math.exp %38 : vector<32x32xf32>
    %cst_30 = arith.constant 0.000000e+00 : f32
    %40 = vector.broadcast %cst_30 : f32 to vector<32x32xf32>
    %41 = arith.select %28, %39, %40 : vector<32x32xi1>, vector<32x32xf32>
    %cst_31 = arith.constant dense<0.000000e+00> : vector<32xf32>
    %42 = vector.multi_reduction <add>, %41, %cst_31 [1] : vector<32x32xf32> to vector<32xf32>
    %43 = vector.shape_cast %42 : vector<32xf32> to vector<32x1xf32>
    %cst_32 = arith.constant 1.000000e-16 : f32
    %44 = vector.broadcast %cst_32 : f32 to vector<32x1xf32>
    %45 = arith.addf %43, %44 : vector<32x1xf32>
    %46 = tpu.reciprocal %45 {approx = true} : vector<32x1xf32> -> vector<32x1xf32>
    %47 = vector.broadcast %46 : vector<32x1xf32> to vector<32x32xf32>
    %48 = arith.mulf %41, %47 : vector<32x32xf32>
    %49 = vector.extract_strided_slice %13 {offsets = [0, 0], sizes = [32, 32], strides = [1, 1]} : vector<32x64xf32> to vector<32x32xf32>
    %cst_33 = arith.constant dense<0.000000e+00> : vector<32x32xf32>
    %50 = tpu.matmul %48, %49, %cst_33 {dimension_numbers = #tpu.dot_dimension_numbers<[1], [0], [0], [1], [0, 0, 1, 1], [], []>} : vector<32x32xf32>, vector<32x32xf32>, vector<32x32xf32> -> vector<32x32xf32>
    %51 = vector.extract_strided_slice %25 {offsets = [0, 1], sizes = [64, 1], strides = [1, 1]} : vector<64x2xf32> to vector<64x1xf32>
    %52 = vector.broadcast %51 : vector<64x1xf32> to vector<64x32xf32>
    %53 = arith.mulf %52, %2 : vector<64x32xf32>
    %cst_34 = arith.constant dense<0.000000e+00> : vector<32x32xf32>
    %54 = tpu.matmul %4, %53, %cst_34 {dimension_numbers = #tpu.dot_dimension_numbers<[1], [0], [0], [1], [0, 0, 1, 1], [], []>} : vector<32x64xf32>, vector<64x32xf32>, vector<32x32xf32> -> vector<32x32xf32>
    %cst_35 = arith.constant -1.000000e+30 : f32
    %55 = vector.broadcast %cst_35 : f32 to vector<32x32xf32>
    %56 = arith.select %28, %54, %55 : vector<32x32xi1>, vector<32x32xf32>
    %cst_36 = arith.constant dense<0xFF800000> : vector<32xf32>
    %57 = vector.multi_reduction <maximumf>, %56, %cst_36 [1] : vector<32x32xf32> to vector<32xf32>
    %58 = vector.shape_cast %57 : vector<32xf32> to vector<32x1xf32>
    %59 = vector.broadcast %58 : vector<32x1xf32> to vector<32x32xf32>
    %60 = arith.subf %56, %59 : vector<32x32xf32>
    %61 = math.exp %60 : vector<32x32xf32>
    %cst_37 = arith.constant 0.000000e+00 : f32
    %62 = vector.broadcast %cst_37 : f32 to vector<32x32xf32>
    %63 = arith.select %28, %61, %62 : vector<32x32xi1>, vector<32x32xf32>
    %cst_38 = arith.constant dense<0.000000e+00> : vector<32xf32>
    %64 = vector.multi_reduction <add>, %63, %cst_38 [1] : vector<32x32xf32> to vector<32xf32>
    %65 = vector.shape_cast %64 : vector<32xf32> to vector<32x1xf32>
    %cst_39 = arith.constant 1.000000e-16 : f32
    %66 = vector.broadcast %cst_39 : f32 to vector<32x1xf32>
    %67 = arith.addf %65, %66 : vector<32x1xf32>
    %68 = tpu.reciprocal %67 {approx = true} : vector<32x1xf32> -> vector<32x1xf32>
    %69 = vector.broadcast %68 : vector<32x1xf32> to vector<32x32xf32>
    %70 = arith.mulf %63, %69 : vector<32x32xf32>
    %71 = vector.extract_strided_slice %13 {offsets = [0, 32], sizes = [32, 32], strides = [1, 1]} : vector<32x64xf32> to vector<32x32xf32>
    %cst_40 = arith.constant dense<0.000000e+00> : vector<32x32xf32>
    %72 = tpu.matmul %70, %71, %cst_40 {dimension_numbers = #tpu.dot_dimension_numbers<[1], [0], [0], [1], [0, 0, 1, 1], [], []>} : vector<32x32xf32>, vector<32x32xf32>, vector<32x32xf32> -> vector<32x32xf32>
    %73 = tpu.concatenate %50, %72 in 1 : vector<32x32xf32>, vector<32x32xf32> -> vector<32x64xf32>
    %74 = vector.broadcast %9 : vector<1x64xf32> to vector<32x64xf32>
    %75 = arith.addf %73, %74 : vector<32x64xf32>
    %76 = arith.negf %75 : vector<32x64xf32>
    %77 = math.exp %76 : vector<32x64xf32>
    %cst_41 = arith.constant 1.000000e+00 : f32
    %78 = vector.broadcast %cst_41 : f32 to vector<32x64xf32>
    %79 = arith.addf %78, %77 : vector<32x64xf32>
    %80 = arith.divf %78, %79 : vector<32x64xf32>
    %81 = arith.mulf %75, %80 : vector<32x64xf32>
    %c0_42 = arith.constant 0 : index
    %c0_43 = arith.constant 0 : index
    %82 = vector.load %arg13[%c0_42, %c0_43] : memref<32x64xf32, #tpu.memory_space<vmem>>, vector<32x64xf32>
    tpu.vector_store %arg13[%c0_42, %c0_43], %81 {strides = array<i32>} : memref<32x64xf32, #tpu.memory_space<vmem>>, vector<32x64xf32>,
    %c0_44 = arith.constant 0 : index
    %c0_45 = arith.constant 0 : index
    %83 = vector.load %arg11[%c0_44, %c0_45] : memref<64x8xf32, #tpu.memory_space<vmem>>, vector<64x8xf32>
    %cst_46 = arith.constant dense<0.000000e+00> : vector<32x8xf32>
    %84 = tpu.matmul %81, %83, %cst_46 {dimension_numbers = #tpu.dot_dimension_numbers<[1], [0], [0], [1], [0, 0, 1, 1], [], []>} : vector<32x64xf32>, vector<64x8xf32>, vector<32x8xf32> -> vector<32x8xf32>
    %c0_47 = arith.constant 0 : index
    %c0_48 = arith.constant 0 : index
    %85 = vector.load %arg12[%c0_47, %c0_48] : memref<1x8xf32, #tpu.memory_space<vmem>>, vector<1x8xf32>
    %86 = vector.broadcast %85 : vector<1x8xf32> to vector<32x8xf32>
    %87 = arith.addf %84, %86 : vector<32x8xf32>
    %c0_49 = arith.constant 0 : index
    %c0_50 = arith.constant 0 : index
    %88 = vector.load %arg14[%c0_49, %c0_50] : memref<32x8xf32, #tpu.memory_space<vmem>>, vector<32x8xf32>
    tpu.vector_store %arg14[%c0_49, %c0_50], %87 {strides = array<i32>} : memref<32x8xf32, #tpu.memory_space<vmem>>, vector<32x8xf32>,
    return
  }
  func.func @transform_0(%arg0: i32) -> (i32, i32) {
    %c0_i32 = arith.constant 0 : i32
    %c0_i32_0 = arith.constant 0 : i32
    %c0_i32_1 = arith.constant 0 : i32
    return %c0_i32, %c0_i32_0 : i32, i32
  }
  func.func @transform_1(%arg0: i32) -> (i32, i32) {
    %c0_i32 = arith.constant 0 : i32
    %c0_i32_0 = arith.constant 0 : i32
    %c0_i32_1 = arith.constant 0 : i32
    return %c0_i32, %c0_i32_0 : i32, i32
  }
  func.func @transform_2(%arg0: i32) -> (i32, i32) {
    %c0_i32 = arith.constant 0 : i32
    %c0_i32_0 = arith.constant 0 : i32
    %c0_i32_1 = arith.constant 0 : i32
    return %c0_i32, %c0_i32_0 : i32, i32
  }
  func.func @transform_3(%arg0: i32) -> (i32, i32) {
    %c0_i32 = arith.constant 0 : i32
    %c0_i32_0 = arith.constant 0 : i32
    %c0_i32_1 = arith.constant 0 : i32
    return %c0_i32, %c0_i32_0 : i32, i32
  }
  func.func @transform_4(%arg0: i32) -> (i32, i32) {
    %c0_i32 = arith.constant 0 : i32
    %c0_i32_0 = arith.constant 0 : i32
    %c0_i32_1 = arith.constant 0 : i32
    return %c0_i32, %c0_i32_0 : i32, i32
  }
  func.func @transform_5(%arg0: i32) -> (i32, i32) {
    %c0_i32 = arith.constant 0 : i32
    %c0_i32_0 = arith.constant 0 : i32
    %c0_i32_1 = arith.constant 0 : i32
    return %c0_i32, %c0_i32_0 : i32, i32
  }
  func.func @transform_6(%arg0: i32) -> (i32, i32) {
    %c0_i32 = arith.constant 0 : i32
    %c0_i32_0 = arith.constant 0 : i32
    %c0_i32_1 = arith.constant 0 : i32
    return %c0_i32, %c0_i32_0 : i32, i32
  }
  func.func @transform_7(%arg0: i32) -> (i32, i32) {
    %c0_i32 = arith.constant 0 : i32
    %c0_i32_0 = arith.constant 0 : i32
    %c0_i32_1 = arith.constant 0 : i32
    return %c0_i32, %c0_i32_0 : i32, i32
  }
  func.func @transform_8(%arg0: i32) -> (i32, i32) {
    %c0_i32 = arith.constant 0 : i32
    %c0_i32_0 = arith.constant 0 : i32
    %c0_i32_1 = arith.constant 0 : i32
    return %c0_i32, %c0_i32_0 : i32, i32
  }
  func.func @transform_9(%arg0: i32) -> (i32, i32) {
    %c0_i32 = arith.constant 0 : i32
    %c0_i32_0 = arith.constant 0 : i32
    %c0_i32_1 = arith.constant 0 : i32
    return %c0_i32, %c0_i32_0 : i32, i32
  }
  func.func @transform_10(%arg0: i32) -> (i32, i32) {
    %c0_i32 = arith.constant 0 : i32
    %c0_i32_0 = arith.constant 0 : i32
    %c0_i32_1 = arith.constant 0 : i32
    return %c0_i32, %c0_i32_0 : i32, i32
  }
  func.func @transform_11(%arg0: i32) -> (i32, i32) {
    %c0_i32 = arith.constant 0 : i32
    %c0_i32_0 = arith.constant 0 : i32
    %c0_i32_1 = arith.constant 0 : i32
    return %c0_i32, %c0_i32_0 : i32, i32
  }
  func.func @transform_12(%arg0: i32) -> (i32, i32) {
    %c0_i32 = arith.constant 0 : i32
    %c0_i32_0 = arith.constant 0 : i32
    %c0_i32_1 = arith.constant 0 : i32
    return %c0_i32, %c0_i32_0 : i32, i32
  }
  func.func @transform_13(%arg0: i32) -> (i32, i32) {
    %c0_i32 = arith.constant 0 : i32
    %c0_i32_0 = arith.constant 0 : i32
    %c0_i32_1 = arith.constant 0 : i32
    return %c0_i32, %c0_i32_0 : i32, i32
  }
}

module attributes {stable_mosaic.version = 11 : i64} {
  func.func @conv1_kernel(%arg0: i32, %arg1: memref<32x16xf32, #tpu.memory_space<vmem>>, %arg2: memref<64x4xf32, #tpu.memory_space<vmem>>, %arg3: memref<64x32xf32, #tpu.memory_space<vmem>>, %arg4: memref<64x32xf32, #tpu.memory_space<vmem>>, %arg5: memref<32x64xf32, #tpu.memory_space<vmem>>, %arg6: memref<16x32xf32, #tpu.memory_space<vmem>>, %arg7: memref<1x32xf32, #tpu.memory_space<vmem>>, %arg8: memref<32x128xf32, #tpu.memory_space<vmem>>, %arg9: memref<1x128xf32, #tpu.memory_space<vmem>>, %arg10: memref<4x64xf32, #tpu.memory_space<vmem>>, %arg11: memref<64x2xf32, #tpu.memory_space<vmem>>, %arg12: memref<1x64xf32, #tpu.memory_space<vmem>>, %arg13: memref<1x64xf32, #tpu.memory_space<vmem>>, %arg14: memref<1x64xf32, #tpu.memory_space<vmem>>, %arg15: memref<1x64xf32, #tpu.memory_space<vmem>>, %arg16: memref<1x64xf32, #tpu.memory_space<vmem>>, %arg17: memref<32x64xf32, #tpu.memory_space<vmem>>) attributes {dimension_semantics = [#tpu.dimension_semantics<arbitrary>], iteration_bounds = array<i64: 1>, scalar_prefetch = 0 : i64, scratch_operands = 0 : i64, tpu.core_type = #tpu.core_type<tc>, window_params = [{pipeline_mode = #tpu.pipeline_mode<synchronous>, transform_indices = @transform_0, window_bounds = array<i64: 32, 16>}, {pipeline_mode = #tpu.pipeline_mode<synchronous>, transform_indices = @transform_1, window_bounds = array<i64: 64, 4>}, {pipeline_mode = #tpu.pipeline_mode<synchronous>, transform_indices = @transform_2, window_bounds = array<i64: 64, 32>}, {pipeline_mode = #tpu.pipeline_mode<synchronous>, transform_indices = @transform_3, window_bounds = array<i64: 64, 32>}, {pipeline_mode = #tpu.pipeline_mode<synchronous>, transform_indices = @transform_4, window_bounds = array<i64: 32, 64>}, {pipeline_mode = #tpu.pipeline_mode<synchronous>, transform_indices = @transform_5, window_bounds = array<i64: 16, 32>}, {pipeline_mode = #tpu.pipeline_mode<synchronous>, transform_indices = @transform_6, window_bounds = array<i64: 1, 32>}, {pipeline_mode = #tpu.pipeline_mode<synchronous>, transform_indices = @transform_7, window_bounds = array<i64: 32, 128>}, {pipeline_mode = #tpu.pipeline_mode<synchronous>, transform_indices = @transform_8, window_bounds = array<i64: 1, 128>}, {pipeline_mode = #tpu.pipeline_mode<synchronous>, transform_indices = @transform_9, window_bounds = array<i64: 4, 64>}, {pipeline_mode = #tpu.pipeline_mode<synchronous>, transform_indices = @transform_10, window_bounds = array<i64: 64, 2>}, {pipeline_mode = #tpu.pipeline_mode<synchronous>, transform_indices = @transform_11, window_bounds = array<i64: 1, 64>}, {pipeline_mode = #tpu.pipeline_mode<synchronous>, transform_indices = @transform_12, window_bounds = array<i64: 1, 64>}, {pipeline_mode = #tpu.pipeline_mode<synchronous>, transform_indices = @transform_13, window_bounds = array<i64: 1, 64>}, {pipeline_mode = #tpu.pipeline_mode<synchronous>, transform_indices = @transform_14, window_bounds = array<i64: 1, 64>}, {pipeline_mode = #tpu.pipeline_mode<synchronous>, transform_indices = @transform_15, window_bounds = array<i64: 1, 64>}, {pipeline_mode = #tpu.pipeline_mode<synchronous>, transform_indices = @transform_16, window_bounds = array<i64: 32, 64>}]} {
    %c0 = arith.constant 0 : index
    %c0_0 = arith.constant 0 : index
    %0 = vector.load %arg1[%c0, %c0_0] : memref<32x16xf32, #tpu.memory_space<vmem>>, vector<32x16xf32>
    %c0_1 = arith.constant 0 : index
    %c0_2 = arith.constant 0 : index
    %1 = vector.load %arg6[%c0_1, %c0_2] : memref<16x32xf32, #tpu.memory_space<vmem>>, vector<16x32xf32>
    %cst = arith.constant dense<0.000000e+00> : vector<32x32xf32>
    %2 = tpu.matmul %0, %1, %cst {dimension_numbers = #tpu.dot_dimension_numbers<[1], [0], [0], [1], [0, 0, 1, 1], [], []>} : vector<32x16xf32>, vector<16x32xf32>, vector<32x32xf32> -> vector<32x32xf32>
    %c0_3 = arith.constant 0 : index
    %c0_4 = arith.constant 0 : index
    %3 = vector.load %arg7[%c0_3, %c0_4] : memref<1x32xf32, #tpu.memory_space<vmem>>, vector<1x32xf32>
    %4 = vector.broadcast %3 : vector<1x32xf32> to vector<32x32xf32>
    %5 = arith.addf %2, %4 : vector<32x32xf32>
    %c0_5 = arith.constant 0 : index
    %c0_6 = arith.constant 0 : index
    %6 = vector.load %arg2[%c0_5, %c0_6] : memref<64x4xf32, #tpu.memory_space<vmem>>, vector<64x4xf32>
    %c0_7 = arith.constant 0 : index
    %c0_8 = arith.constant 0 : index
    %7 = vector.load %arg3[%c0_7, %c0_8] : memref<64x32xf32, #tpu.memory_space<vmem>>, vector<64x32xf32>
    %c0_9 = arith.constant 0 : index
    %c0_10 = arith.constant 0 : index
    %8 = vector.load %arg4[%c0_9, %c0_10] : memref<64x32xf32, #tpu.memory_space<vmem>>, vector<64x32xf32>
    %c0_11 = arith.constant 0 : index
    %c0_12 = arith.constant 0 : index
    %9 = vector.load %arg5[%c0_11, %c0_12] : memref<32x64xf32, #tpu.memory_space<vmem>>, vector<32x64xf32>
    %c0_13 = arith.constant 0 : index
    %c0_14 = arith.constant 0 : index
    %10 = vector.load %arg8[%c0_13, %c0_14] : memref<32x128xf32, #tpu.memory_space<vmem>>, vector<32x128xf32>
    %c0_15 = arith.constant 0 : index
    %c0_16 = arith.constant 0 : index
    %11 = vector.load %arg9[%c0_15, %c0_16] : memref<1x128xf32, #tpu.memory_space<vmem>>, vector<1x128xf32>
    %c0_17 = arith.constant 0 : index
    %c0_18 = arith.constant 0 : index
    %12 = vector.load %arg10[%c0_17, %c0_18] : memref<4x64xf32, #tpu.memory_space<vmem>>, vector<4x64xf32>
    %c0_19 = arith.constant 0 : index
    %c0_20 = arith.constant 0 : index
    %13 = vector.load %arg11[%c0_19, %c0_20] : memref<64x2xf32, #tpu.memory_space<vmem>>, vector<64x2xf32>
    %c0_21 = arith.constant 0 : index
    %c0_22 = arith.constant 0 : index
    %14 = vector.load %arg12[%c0_21, %c0_22] : memref<1x64xf32, #tpu.memory_space<vmem>>, vector<1x64xf32>
    %cst_23 = arith.constant dense<0.000000e+00> : vector<32x128xf32>
    %15 = tpu.matmul %5, %10, %cst_23 {dimension_numbers = #tpu.dot_dimension_numbers<[1], [0], [0], [1], [0, 0, 1, 1], [], []>} : vector<32x32xf32>, vector<32x128xf32>, vector<32x128xf32> -> vector<32x128xf32>
    %16 = vector.broadcast %11 : vector<1x128xf32> to vector<32x128xf32>
    %17 = arith.addf %15, %16 : vector<32x128xf32>
    %18 = vector.extract_strided_slice %17 {offsets = [0, 0], sizes = [32, 64], strides = [1, 1]} : vector<32x128xf32> to vector<32x64xf32>
    %19 = vector.extract_strided_slice %17 {offsets = [0, 64], sizes = [32, 64], strides = [1, 1]} : vector<32x128xf32> to vector<32x64xf32>
    %cst_24 = arith.constant dense<0.000000e+00> : vector<64x64xf32>
    %20 = tpu.matmul %6, %12, %cst_24 {dimension_numbers = #tpu.dot_dimension_numbers<[1], [0], [0], [1], [0, 0, 1, 1], [], []>} : vector<64x4xf32>, vector<4x64xf32>, vector<64x64xf32> -> vector<64x64xf32>
    %cst_25 = arith.constant dense<0.000000e+00> : vector<64x64xf32>
    %21 = tpu.matmul %7, %18, %cst_25 {dimension_numbers = #tpu.dot_dimension_numbers<[1], [0], [0], [1], [0, 0, 1, 1], [], []>} : vector<64x32xf32>, vector<32x64xf32>, vector<64x64xf32> -> vector<64x64xf32>
    %cst_26 = arith.constant dense<0.000000e+00> : vector<64x64xf32>
    %22 = tpu.matmul %8, %19, %cst_26 {dimension_numbers = #tpu.dot_dimension_numbers<[1], [0], [0], [1], [0, 0, 1, 1], [], []>} : vector<64x32xf32>, vector<32x64xf32>, vector<64x64xf32> -> vector<64x64xf32>
    %23 = arith.addf %21, %22 : vector<64x64xf32>
    %24 = arith.addf %23, %20 : vector<64x64xf32>
    %cst_27 = arith.constant 0.000000e+00 : f32
    %25 = vector.broadcast %cst_27 : f32 to vector<64x64xf32>
    %26 = arith.cmpf ogt, %24, %25 : vector<64x64xf32>
    %cst_28 = arith.constant 2.000000e-01 : f32
    %27 = vector.broadcast %cst_28 : f32 to vector<64x64xf32>
    %28 = arith.mulf %27, %24 : vector<64x64xf32>
    %29 = arith.select %26, %24, %28 : vector<64x64xi1>, vector<64x64xf32>
    %cst_29 = arith.constant dense<0.000000e+00> : vector<64x2xf32>
    %30 = tpu.matmul %29, %13, %cst_29 {dimension_numbers = #tpu.dot_dimension_numbers<[1], [0], [0], [1], [0, 0, 1, 1], [], []>} : vector<64x64xf32>, vector<64x2xf32>, vector<64x2xf32> -> vector<64x2xf32>
    %cst_30 = arith.constant dense<0.000000e+00> : vector<32x32xf32>
    %31 = tpu.matmul %9, %7, %cst_30 {dimension_numbers = #tpu.dot_dimension_numbers<[1], [0], [0], [1], [0, 0, 1, 1], [], []>} : vector<32x64xf32>, vector<64x32xf32>, vector<32x32xf32> -> vector<32x32xf32>
    %cst_31 = arith.constant 5.000000e-01 : f32
    %32 = vector.broadcast %cst_31 : f32 to vector<32x32xf32>
    %33 = arith.cmpf ogt, %31, %32 : vector<32x32xf32>
    %34 = vector.extract_strided_slice %30 {offsets = [0, 0], sizes = [64, 1], strides = [1, 1]} : vector<64x2xf32> to vector<64x1xf32>
    %35 = vector.broadcast %34 : vector<64x1xf32> to vector<64x32xf32>
    %36 = arith.mulf %35, %7 : vector<64x32xf32>
    %cst_32 = arith.constant dense<0.000000e+00> : vector<32x32xf32>
    %37 = tpu.matmul %9, %36, %cst_32 {dimension_numbers = #tpu.dot_dimension_numbers<[1], [0], [0], [1], [0, 0, 1, 1], [], []>} : vector<32x64xf32>, vector<64x32xf32>, vector<32x32xf32> -> vector<32x32xf32>
    %cst_33 = arith.constant -1.000000e+30 : f32
    %38 = vector.broadcast %cst_33 : f32 to vector<32x32xf32>
    %39 = arith.select %33, %37, %38 : vector<32x32xi1>, vector<32x32xf32>
    %cst_34 = arith.constant dense<0xFF800000> : vector<32xf32>
    %40 = vector.multi_reduction <maximumf>, %39, %cst_34 [1] : vector<32x32xf32> to vector<32xf32>
    %41 = vector.shape_cast %40 : vector<32xf32> to vector<32x1xf32>
    %42 = vector.broadcast %41 : vector<32x1xf32> to vector<32x32xf32>
    %43 = arith.subf %39, %42 : vector<32x32xf32>
    %44 = math.exp %43 : vector<32x32xf32>
    %cst_35 = arith.constant 0.000000e+00 : f32
    %45 = vector.broadcast %cst_35 : f32 to vector<32x32xf32>
    %46 = arith.select %33, %44, %45 : vector<32x32xi1>, vector<32x32xf32>
    %cst_36 = arith.constant dense<0.000000e+00> : vector<32xf32>
    %47 = vector.multi_reduction <add>, %46, %cst_36 [1] : vector<32x32xf32> to vector<32xf32>
    %48 = vector.shape_cast %47 : vector<32xf32> to vector<32x1xf32>
    %cst_37 = arith.constant 1.000000e-16 : f32
    %49 = vector.broadcast %cst_37 : f32 to vector<32x1xf32>
    %50 = arith.addf %48, %49 : vector<32x1xf32>
    %51 = tpu.reciprocal %50 {approx = true} : vector<32x1xf32> -> vector<32x1xf32>
    %52 = vector.broadcast %51 : vector<32x1xf32> to vector<32x32xf32>
    %53 = arith.mulf %46, %52 : vector<32x32xf32>
    %54 = vector.extract_strided_slice %18 {offsets = [0, 0], sizes = [32, 32], strides = [1, 1]} : vector<32x64xf32> to vector<32x32xf32>
    %cst_38 = arith.constant dense<0.000000e+00> : vector<32x32xf32>
    %55 = tpu.matmul %53, %54, %cst_38 {dimension_numbers = #tpu.dot_dimension_numbers<[1], [0], [0], [1], [0, 0, 1, 1], [], []>} : vector<32x32xf32>, vector<32x32xf32>, vector<32x32xf32> -> vector<32x32xf32>
    %56 = vector.extract_strided_slice %30 {offsets = [0, 1], sizes = [64, 1], strides = [1, 1]} : vector<64x2xf32> to vector<64x1xf32>
    %57 = vector.broadcast %56 : vector<64x1xf32> to vector<64x32xf32>
    %58 = arith.mulf %57, %7 : vector<64x32xf32>
    %cst_39 = arith.constant dense<0.000000e+00> : vector<32x32xf32>
    %59 = tpu.matmul %9, %58, %cst_39 {dimension_numbers = #tpu.dot_dimension_numbers<[1], [0], [0], [1], [0, 0, 1, 1], [], []>} : vector<32x64xf32>, vector<64x32xf32>, vector<32x32xf32> -> vector<32x32xf32>
    %cst_40 = arith.constant -1.000000e+30 : f32
    %60 = vector.broadcast %cst_40 : f32 to vector<32x32xf32>
    %61 = arith.select %33, %59, %60 : vector<32x32xi1>, vector<32x32xf32>
    %cst_41 = arith.constant dense<0xFF800000> : vector<32xf32>
    %62 = vector.multi_reduction <maximumf>, %61, %cst_41 [1] : vector<32x32xf32> to vector<32xf32>
    %63 = vector.shape_cast %62 : vector<32xf32> to vector<32x1xf32>
    %64 = vector.broadcast %63 : vector<32x1xf32> to vector<32x32xf32>
    %65 = arith.subf %61, %64 : vector<32x32xf32>
    %66 = math.exp %65 : vector<32x32xf32>
    %cst_42 = arith.constant 0.000000e+00 : f32
    %67 = vector.broadcast %cst_42 : f32 to vector<32x32xf32>
    %68 = arith.select %33, %66, %67 : vector<32x32xi1>, vector<32x32xf32>
    %cst_43 = arith.constant dense<0.000000e+00> : vector<32xf32>
    %69 = vector.multi_reduction <add>, %68, %cst_43 [1] : vector<32x32xf32> to vector<32xf32>
    %70 = vector.shape_cast %69 : vector<32xf32> to vector<32x1xf32>
    %cst_44 = arith.constant 1.000000e-16 : f32
    %71 = vector.broadcast %cst_44 : f32 to vector<32x1xf32>
    %72 = arith.addf %70, %71 : vector<32x1xf32>
    %73 = tpu.reciprocal %72 {approx = true} : vector<32x1xf32> -> vector<32x1xf32>
    %74 = vector.broadcast %73 : vector<32x1xf32> to vector<32x32xf32>
    %75 = arith.mulf %68, %74 : vector<32x32xf32>
    %76 = vector.extract_strided_slice %18 {offsets = [0, 32], sizes = [32, 32], strides = [1, 1]} : vector<32x64xf32> to vector<32x32xf32>
    %cst_45 = arith.constant dense<0.000000e+00> : vector<32x32xf32>
    %77 = tpu.matmul %75, %76, %cst_45 {dimension_numbers = #tpu.dot_dimension_numbers<[1], [0], [0], [1], [0, 0, 1, 1], [], []>} : vector<32x32xf32>, vector<32x32xf32>, vector<32x32xf32> -> vector<32x32xf32>
    %78 = tpu.concatenate %55, %77 in 1 : vector<32x32xf32>, vector<32x32xf32> -> vector<32x64xf32>
    %79 = vector.broadcast %14 : vector<1x64xf32> to vector<32x64xf32>
    %80 = arith.addf %78, %79 : vector<32x64xf32>
    %c0_46 = arith.constant 0 : index
    %c0_47 = arith.constant 0 : index
    %81 = vector.load %arg13[%c0_46, %c0_47] : memref<1x64xf32, #tpu.memory_space<vmem>>, vector<1x64xf32>
    %c0_48 = arith.constant 0 : index
    %c0_49 = arith.constant 0 : index
    %82 = vector.load %arg14[%c0_48, %c0_49] : memref<1x64xf32, #tpu.memory_space<vmem>>, vector<1x64xf32>
    %c0_50 = arith.constant 0 : index
    %c0_51 = arith.constant 0 : index
    %83 = vector.load %arg15[%c0_50, %c0_51] : memref<1x64xf32, #tpu.memory_space<vmem>>, vector<1x64xf32>
    %c0_52 = arith.constant 0 : index
    %c0_53 = arith.constant 0 : index
    %84 = vector.load %arg16[%c0_52, %c0_53] : memref<1x64xf32, #tpu.memory_space<vmem>>, vector<1x64xf32>
    %85 = vector.broadcast %83 : vector<1x64xf32> to vector<32x64xf32>
    %86 = arith.subf %80, %85 : vector<32x64xf32>
    %cst_54 = arith.constant 9.99999974E-6 : f32
    %87 = vector.broadcast %cst_54 : f32 to vector<1x64xf32>
    %88 = arith.addf %84, %87 : vector<1x64xf32>
    %89 = math.rsqrt %88 : vector<1x64xf32>
    %90 = vector.broadcast %89 : vector<1x64xf32> to vector<32x64xf32>
    %91 = arith.mulf %86, %90 : vector<32x64xf32>
    %92 = vector.broadcast %81 : vector<1x64xf32> to vector<32x64xf32>
    %93 = arith.mulf %91, %92 : vector<32x64xf32>
    %94 = vector.broadcast %82 : vector<1x64xf32> to vector<32x64xf32>
    %95 = arith.addf %93, %94 : vector<32x64xf32>
    %96 = arith.negf %95 : vector<32x64xf32>
    %97 = math.exp %96 : vector<32x64xf32>
    %cst_55 = arith.constant 1.000000e+00 : f32
    %98 = vector.broadcast %cst_55 : f32 to vector<32x64xf32>
    %99 = arith.addf %98, %97 : vector<32x64xf32>
    %100 = arith.divf %98, %99 : vector<32x64xf32>
    %101 = arith.mulf %95, %100 : vector<32x64xf32>
    %c0_56 = arith.constant 0 : index
    %c0_57 = arith.constant 0 : index
    %102 = vector.load %arg17[%c0_56, %c0_57] : memref<32x64xf32, #tpu.memory_space<vmem>>, vector<32x64xf32>
    tpu.vector_store %arg17[%c0_56, %c0_57], %101 {strides = array<i32>} : memref<32x64xf32, #tpu.memory_space<vmem>>, vector<32x64xf32>,
    return
  }
  func.func @transform_0(%arg0: i32) -> (i32, i32) {
    %c0_i32 = arith.constant 0 : i32
    %c0_i32_0 = arith.constant 0 : i32
    %c0_i32_1 = arith.constant 0 : i32
    return %c0_i32, %c0_i32_0 : i32, i32
  }
  func.func @transform_1(%arg0: i32) -> (i32, i32) {
    %c0_i32 = arith.constant 0 : i32
    %c0_i32_0 = arith.constant 0 : i32
    %c0_i32_1 = arith.constant 0 : i32
    return %c0_i32, %c0_i32_0 : i32, i32
  }
  func.func @transform_2(%arg0: i32) -> (i32, i32) {
    %c0_i32 = arith.constant 0 : i32
    %c0_i32_0 = arith.constant 0 : i32
    %c0_i32_1 = arith.constant 0 : i32
    return %c0_i32, %c0_i32_0 : i32, i32
  }
  func.func @transform_3(%arg0: i32) -> (i32, i32) {
    %c0_i32 = arith.constant 0 : i32
    %c0_i32_0 = arith.constant 0 : i32
    %c0_i32_1 = arith.constant 0 : i32
    return %c0_i32, %c0_i32_0 : i32, i32
  }
  func.func @transform_4(%arg0: i32) -> (i32, i32) {
    %c0_i32 = arith.constant 0 : i32
    %c0_i32_0 = arith.constant 0 : i32
    %c0_i32_1 = arith.constant 0 : i32
    return %c0_i32, %c0_i32_0 : i32, i32
  }
  func.func @transform_5(%arg0: i32) -> (i32, i32) {
    %c0_i32 = arith.constant 0 : i32
    %c0_i32_0 = arith.constant 0 : i32
    %c0_i32_1 = arith.constant 0 : i32
    return %c0_i32, %c0_i32_0 : i32, i32
  }
  func.func @transform_6(%arg0: i32) -> (i32, i32) {
    %c0_i32 = arith.constant 0 : i32
    %c0_i32_0 = arith.constant 0 : i32
    %c0_i32_1 = arith.constant 0 : i32
    return %c0_i32, %c0_i32_0 : i32, i32
  }
  func.func @transform_7(%arg0: i32) -> (i32, i32) {
    %c0_i32 = arith.constant 0 : i32
    %c0_i32_0 = arith.constant 0 : i32
    %c0_i32_1 = arith.constant 0 : i32
    return %c0_i32, %c0_i32_0 : i32, i32
  }
  func.func @transform_8(%arg0: i32) -> (i32, i32) {
    %c0_i32 = arith.constant 0 : i32
    %c0_i32_0 = arith.constant 0 : i32
    %c0_i32_1 = arith.constant 0 : i32
    return %c0_i32, %c0_i32_0 : i32, i32
  }
  func.func @transform_9(%arg0: i32) -> (i32, i32) {
    %c0_i32 = arith.constant 0 : i32
    %c0_i32_0 = arith.constant 0 : i32
    %c0_i32_1 = arith.constant 0 : i32
    return %c0_i32, %c0_i32_0 : i32, i32
  }
  func.func @transform_10(%arg0: i32) -> (i32, i32) {
    %c0_i32 = arith.constant 0 : i32
    %c0_i32_0 = arith.constant 0 : i32
    %c0_i32_1 = arith.constant 0 : i32
    return %c0_i32, %c0_i32_0 : i32, i32
  }
  func.func @transform_11(%arg0: i32) -> (i32, i32) {
    %c0_i32 = arith.constant 0 : i32
    %c0_i32_0 = arith.constant 0 : i32
    %c0_i32_1 = arith.constant 0 : i32
    return %c0_i32, %c0_i32_0 : i32, i32
  }
  func.func @transform_12(%arg0: i32) -> (i32, i32) {
    %c0_i32 = arith.constant 0 : i32
    %c0_i32_0 = arith.constant 0 : i32
    %c0_i32_1 = arith.constant 0 : i32
    return %c0_i32, %c0_i32_0 : i32, i32
  }
  func.func @transform_13(%arg0: i32) -> (i32, i32) {
    %c0_i32 = arith.constant 0 : i32
    %c0_i32_0 = arith.constant 0 : i32
    %c0_i32_1 = arith.constant 0 : i32
    return %c0_i32, %c0_i32_0 : i32, i32
  }
  func.func @transform_14(%arg0: i32) -> (i32, i32) {
    %c0_i32 = arith.constant 0 : i32
    %c0_i32_0 = arith.constant 0 : i32
    %c0_i32_1 = arith.constant 0 : i32
    return %c0_i32, %c0_i32_0 : i32, i32
  }
  func.func @transform_15(%arg0: i32) -> (i32, i32) {
    %c0_i32 = arith.constant 0 : i32
    %c0_i32_0 = arith.constant 0 : i32
    %c0_i32_1 = arith.constant 0 : i32
    return %c0_i32, %c0_i32_0 : i32, i32
  }
  func.func @transform_16(%arg0: i32) -> (i32, i32) {
    %c0_i32 = arith.constant 0 : i32
    %c0_i32_0 = arith.constant 0 : i32
    %c0_i32_1 = arith.constant 0 : i32
    return %c0_i32, %c0_i32_0 : i32, i32
  }
}

</mosaic_0001>

<llo_original>
// kernel: gcn_forward.4
$region0: #{gcn_forward.4}
  #allocation0 [shape = 'u32[]', space=smem, size = 0x4, offset = 0x4, fixed_abs, tag = 'smem constant byte address 0x4 - core index']
  #allocation1 [shape = 'u32[72,128]{1,0:T(1,128)}', space=vmem, size = 0x9000, scoped, tag = 'internal scratch']
  %s0 = inlined_call_operand.vmem [shape: f32[32,64], index: 0, kind: input, shape index: {}]
  %s1 = inlined_call_operand.vmem [shape: f32[64,4], index: 1, kind: input, shape index: {}]
  %s2 = inlined_call_operand.vmem [shape: f32[64,32], index: 2, kind: input, shape index: {}]
  %s3 = inlined_call_operand.vmem [shape: f32[64,32], index: 3, kind: input, shape index: {}]
  %s4 = inlined_call_operand.vmem [shape: f32[32,64], index: 4, kind: input, shape index: {}]
  %s5 = inlined_call_operand.vmem [shape: f32[64,128], index: 5, kind: input, shape index: {}]
  %s6 = inlined_call_operand.vmem [shape: f32[1,128], index: 6, kind: input, shape index: {}]
  %s7 = inlined_call_operand.vmem [shape: f32[4,64], index: 7, kind: input, shape index: {}]
  %s8 = inlined_call_operand.vmem [shape: f32[64,2], index: 8, kind: input, shape index: {}]
  %s9 = inlined_call_operand.vmem [shape: f32[1,64], index: 9, kind: input, shape index: {}]
  %s10 = inlined_call_operand.vmem [shape: f32[1,64], index: 10, kind: input, shape index: {}]
  %s11 = inlined_call_operand.vmem [shape: f32[1,64], index: 11, kind: input, shape index: {}]
  %s12 = inlined_call_operand.vmem [shape: f32[1,64], index: 12, kind: input, shape index: {}]
  %s13 = inlined_call_operand.vmem [shape: f32[1,64], index: 13, kind: input, shape index: {}]
  %s14 = inlined_call_operand.vmem [shape: f32[32,64], index: 14, kind: output, shape index: {}]
  %s15 = sld [smem:[#allocation0]]
  $region66: #{gcn_forward.4} parent=0
    _
  %s17 = ssub.s32 1, %s15
  %s18 = scalar_select 0, %s17, %s15
  // Predicated region
  $region2: #{gcn_forward.4} parent=0 // pred_check
    _
  $region3: #{gcn_forward.4} parent=0 // pred_check_branch
    %20 = sbr.rel (0) target = $region5
  $region4: #{gcn_forward.4} parent=0 // pred_region
    _
  $region5: #{gcn_forward.4} parent=0 // pred_fallthru
    _
  // Predicated region
  $region6: #{gcn_forward.4} parent=0 // pred_check
    _
  $region7: #{gcn_forward.4} parent=0 // pred_check_branch
    %22 = sbr.rel (0) target = $region9
  $region8: #{gcn_forward.4} parent=0 // pred_region
    _
  $region9: #{gcn_forward.4} parent=0 // pred_fallthru
    _
  // Predicated region
  $region10: #{gcn_forward.4} parent=0 // pred_check
    _
  $region11: #{gcn_forward.4} parent=0 // pred_check_branch
    %24 = sbr.rel (0) target = $region13
  $region12: #{gcn_forward.4} parent=0 // pred_region
    _
  $region13: #{gcn_forward.4} parent=0 // pred_fallthru
    _
  // Predicated region
  $region14: #{gcn_forward.4} parent=0 // pred_check
    _
  $region15: #{gcn_forward.4} parent=0 // pred_check_branch
    %26 = sbr.rel (0) target = $region17
  $region16: #{gcn_forward.4} parent=0 // pred_region
    _
  $region17: #{gcn_forward.4} parent=0 // pred_fallthru
    _
  // Predicated region
  $region18: #{gcn_forward.4} parent=0 // pred_check
    _
  $region19: #{gcn_forward.4} parent=0 // pred_check_branch
    %28 = sbr.rel (0) target = $region21
  $region20: #{gcn_forward.4} parent=0 // pred_region
    _
  $region21: #{gcn_forward.4} parent=0 // pred_fallthru
    _
  // Predicated region
  $region22: #{gcn_forward.4} parent=0 // pred_check
    _
  $region23: #{gcn_forward.4} parent=0 // pred_check_branch
    %30 = sbr.rel (0) target = $region25
  $region24: #{gcn_forward.4} parent=0 // pred_region
    _
  $region25: #{gcn_forward.4} parent=0 // pred_fallthru
    _
  // Predicated region
  $region26: #{gcn_forward.4} parent=0 // pred_check
    _
  $region27: #{gcn_forward.4} parent=0 // pred_check_branch
    %32 = sbr.rel (0) target = $region29
  $region28: #{gcn_forward.4} parent=0 // pred_region
    _
  $region29: #{gcn_forward.4} parent=0 // pred_fallthru
    _
  // Predicated region
  $region30: #{gcn_forward.4} parent=0 // pred_check
    _
  $region31: #{gcn_forward.4} parent=0 // pred_check_branch
    %34 = sbr.rel (0) target = $region33
  $region32: #{gcn_forward.4} parent=0 // pred_region
    _
  $region33: #{gcn_forward.4} parent=0 // pred_fallthru
    _
  // Predicated region
  $region34: #{gcn_forward.4} parent=0 // pred_check
    _
  $region35: #{gcn_forward.4} parent=0 // pred_check_branch
    %36 = sbr.rel (0) target = $region37
  $region36: #{gcn_forward.4} parent=0 // pred_region
    _
  $region37: #{gcn_forward.4} parent=0 // pred_fallthru
    _
  // Predicated region
  $region38: #{gcn_forward.4} parent=0 // pred_check
    _
  $region39: #{gcn_forward.4} parent=0 // pred_check_branch
    %38 = sbr.rel (0) target = $region41
  $region40: #{gcn_forward.4} parent=0 // pred_region
    _
  $region41: #{gcn_forward.4} parent=0 // pred_fallthru
    _
  // Predicated region
  $region42: #{gcn_forward.4} parent=0 // pred_check
    _
  $region43: #{gcn_forward.4} parent=0 // pred_check_branch
    %40 = sbr.rel (0) target = $region45
  $region44: #{gcn_forward.4} parent=0 // pred_region
    _
  $region45: #{gcn_forward.4} parent=0 // pred_fallthru
    _
  // Predicated region
  $region46: #{gcn_forward.4} parent=0 // pred_check
    _
  $region47: #{gcn_forward.4} parent=0 // pred_check_branch
    %42 = sbr.rel (0) target = $region49
  $region48: #{gcn_forward.4} parent=0 // pred_region
    _
  $region49: #{gcn_forward.4} parent=0 // pred_fallthru
    _
  // Predicated region
  $region50: #{gcn_forward.4} parent=0 // pred_check
    _
  $region51: #{gcn_forward.4} parent=0 // pred_check_branch
    %44 = sbr.rel (0) target = $region53
  $region52: #{gcn_forward.4} parent=0 // pred_region
    _
  $region53: #{gcn_forward.4} parent=0 // pred_fallthru
    _
  // Predicated region
  $region54: #{gcn_forward.4} parent=0 // pred_check
    _
  $region55: #{gcn_forward.4} parent=0 // pred_check_branch
    %46 = sbr.rel (0) target = $region57
  $region56: #{gcn_forward.4} parent=0 // pred_region
    _
  $region57: #{gcn_forward.4} parent=0 // pred_fallthru
    _
  %v47 = vld [vmem:[%s0] sm:$0xff]
  %v48 = vld [vmem:[%s0 + $0x8] sm:$0xff]
  %v49 = vld [vmem:[%s0 + $0x10] sm:$0xff]
  %v50 = vld [vmem:[%s0 + $0x18] sm:$0xff]
  %v51 = vld [vmem:[%s1] sm:$0xff]
  %v52 = vld [vmem:[%s1 + $0x8] sm:$0xff]
  %v53 = vld [vmem:[%s1 + $0x10] sm:$0xff]
  %v54 = vld [vmem:[%s1 + $0x18] sm:$0xff]
  %v55 = vld [vmem:[%s1 + $0x20] sm:$0xff]
  %v56 = vld [vmem:[%s1 + $0x28] sm:$0xff]
  %v57 = vld [vmem:[%s1 + $0x30] sm:$0xff]
  %v58 = vld [vmem:[%s1 + $0x38] sm:$0xff]
  %v59 = vld [vmem:[%s2] sm:$0xff]
  %v60 = vld [vmem:[%s2 + $0x8] sm:$0xff]
  %v61 = vld [vmem:[%s2 + $0x10] sm:$0xff]
  %v62 = vld [vmem:[%s2 + $0x18] sm:$0xff]
  %v63 = vld [vmem:[%s2 + $0x20] sm:$0xff]
  %v64 = vld [vmem:[%s2 + $0x28] sm:$0xff]
  %v65 = vld [vmem:[%s2 + $0x30] sm:$0xff]
  %v66 = vld [vmem:[%s2 + $0x38] sm:$0xff]
  %v67 = vld [vmem:[%s3] sm:$0xff]
  %v68 = vld [vmem:[%s3 + $0x8] sm:$0xff]
  %v69 = vld [vmem:[%s3 + $0x10] sm:$0xff]
  %v70 = vld [vmem:[%s3 + $0x18] sm:$0xff]
  %v71 = vld [vmem:[%s3 + $0x20] sm:$0xff]
  %v72 = vld [vmem:[%s3 + $0x28] sm:$0xff]
  %v73 = vld [vmem:[%s3 + $0x30] sm:$0xff]
  %v74 = vld [vmem:[%s3 + $0x38] sm:$0xff]
  %v75 = vld [vmem:[%s4] sm:$0xff]
  %v76 = vld [vmem:[%s4 + $0x8] sm:$0xff]
  %v77 = vld [vmem:[%s4 + $0x10] sm:$0xff]
  %v78 = vld [vmem:[%s4 + $0x18] sm:$0xff]
  %v79 = vld [vmem:[%s5] sm:$0xff]
  %v80 = vld [vmem:[%s5 + $0x8] sm:$0xff]
  %v81 = vld [vmem:[%s5 + $0x10] sm:$0xff]
  %v82 = vld [vmem:[%s5 + $0x18] sm:$0xff]
  %v83 = vld [vmem:[%s5 + $0x20] sm:$0xff]
  %v84 = vld [vmem:[%s5 + $0x28] sm:$0xff]
  %v85 = vld [vmem:[%s5 + $0x30] sm:$0xff]
  %v86 = vld [vmem:[%s5 + $0x38] sm:$0xff]
  %v87 = vld [vmem:[%s6] sm:$0x1]
  %v88 = vld [vmem:[%s7] sm:$0xf]
  %v89 = vld [vmem:[%s8] sm:$0xff]
  %v90 = vld [vmem:[%s8 + $0x8] sm:$0xff]
  %v91 = vld [vmem:[%s8 + $0x10] sm:$0xff]
  %v92 = vld [vmem:[%s8 + $0x18] sm:$0xff]
  %v93 = vld [vmem:[%s8 + $0x20] sm:$0xff]
  %v94 = vld [vmem:[%s8 + $0x28] sm:$0xff]
  %v95 = vld [vmem:[%s8 + $0x30] sm:$0xff]
  %v96 = vld [vmem:[%s8 + $0x38] sm:$0xff]
  %v97 = vld [vmem:[%s9] sm:$0x1]
  %v99 = vperm.slane %v87, 0
  %vm101 = vcmask 523264
  %v103 = vsel %vm101, %v47, 0
  %v106 = vsel %vm101, %v48, 0
  %v109 = vsel %vm101, %v49, 0
  %v112 = vsel %vm101, %v50, 0
  %114 = vmatpush.msra.mxu0 0.0
  %115 = vmatpush.msra.mxu0 0.0
  %116 = vmatpush.msra.mxu0 0.0
  %117 = vmatpush.msra.mxu0 0.0
  %118 = vmatpush.msra.mxu0 0.0
  %119 = vmatpush.msra.mxu0 0.0
  %120 = vmatpush.msra.mxu0 0.0
  %121 = vmatpush.msra.mxu0 0.0
  %122 = vmatpush.msra.mxu0 %v86
  %123 = vmatpush.msra.mxu0 %v85
  %124 = vmatpush.msra.mxu0 %v84
  %125 = vmatpush.msra.mxu0 %v83
  %126 = vmatpush.msra.mxu0 %v82
  %127 = vmatpush.msra.mxu0 %v81
  %128 = vmatpush.msra.mxu0 %v80
  %129 = vmatpush.msra.mxu0 %v79
  %130 = vmatmul.f32.gmra.mxu0 %v103
  %v131 = vpop.f32.mrf.mxu0
  %v132 = vadd.f32 %v99, %v131
  %133 = vmatmul.f32.gmra.mxu0 %v106
  %v134 = vpop.f32.mrf.mxu0
  %v135 = vadd.f32 %v99, %v134
  %136 = vmatmul.f32.gmra.mxu0 %v109
  %v137 = vpop.f32.mrf.mxu0
  %v138 = vadd.f32 %v99, %v137
  %139 = vmatmul.f32.gmra.mxu0 %v112
  %v140 = vpop.f32.mrf.mxu0
  %v141 = vadd.f32 %v99, %v140
  %142 = vdwg.mxu0
  %vm143 = vcmask 31744
  %v145 = vsel %vm143, %v51, 0
  %v148 = vsel %vm143, %v52, 0
  %v151 = vsel %vm143, %v53, 0
  %v154 = vsel %vm143, %v54, 0
  %v157 = vsel %vm143, %v55, 0
  %v160 = vsel %vm143, %v56, 0
  %v163 = vsel %vm143, %v57, 0
  %v166 = vsel %vm143, %v58, 0
  %vm168 = vcmask 1043456
  %v170 = vsel %vm168, %v88, 0
  %172 = vmatpush.msra.mxu0 0.0
  %173 = vmatpush.msra.mxu0 0.0
  %174 = vmatpush.msra.mxu0 0.0
  %175 = vmatpush.msra.mxu0 0.0
  %176 = vmatpush.msra.mxu0 0.0
  %177 = vmatpush.msra.mxu0 0.0
  %178 = vmatpush.msra.mxu0 0.0
  %179 = vmatpush.msra.mxu0 0.0
  %180 = vmatpush.msra.mxu0 0.0
  %181 = vmatpush.msra.mxu0 0.0
  %182 = vmatpush.msra.mxu0 0.0
  %183 = vmatpush.msra.mxu0 0.0
  %184 = vmatpush.msra.mxu0 0.0
  %185 = vmatpush.msra.mxu0 0.0
  %186 = vmatpush.msra.mxu0 0.0
  %187 = vmatpush.msra.mxu0 %v170
  %188 = vmatmul.f32.gmra.mxu0 %v145
  %v189 = vpop.f32.mrf.mxu0
  %v190 = vadd.f32 0.0, %v189
  %191 = vmatmul.f32.gmra.mxu0 %v148
  %v192 = vpop.f32.mrf.mxu0
  %v193 = vadd.f32 0.0, %v192
  %194 = vmatmul.f32.gmra.mxu0 %v151
  %v195 = vpop.f32.mrf.mxu0
  %v196 = vadd.f32 0.0, %v195
  %197 = vmatmul.f32.gmra.mxu0 %v154
  %v198 = vpop.f32.mrf.mxu0
  %v199 = vadd.f32 0.0, %v198
  %200 = vmatmul.f32.gmra.mxu0 %v157
  %v201 = vpop.f32.mrf.mxu0
  %v202 = vadd.f32 0.0, %v201
  %203 = vmatmul.f32.gmra.mxu0 %v160
  %v204 = vpop.f32.mrf.mxu0
  %v205 = vadd.f32 0.0, %v204
  %206 = vmatmul.f32.gmra.mxu0 %v163
  %v207 = vpop.f32.mrf.mxu0
  %v208 = vadd.f32 0.0, %v207
  %209 = vmatmul.f32.gmra.mxu0 %v166
  %v210 = vpop.f32.mrf.mxu0
  %v211 = vadd.f32 0.0, %v210
  %212 = vdwg.mxu0
  %217 = vrot.lane.b32.xlu0 %v132, 64
  %v218 = vpop.permute.xlu0 %217
  %219 = vrot.lane.b32.xlu0 %v135, 64
  %v220 = vpop.permute.xlu0 %219
  %221 = vrot.lane.b32.xlu0 %v138, 64
  %v222 = vpop.permute.xlu0 %221
  %223 = vrot.lane.b32.xlu0 %v141, 64
  %v224 = vpop.permute.xlu0 %223
  %vm229 = vcmask 261120
  %v231 = vsel %vm229, %v67, 0
  %v234 = vsel %vm229, %v68, 0
  %v237 = vsel %vm229, %v69, 0
  %v240 = vsel %vm229, %v70, 0
  %v243 = vsel %vm229, %v71, 0
  %v246 = vsel %vm229, %v72, 0
  %v249 = vsel %vm229, %v73, 0
  %v252 = vsel %vm229, %v74, 0
  %254 = vmatpush.msra.mxu0 0.0
  %255 = vmatpush.msra.mxu0 0.0
  %256 = vmatpush.msra.mxu0 0.0
  %257 = vmatpush.msra.mxu0 0.0
  %258 = vmatpush.msra.mxu0 0.0
  %259 = vmatpush.msra.mxu0 0.0
  %260 = vmatpush.msra.mxu0 0.0
  %261 = vmatpush.msra.mxu0 0.0
  %262 = vmatpush.msra.mxu0 0.0
  %263 = vmatpush.msra.mxu0 0.0
  %264 = vmatpush.msra.mxu0 0.0
  %265 = vmatpush.msra.mxu0 0.0
  %266 = vmatpush.msra.mxu0 %v224
  %267 = vmatpush.msra.mxu0 %v222
  %268 = vmatpush.msra.mxu0 %v220
  %269 = vmatpush.msra.mxu0 %v218
  %270 = vmatmul.f32.gmra.mxu0 %v231
  %v271 = vpop.f32.mrf.mxu0
  %v272 = vadd.f32 0.0, %v271
  %273 = vmatmul.f32.gmra.mxu0 %v234
  %v274 = vpop.f32.mrf.mxu0
  %v275 = vadd.f32 0.0, %v274
  %276 = vmatmul.f32.gmra.mxu0 %v237
  %v277 = vpop.f32.mrf.mxu0
  %v278 = vadd.f32 0.0, %v277
  %279 = vmatmul.f32.gmra.mxu0 %v240
  %v280 = vpop.f32.mrf.mxu0
  %v281 = vadd.f32 0.0, %v280
  %282 = vmatmul.f32.gmra.mxu0 %v243
  %v283 = vpop.f32.mrf.mxu0
  %v284 = vadd.f32 0.0, %v283
  %285 = vmatmul.f32.gmra.mxu0 %v246
  %v286 = vpop.f32.mrf.mxu0
  %v287 = vadd.f32 0.0, %v286
  %288 = vmatmul.f32.gmra.mxu0 %v249
  %v289 = vpop.f32.mrf.mxu0
  %v290 = vadd.f32 0.0, %v289
  %291 = vmatmul.f32.gmra.mxu0 %v252
  %v292 = vpop.f32.mrf.mxu0
  %v293 = vadd.f32 0.0, %v292
  %294 = vdwg.mxu0
  %v296 = vsel %vm229, %v59, 0
  %v299 = vsel %vm229, %v60, 0
  %v302 = vsel %vm229, %v61, 0
  %v305 = vsel %vm229, %v62, 0
  %v308 = vsel %vm229, %v63, 0
  %v311 = vsel %vm229, %v64, 0
  %v314 = vsel %vm229, %v65, 0
  %v317 = vsel %vm229, %v66, 0
  %319 = vmatpush.msra.mxu0 0.0
  %320 = vmatpush.msra.mxu0 0.0
  %321 = vmatpush.msra.mxu0 0.0
  %322 = vmatpush.msra.mxu0 0.0
  %323 = vmatpush.msra.mxu0 0.0
  %324 = vmatpush.msra.mxu0 0.0
  %325 = vmatpush.msra.mxu0 0.0
  %326 = vmatpush.msra.mxu0 0.0
  %327 = vmatpush.msra.mxu0 0.0
  %328 = vmatpush.msra.mxu0 0.0
  %329 = vmatpush.msra.mxu0 0.0
  %330 = vmatpush.msra.mxu0 0.0
  %331 = vmatpush.msra.mxu0 %v141
  %332 = vmatpush.msra.mxu0 %v138
  %333 = vmatpush.msra.mxu0 %v135
  %334 = vmatpush.msra.mxu0 %v132
  %335 = vmatmul.f32.gmra.mxu0 %v296
  %v336 = vpop.f32.mrf.mxu0
  %v337 = vadd.f32 %v272, %v336
  %338 = vmatmul.f32.gmra.mxu0 %v299
  %v339 = vpop.f32.mrf.mxu0
  %v340 = vadd.f32 %v275, %v339
  %341 = vmatmul.f32.gmra.mxu0 %v302
  %v342 = vpop.f32.mrf.mxu0
  %v343 = vadd.f32 %v278, %v342
  %344 = vmatmul.f32.gmra.mxu0 %v305
  %v345 = vpop.f32.mrf.mxu0
  %v346 = vadd.f32 %v281, %v345
  %347 = vmatmul.f32.gmra.mxu0 %v308
  %v348 = vpop.f32.mrf.mxu0
  %v349 = vadd.f32 %v284, %v348
  %350 = vmatmul.f32.gmra.mxu0 %v311
  %v351 = vpop.f32.mrf.mxu0
  %v352 = vadd.f32 %v287, %v351
  %353 = vmatmul.f32.gmra.mxu0 %v314
  %v354 = vpop.f32.mrf.mxu0
  %v355 = vadd.f32 %v290, %v354
  %356 = vmatmul.f32.gmra.mxu0 %v317
  %v357 = vpop.f32.mrf.mxu0
  %v358 = vadd.f32 %v293, %v357
  %359 = vdwg.mxu0
  %v360 = vadd.f32 %v337, %v190
  %v361 = vadd.f32 %v340, %v193
  %v362 = vadd.f32 %v343, %v196
  %v363 = vadd.f32 %v346, %v199
  %v364 = vadd.f32 %v349, %v202
  %v365 = vadd.f32 %v352, %v205
  %v366 = vadd.f32 %v355, %v208
  %v367 = vadd.f32 %v358, %v211
  %vm368 = vcmp.gt.f32.partialorder %v360, 0.0
  %vm369 = vcmp.gt.f32.partialorder %v361, 0.0
  %vm370 = vcmp.gt.f32.partialorder %v362, 0.0
  %vm371 = vcmp.gt.f32.partialorder %v363, 0.0
  %vm372 = vcmp.gt.f32.partialorder %v364, 0.0
  %vm373 = vcmp.gt.f32.partialorder %v365, 0.0
  %vm374 = vcmp.gt.f32.partialorder %v366, 0.0
  %vm375 = vcmp.gt.f32.partialorder %v367, 0.0
  %v376 = vmul.f32 %v360, 0.2
  %v377 = vmul.f32 %v361, 0.2
  %v378 = vmul.f32 %v362, 0.2
  %v379 = vmul.f32 %v363, 0.2
  %v380 = vmul.f32 %v364, 0.2
  %v381 = vmul.f32 %v365, 0.2
  %v382 = vmul.f32 %v366, 0.2
  %v383 = vmul.f32 %v367, 0.2
  %v384 = vsel %vm368, %v360, %v376
  %v385 = vsel %vm369, %v361, %v377
  %v386 = vsel %vm370, %v362, %v378
  %v387 = vsel %vm371, %v363, %v379
  %v388 = vsel %vm372, %v364, %v380
  %v389 = vsel %vm373, %v365, %v381
  %v390 = vsel %vm374, %v366, %v382
  %v391 = vsel %vm375, %v367, %v383
  %v393 = vsel %vm101, %v384, 0
  %v396 = vsel %vm101, %v385, 0
  %v399 = vsel %vm101, %v386, 0
  %v402 = vsel %vm101, %v387, 0
  %v405 = vsel %vm101, %v388, 0
  %v408 = vsel %vm101, %v389, 0
  %v411 = vsel %vm101, %v390, 0
  %v414 = vsel %vm101, %v391, 0
  %416 = vmatpush.msra.mxu0 0.0
  %417 = vmatpush.msra.mxu0 0.0
  %418 = vmatpush.msra.mxu0 0.0
  %419 = vmatpush.msra.mxu0 0.0
  %420 = vmatpush.msra.mxu0 0.0
  %421 = vmatpush.msra.mxu0 0.0
  %422 = vmatpush.msra.mxu0 0.0
  %423 = vmatpush.msra.mxu0 0.0
  %424 = vmatpush.msra.mxu0 %v96
  %425 = vmatpush.msra.mxu0 %v95
  %426 = vmatpush.msra.mxu0 %v94
  %427 = vmatpush.msra.mxu0 %v93
  %428 = vmatpush.msra.mxu0 %v92
  %429 = vmatpush.msra.mxu0 %v91
  %430 = vmatpush.msra.mxu0 %v90
  %431 = vmatpush.msra.mxu0 %v89
  %432 = vmatmul.f32.gmra.mxu0 %v393
  %v433 = vpop.f32.mrf.mxu0
  %v434 = vadd.f32 0.0, %v433
  %435 = vmatmul.f32.gmra.mxu0 %v396
  %v436 = vpop.f32.mrf.mxu0
  %v437 = vadd.f32 0.0, %v436
  %438 = vmatmul.f32.gmra.mxu0 %v399
  %v439 = vpop.f32.mrf.mxu0
  %v440 = vadd.f32 0.0, %v439
  %441 = vmatmul.f32.gmra.mxu0 %v402
  %v442 = vpop.f32.mrf.mxu0
  %v443 = vadd.f32 0.0, %v442
  %444 = vmatmul.f32.gmra.mxu0 %v405
  %v445 = vpop.f32.mrf.mxu0
  %v446 = vadd.f32 0.0, %v445
  %447 = vmatmul.f32.gmra.mxu0 %v408
  %v448 = vpop.f32.mrf.mxu0
  %v449 = vadd.f32 0.0, %v448
  %450 = vmatmul.f32.gmra.mxu0 %v411
  %v451 = vpop.f32.mrf.mxu0
  %v452 = vadd.f32 0.0, %v451
  %453 = vmatmul.f32.gmra.mxu0 %v414
  %v454 = vpop.f32.mrf.mxu0
  %v455 = vadd.f32 0.0, %v454
  %456 = vdwg.mxu0
  %v458 = vsel %vm101, %v75, 0
  %v461 = vsel %vm101, %v76, 0
  %v464 = vsel %vm101, %v77, 0
  %v467 = vsel %vm101, %v78, 0
  %469 = vmatpush.msra.mxu0 0.0
  %470 = vmatpush.msra.mxu0 0.0
  %471 = vmatpush.msra.mxu0 0.0
  %472 = vmatpush.msra.mxu0 0.0
  %473 = vmatpush.msra.mxu0 0.0
  %474 = vmatpush.msra.mxu0 0.0
  %475 = vmatpush.msra.mxu0 0.0
  %476 = vmatpush.msra.mxu0 0.0
  %477 = vmatpush.msra.mxu0 %v66
  %478 = vmatpush.msra.mxu0 %v65
  %479 = vmatpush.msra.mxu0 %v64
  %480 = vmatpush.msra.mxu0 %v63
  %481 = vmatpush.msra.mxu0 %v62
  %482 = vmatpush.msra.mxu0 %v61
  %483 = vmatpush.msra.mxu0 %v60
  %484 = vmatpush.msra.mxu0 %v59
  %485 = vmatmul.f32.gmra.mxu0 %v458
  %v486 = vpop.f32.mrf.mxu0
  %v487 = vadd.f32 0.0, %v486
  %488 = vmatmul.f32.gmra.mxu0 %v461
  %v489 = vpop.f32.mrf.mxu0
  %v490 = vadd.f32 0.0, %v489
  %491 = vmatmul.f32.gmra.mxu0 %v464
  %v492 = vpop.f32.mrf.mxu0
  %v493 = vadd.f32 0.0, %v492
  %494 = vmatmul.f32.gmra.mxu0 %v467
  %v495 = vpop.f32.mrf.mxu0
  %v496 = vadd.f32 0.0, %v495
  %497 = vdwg.mxu0
  %vm498 = vcmp.gt.f32.partialorder %v487, 0.5
  %vm499 = vcmp.gt.f32.partialorder %v490, 0.5
  %vm500 = vcmp.gt.f32.partialorder %v493, 0.5
  %vm501 = vcmp.gt.f32.partialorder %v496, 0.5
  %503 = vset.pattern.permute.xlu0 0
  %504 = vperm.xlu0 %503, %v434
  %v505 = vpop.permute.xlu0 %504
  %508 = vset.pattern.permute.xlu0 0
  %509 = vperm.xlu0 %508, %v437
  %v510 = vpop.permute.xlu0 %509
  %513 = vset.pattern.permute.xlu0 0
  %514 = vperm.xlu0 %513, %v440
  %v515 = vpop.permute.xlu0 %514
  %518 = vset.pattern.permute.xlu0 0
  %519 = vperm.xlu0 %518, %v443
  %v520 = vpop.permute.xlu0 %519
  %523 = vset.pattern.permute.xlu0 0
  %524 = vperm.xlu0 %523, %v446
  %v525 = vpop.permute.xlu0 %524
  %528 = vset.pattern.permute.xlu0 0
  %529 = vperm.xlu0 %528, %v449
  %v530 = vpop.permute.xlu0 %529
  %533 = vset.pattern.permute.xlu0 0
  %534 = vperm.xlu0 %533, %v452
  %v535 = vpop.permute.xlu0 %534
  %538 = vset.pattern.permute.xlu0 0
  %539 = vperm.xlu0 %538, %v455
  %v540 = vpop.permute.xlu0 %539
  %v542 = vmul.f32 %v505, %v59
  %v543 = vmul.f32 %v510, %v60
  %v544 = vmul.f32 %v515, %v61
  %v545 = vmul.f32 %v520, %v62
  %v546 = vmul.f32 %v525, %v63
  %v547 = vmul.f32 %v530, %v64
  %v548 = vmul.f32 %v535, %v65
  %v549 = vmul.f32 %v540, %v66
  %550 = vmatpush.msra.mxu0 0.0
  %551 = vmatpush.msra.mxu0 0.0
  %552 = vmatpush.msra.mxu0 0.0
  %553 = vmatpush.msra.mxu0 0.0
  %554 = vmatpush.msra.mxu0 0.0
  %555 = vmatpush.msra.mxu0 0.0
  %556 = vmatpush.msra.mxu0 0.0
  %557 = vmatpush.msra.mxu0 0.0
  %558 = vmatpush.msra.mxu0 %v549
  %559 = vmatpush.msra.mxu0 %v548
  %560 = vmatpush.msra.mxu0 %v547
  %561 = vmatpush.msra.mxu0 %v546
  %562 = vmatpush.msra.mxu0 %v545
  %563 = vmatpush.msra.mxu0 %v544
  %564 = vmatpush.msra.mxu0 %v543
  %565 = vmatpush.msra.mxu0 %v542
  %566 = vmatmul.f32.gmra.mxu0 %v458
  %v567 = vpop.f32.mrf.mxu0
  %v568 = vadd.f32 0.0, %v567
  %569 = vmatmul.f32.gmra.mxu0 %v461
  %v570 = vpop.f32.mrf.mxu0
  %v571 = vadd.f32 0.0, %v570
  %572 = vmatmul.f32.gmra.mxu0 %v464
  %v573 = vpop.f32.mrf.mxu0
  %v574 = vadd.f32 0.0, %v573
  %575 = vmatmul.f32.gmra.mxu0 %v467
  %v576 = vpop.f32.mrf.mxu0
  %v577 = vadd.f32 0.0, %v576
  %578 = vdwg.mxu0
  %v579 = vsel %vm498, %v568, -1e+30
  %v580 = vsel %vm499, %v571, -1e+30
  %v581 = vsel %vm500, %v574, -1e+30
  %v582 = vsel %vm501, %v577, -1e+30
  %v583 = vsel %vm229, %v579, -inf
  %584 = vmax.xlane.f32.xlu0 %v583
  %v585 = vpop.xlane.xlu0 %584
  %v586 = vsel %vm229, %v580, -inf
  %587 = vmax.xlane.f32.xlu0 %v586
  %v588 = vpop.xlane.xlu0 %587
  %v589 = vsel %vm229, %v581, -inf
  %590 = vmax.xlane.f32.xlu0 %v589
  %v591 = vpop.xlane.xlu0 %590
  %v592 = vsel %vm229, %v582, -inf
  %593 = vmax.xlane.f32.xlu0 %v592
  %v594 = vpop.xlane.xlu0 %593
  %v595 = vsub.f32 %v579, %v585
  %v596 = vsub.f32 %v580, %v588
  %v597 = vsub.f32 %v581, %v591
  %v598 = vsub.f32 %v582, %v594
  %v599 = vmul.f32 %v595, 1.442695
  %v600 = vpow.pop %v599
  %v601 = vmul.f32 %v596, 1.442695
  %v602 = vpow.pop %v601
  %v603 = vmul.f32 %v597, 1.442695
  %v604 = vpow.pop %v603
  %v605 = vmul.f32 %v598, 1.442695
  %v606 = vpow.pop %v605
  %v607 = vsel %vm498, %v600, 0.0
  %v608 = vsel %vm499, %v602, 0.0
  %v609 = vsel %vm500, %v604, 0.0
  %v610 = vsel %vm501, %v606, 0.0
  %v611 = vsel %vm229, %v607, 0.0
  %612 = vadd.xlane.f32.xlu0 %v611
  %v613 = vpop.xlane.xlu0 %612
  %v614 = vsel %vm229, %v608, 0.0
  %615 = vadd.xlane.f32.xlu0 %v614
  %v616 = vpop.xlane.xlu0 %615
  %v617 = vsel %vm229, %v609, 0.0
  %618 = vadd.xlane.f32.xlu0 %v617
  %v619 = vpop.xlane.xlu0 %618
  %v620 = vsel %vm229, %v610, 0.0
  %621 = vadd.xlane.f32.xlu0 %v620
  %v622 = vpop.xlane.xlu0 %621
  %v623 = vadd.f32 %v613, 1e-16
  %v624 = vadd.f32 %v616, 1e-16
  %v625 = vadd.f32 %v619, 1e-16
  %v626 = vadd.f32 %v622, 1e-16
  %v627 = vrcp.pop %v623
  %v628 = vrcp.pop %v624
  %v629 = vrcp.pop %v625
  %v630 = vrcp.pop %v626
  %v631 = vmul.f32 %v607, %v627
  %v632 = vmul.f32 %v608, %v628
  %v633 = vmul.f32 %v609, %v629
  %v634 = vmul.f32 %v610, %v630
  %v636 = vsel %vm229, %v631, 0
  %v639 = vsel %vm229, %v632, 0
  %v642 = vsel %vm229, %v633, 0
  %v645 = vsel %vm229, %v634, 0
  %647 = vmatpush.msra.mxu0 0.0
  %648 = vmatpush.msra.mxu0 0.0
  %649 = vmatpush.msra.mxu0 0.0
  %650 = vmatpush.msra.mxu0 0.0
  %651 = vmatpush.msra.mxu0 0.0
  %652 = vmatpush.msra.mxu0 0.0
  %653 = vmatpush.msra.mxu0 0.0
  %654 = vmatpush.msra.mxu0 0.0
  %655 = vmatpush.msra.mxu0 0.0
  %656 = vmatpush.msra.mxu0 0.0
  %657 = vmatpush.msra.mxu0 0.0
  %658 = vmatpush.msra.mxu0 0.0
  %659 = vmatpush.msra.mxu0 %v141
  %660 = vmatpush.msra.mxu0 %v138
  %661 = vmatpush.msra.mxu0 %v135
  %662 = vmatpush.msra.mxu0 %v132
  %663 = vmatmul.f32.gmra.mxu0 %v636
  %v664 = vpop.f32.mrf.mxu0
  %v665 = vadd.f32 0.0, %v664
  %666 = vmatmul.f32.gmra.mxu0 %v639
  %v667 = vpop.f32.mrf.mxu0
  %v668 = vadd.f32 0.0, %v667
  %669 = vmatmul.f32.gmra.mxu0 %v642
  %v670 = vpop.f32.mrf.mxu0
  %v671 = vadd.f32 0.0, %v670
  %672 = vmatmul.f32.gmra.mxu0 %v645
  %v673 = vpop.f32.mrf.mxu0
  %v674 = vadd.f32 0.0, %v673
  %675 = vdwg.mxu0
  %676 = vset.pattern.permute.xlu0 1
  %677 = vperm.xlu0 %676, %v434
  %v678 = vpop.permute.xlu0 %677
  %680 = vset.pattern.permute.xlu0 1
  %681 = vperm.xlu0 %680, %v437
  %v682 = vpop.permute.xlu0 %681
  %684 = vset.pattern.permute.xlu0 1
  %685 = vperm.xlu0 %684, %v440
  %v686 = vpop.permute.xlu0 %685
  %688 = vset.pattern.permute.xlu0 1
  %689 = vperm.xlu0 %688, %v443
  %v690 = vpop.permute.xlu0 %689
  %692 = vset.pattern.permute.xlu0 1
  %693 = vperm.xlu0 %692, %v446
  %v694 = vpop.permute.xlu0 %693
  %696 = vset.pattern.permute.xlu0 1
  %697 = vperm.xlu0 %696, %v449
  %v698 = vpop.permute.xlu0 %697
  %700 = vset.pattern.permute.xlu0 1
  %701 = vperm.xlu0 %700, %v452
  %v702 = vpop.permute.xlu0 %701
  %704 = vset.pattern.permute.xlu0 1
  %705 = vperm.xlu0 %704, %v455
  %v706 = vpop.permute.xlu0 %705
  %v708 = vmul.f32 %v678, %v59
  %v709 = vmul.f32 %v682, %v60
  %v710 = vmul.f32 %v686, %v61
  %v711 = vmul.f32 %v690, %v62
  %v712 = vmul.f32 %v694, %v63
  %v713 = vmul.f32 %v698, %v64
  %v714 = vmul.f32 %v702, %v65
  %v715 = vmul.f32 %v706, %v66
  %716 = vmatpush.msra.mxu0 0.0
  %717 = vmatpush.msra.mxu0 0.0
  %718 = vmatpush.msra.mxu0 0.0
  %719 = vmatpush.msra.mxu0 0.0
  %720 = vmatpush.msra.mxu0 0.0
  %721 = vmatpush.msra.mxu0 0.0
  %722 = vmatpush.msra.mxu0 0.0
  %723 = vmatpush.msra.mxu0 0.0
  %724 = vmatpush.msra.mxu0 %v715
  %725 = vmatpush.msra.mxu0 %v714
  %726 = vmatpush.msra.mxu0 %v713
  %727 = vmatpush.msra.mxu0 %v712
  %728 = vmatpush.msra.mxu0 %v711
  %729 = vmatpush.msra.mxu0 %v710
  %730 = vmatpush.msra.mxu0 %v709
  %731 = vmatpush.msra.mxu0 %v708
  %732 = vmatmul.f32.gmra.mxu0 %v458
  %v733 = vpop.f32.mrf.mxu0
  %v734 = vadd.f32 0.0, %v733
  %735 = vmatmul.f32.gmra.mxu0 %v461
  %v736 = vpop.f32.mrf.mxu0
  %v737 = vadd.f32 0.0, %v736
  %738 = vmatmul.f32.gmra.mxu0 %v464
  %v739 = vpop.f32.mrf.mxu0
  %v740 = vadd.f32 0.0, %v739
  %741 = vmatmul.f32.gmra.mxu0 %v467
  %v742 = vpop.f32.mrf.mxu0
  %v743 = vadd.f32 0.0, %v742
  %744 = vdwg.mxu0
  %v745 = vsel %vm498, %v734, -1e+30
  %v746 = vsel %vm499, %v737, -1e+30
  %v747 = vsel %vm500, %v740, -1e+30
  %v748 = vsel %vm501, %v743, -1e+30
  %v749 = vsel %vm229, %v745, -inf
  %750 = vmax.xlane.f32.xlu0 %v749
  %v751 = vpop.xlane.xlu0 %750
  %v752 = vsel %vm229, %v746, -inf
  %753 = vmax.xlane.f32.xlu0 %v752
  %v754 = vpop.xlane.xlu0 %753
  %v755 = vsel %vm229, %v747, -inf
  %756 = vmax.xlane.f32.xlu0 %v755
  %v757 = vpop.xlane.xlu0 %756
  %v758 = vsel %vm229, %v748, -inf
  %759 = vmax.xlane.f32.xlu0 %v758
  %v760 = vpop.xlane.xlu0 %759
  %v761 = vsub.f32 %v745, %v751
  %v762 = vsub.f32 %v746, %v754
  %v763 = vsub.f32 %v747, %v757
  %v764 = vsub.f32 %v748, %v760
  %v765 = vmul.f32 %v761, 1.442695
  %v766 = vpow.pop %v765
  %v767 = vmul.f32 %v762, 1.442695
  %v768 = vpow.pop %v767
  %v769 = vmul.f32 %v763, 1.442695
  %v770 = vpow.pop %v769
  %v771 = vmul.f32 %v764, 1.442695
  %v772 = vpow.pop %v771
  %v773 = vsel %vm498, %v766, 0.0
  %v774 = vsel %vm499, %v768, 0.0
  %v775 = vsel %vm500, %v770, 0.0
  %v776 = vsel %vm501, %v772, 0.0
  %v777 = vsel %vm229, %v773, 0.0
  %778 = vadd.xlane.f32.xlu0 %v777
  %v779 = vpop.xlane.xlu0 %778
  %v780 = vsel %vm229, %v774, 0.0
  %781 = vadd.xlane.f32.xlu0 %v780
  %v782 = vpop.xlane.xlu0 %781
  %v783 = vsel %vm229, %v775, 0.0
  %784 = vadd.xlane.f32.xlu0 %v783
  %v785 = vpop.xlane.xlu0 %784
  %v786 = vsel %vm229, %v776, 0.0
  %787 = vadd.xlane.f32.xlu0 %v786
  %v788 = vpop.xlane.xlu0 %787
  %v789 = vadd.f32 %v779, 1e-16
  %v790 = vadd.f32 %v782, 1e-16
  %v791 = vadd.f32 %v785, 1e-16
  %v792 = vadd.f32 %v788, 1e-16
  %v793 = vrcp.pop %v789
  %v794 = vrcp.pop %v790
  %v795 = vrcp.pop %v791
  %v796 = vrcp.pop %v792
  %v797 = vmul.f32 %v773, %v793
  %v798 = vmul.f32 %v774, %v794
  %v799 = vmul.f32 %v775, %v795
  %v800 = vmul.f32 %v776, %v796
  %801 = vrot.lane.b32.xlu0 %v132, 96
  %v802 = vpop.permute.xlu0 %801
  %803 = vrot.lane.b32.xlu0 %v135, 96
  %v804 = vpop.permute.xlu0 %803
  %805 = vrot.lane.b32.xlu0 %v138, 96
  %v806 = vpop.permute.xlu0 %805
  %807 = vrot.lane.b32.xlu0 %v141, 96
  %v808 = vpop.permute.xlu0 %807
  %v814 = vsel %vm229, %v797, 0
  %v817 = vsel %vm229, %v798, 0
  %v820 = vsel %vm229, %v799, 0
  %v823 = vsel %vm229, %v800, 0
  %825 = vmatpush.msra.mxu0 0.0
  %826 = vmatpush.msra.mxu0 0.0
  %827 = vmatpush.msra.mxu0 0.0
  %828 = vmatpush.msra.mxu0 0.0
  %829 = vmatpush.msra.mxu0 0.0
  %830 = vmatpush.msra.mxu0 0.0
  %831 = vmatpush.msra.mxu0 0.0
  %832 = vmatpush.msra.mxu0 0.0
  %833 = vmatpush.msra.mxu0 0.0
  %834 = vmatpush.msra.mxu0 0.0
  %835 = vmatpush.msra.mxu0 0.0
  %836 = vmatpush.msra.mxu0 0.0
  %837 = vmatpush.msra.mxu0 %v808
  %838 = vmatpush.msra.mxu0 %v806
  %839 = vmatpush.msra.mxu0 %v804
  %840 = vmatpush.msra.mxu0 %v802
  %841 = vmatmul.f32.gmra.mxu0 %v814
  %v842 = vpop.f32.mrf.mxu0
  %v843 = vadd.f32 0.0, %v842
  %844 = vmatmul.f32.gmra.mxu0 %v817
  %v845 = vpop.f32.mrf.mxu0
  %v846 = vadd.f32 0.0, %v845
  %847 = vmatmul.f32.gmra.mxu0 %v820
  %v848 = vpop.f32.mrf.mxu0
  %v849 = vadd.f32 0.0, %v848
  %850 = vmatmul.f32.gmra.mxu0 %v823
  %v851 = vpop.f32.mrf.mxu0
  %v852 = vadd.f32 0.0, %v851
  %853 = vdwg.mxu0
  %858 = vrot.lane.b32.xlu0 %v843, 32
  %v859 = vpop.permute.xlu0 %858
  %860 = vrot.lane.b32.xlu0 %v846, 32
  %v861 = vpop.permute.xlu0 %860
  %862 = vrot.lane.b32.xlu0 %v849, 32
  %v863 = vpop.permute.xlu0 %862
  %864 = vrot.lane.b32.xlu0 %v852, 32
  %v865 = vpop.permute.xlu0 %864
  %v870 = vsel %vm229, %v665, %v859
  %v871 = vsel %vm229, %v668, %v861
  %v872 = vsel %vm229, %v671, %v863
  %v873 = vsel %vm229, %v674, %v865
  %v875 = vperm.slane %v97, 0
  %v877 = vadd.f32 %v870, %v875
  %v878 = vadd.f32 %v871, %v875
  %v879 = vadd.f32 %v872, %v875
  %v880 = vadd.f32 %v873, %v875
  %v881 = vld [vmem:[%s10] sm:$0x1]
  %v882 = vld [vmem:[%s11] sm:$0x1]
  %v883 = vld [vmem:[%s12] sm:$0x1]
  %v884 = vld [vmem:[%s13] sm:$0x1]
  %v886 = vperm.slane %v883, 0
  %v888 = vsub.f32 %v877, %v886
  %v889 = vsub.f32 %v878, %v886
  %v890 = vsub.f32 %v879, %v886
  %v891 = vsub.f32 %v880, %v886
  %v892 = vadd.f32 %v884, 1e-05
  %v893 = vrsqrt.pop %v892
  %v894 = vmul.f32 %v893, %v892
  %v895 = vmul.f32 %v894, %v893
  %v896 = vmul.f32 0.5, %v895
  %v897 = vsub.f32 1.5, %v896
  %v898 = vmul.f32 %v893, %v897
  %vm899 = vweird.f32 %v892
  %vm900 = vweird.f32 %v893
  %vm901 = vmor %vm899, %vm900
  %v902 = vsel %vm901, %v893, %v898
  %v904 = vperm.slane %v902, 0
  %v906 = vmul.f32 %v888, %v904
  %v907 = vmul.f32 %v889, %v904
  %v908 = vmul.f32 %v890, %v904
  %v909 = vmul.f32 %v891, %v904
  %v911 = vperm.slane %v881, 0
  %v913 = vmul.f32 %v906, %v911
  %v914 = vmul.f32 %v907, %v911
  %v915 = vmul.f32 %v908, %v911
  %v916 = vmul.f32 %v909, %v911
  %v918 = vperm.slane %v882, 0
  %v920 = vadd.f32 %v913, %v918
  %v921 = vadd.f32 %v914, %v918
  %v922 = vadd.f32 %v915, %v918
  %v923 = vadd.f32 %v916, %v918
  %v924 = vxor.u32 %v920, 2147483648
  %v925 = vxor.u32 %v921, 2147483648
  %v926 = vxor.u32 %v922, 2147483648
  %v927 = vxor.u32 %v923, 2147483648
  %v928 = vmul.f32 %v924, 1.442695
  %v929 = vpow.pop %v928
  %v930 = vmul.f32 %v925, 1.442695
  %v931 = vpow.pop %v930
  %v932 = vmul.f32 %v926, 1.442695
  %v933 = vpow.pop %v932
  %v934 = vmul.f32 %v927, 1.442695
  %v935 = vpow.pop %v934
  %v936 = vadd.f32 %v929, 1.0
  %v937 = vadd.f32 %v931, 1.0
  %v938 = vadd.f32 %v933, 1.0
  %v939 = vadd.f32 %v935, 1.0
  %v940 = vrcp.pop %v936
  %v941 = vmul.f32 %v936, %v940
  %v942 = vsub.f32 1.0, %v941
  %v943 = vmul.f32 %v940, %v942
  %v944 = vadd.f32 %v940, %v943
  %vm945 = vweird.f32 %v936
  %vm946 = vweird.f32 %v940
  %vm947 = vmor %vm945, %vm946
  %v948 = vsel %vm947, %v940, %v944
  %v949 = vand.u32 2147483647, %v936
  %vm950 = vcmp.eq.f32.partialorder %v949, 8.507059e+37
  %v951 = vand.u32 %v936, 2147483648
  %v952 = vor.u32 1.1754944e-38, %v951
  %v953 = vsel %vm950, %v952, %v948
  %v954 = vmul.f32 1.0, %v953
  %v955 = vrcp.pop %v937
  %v956 = vmul.f32 %v937, %v955
  %v957 = vsub.f32 1.0, %v956
  %v958 = vmul.f32 %v955, %v957
  %v959 = vadd.f32 %v955, %v958
  %vm960 = vweird.f32 %v937
  %vm961 = vweird.f32 %v955
  %vm962 = vmor %vm960, %vm961
  %v963 = vsel %vm962, %v955, %v959
  %v964 = vand.u32 2147483647, %v937
  %vm965 = vcmp.eq.f32.partialorder %v964, 8.507059e+37
  %v966 = vand.u32 %v937, 2147483648
  %v967 = vor.u32 1.1754944e-38, %v966
  %v968 = vsel %vm965, %v967, %v963
  %v969 = vmul.f32 1.0, %v968
  %v970 = vrcp.pop %v938
  %v971 = vmul.f32 %v938, %v970
  %v972 = vsub.f32 1.0, %v971
  %v973 = vmul.f32 %v970, %v972
  %v974 = vadd.f32 %v970, %v973
  %vm975 = vweird.f32 %v938
  %vm976 = vweird.f32 %v970
  %vm977 = vmor %vm975, %vm976
  %v978 = vsel %vm977, %v970, %v974
  %v979 = vand.u32 2147483647, %v938
  %vm980 = vcmp.eq.f32.partialorder %v979, 8.507059e+37
  %v981 = vand.u32 %v938, 2147483648
  %v982 = vor.u32 1.1754944e-38, %v981
  %v983 = vsel %vm980, %v982, %v978
  %v984 = vmul.f32 1.0, %v983
  %v985 = vrcp.pop %v939
  %v986 = vmul.f32 %v939, %v985
  %v987 = vsub.f32 1.0, %v986
  %v988 = vmul.f32 %v985, %v987
  %v989 = vadd.f32 %v985, %v988
  %vm990 = vweird.f32 %v939
  %vm991 = vweird.f32 %v985
  %vm992 = vmor %vm990, %vm991
  %v993 = vsel %vm992, %v985, %v989
  %v994 = vand.u32 2147483647, %v939
  %vm995 = vcmp.eq.f32.partialorder %v994, 8.507059e+37
  %v996 = vand.u32 %v939, 2147483648
  %v997 = vor.u32 1.1754944e-38, %v996
  %v998 = vsel %vm995, %v997, %v993
  %v999 = vmul.f32 1.0, %v998
  %v1000 = vmul.f32 %v920, %v954
  %v1001 = vmul.f32 %v921, %v969
  %v1002 = vmul.f32 %v922, %v984
  %v1003 = vmul.f32 %v923, %v999
  %1004 = vst.msk [vmem:[%s14] sm:$0xff] %vm101, %v1000
  %1005 = vst.msk [vmem:[%s14 + $0x8] sm:$0xff] %vm101, %v1001
  %1006 = vst.msk [vmem:[%s14 + $0x10] sm:$0xff] %vm101, %v1002
  %1007 = vst.msk [vmem:[%s14 + $0x18] sm:$0xff] %vm101, %v1003
  // Predicated region
  $region58: #{gcn_forward.4} parent=0 // pred_check
    _
  $region59: #{gcn_forward.4} parent=0 // pred_check_branch
    %1009 = sbr.rel (0) target = $region61
  $region60: #{gcn_forward.4} parent=0 // pred_region
    _
  $region61: #{gcn_forward.4} parent=0 // pred_fallthru
    _
  // Predicated region
  $region62: #{gcn_forward.4} parent=0 // pred_check
    _
  $region63: #{gcn_forward.4} parent=0 // pred_check_branch
    %1011 = sbr.rel (0) target = $region65
  $region64: #{gcn_forward.4} parent=0 // pred_region
    _
  $region65: #{gcn_forward.4} parent=0 // pred_fallthru
    _

// kernel: gcn_forward.5
$region0: #{gcn_forward.5}
  #allocation0 [shape = 'u32[]', space=smem, size = 0x4, offset = 0x4, fixed_abs, tag = 'smem constant byte address 0x4 - core index']
  #allocation1 [shape = 'u32[72,128]{1,0:T(1,128)}', space=vmem, size = 0x9000, scoped, tag = 'internal scratch']
  %s0 = inlined_call_operand.vmem [shape: f32[32,64], index: 0, kind: input, shape index: {}]
  %s1 = inlined_call_operand.vmem [shape: f32[64,4], index: 1, kind: input, shape index: {}]
  %s2 = inlined_call_operand.vmem [shape: f32[64,32], index: 2, kind: input, shape index: {}]
  %s3 = inlined_call_operand.vmem [shape: f32[64,32], index: 3, kind: input, shape index: {}]
  %s4 = inlined_call_operand.vmem [shape: f32[32,64], index: 4, kind: input, shape index: {}]
  %s5 = inlined_call_operand.vmem [shape: f32[64,128], index: 5, kind: input, shape index: {}]
  %s6 = inlined_call_operand.vmem [shape: f32[1,128], index: 6, kind: input, shape index: {}]
  %s7 = inlined_call_operand.vmem [shape: f32[4,64], index: 7, kind: input, shape index: {}]
  %s8 = inlined_call_operand.vmem [shape: f32[64,2], index: 8, kind: input, shape index: {}]
  %s9 = inlined_call_operand.vmem [shape: f32[1,64], index: 9, kind: input, shape index: {}]
  %s10 = inlined_call_operand.vmem [shape: f32[64,8], index: 10, kind: input, shape index: {}]
  %s11 = inlined_call_operand.vmem [shape: f32[1,8], index: 11, kind: input, shape index: {}]
  %s12 = inlined_call_operand.hbm [shape: f32[32,64], index: 12, kind: output, shape index: {0}]
  %s13 = inlined_call_operand.vmem [shape: f32[32,8], index: 13, kind: output, shape index: {1}]
  %14 = xla_tuple %s12, %s13
  %s15 = sld [smem:[#allocation0]]
  $region66: #{gcn_forward.5} parent=0
    _
  %s17 = ssub.s32 1, %s15
  %s18 = scalar_select 0, %s17, %s15
  $region1: #{gcn_forward.5} parent=0
    #allocation2 [shape = 'u8[16384]{0}', space=vmem, size = 0x4000, scoped, tag = 'output window, operand 0, single buffered']
    #allocation3 [shape = 's32[1]{0}', space=sflag, size = 0x4, scoped, tag = 'scoped memory for gcn_forward.5']
    %19 = vsyncpa [#allocation3], 0
    // Predicated region
    $region2: #{gcn_forward.5} parent=1 // pred_check
      _
    $region3: #{gcn_forward.5} parent=1 // pred_check_branch
      %21 = sbr.rel (0) target = $region5
    $region4: #{gcn_forward.5} parent=1 // pred_region
      _
    $region5: #{gcn_forward.5} parent=1 // pred_fallthru
      _
    // Predicated region
    $region6: #{gcn_forward.5} parent=1 // pred_check
      _
    $region7: #{gcn_forward.5} parent=1 // pred_check_branch
      %23 = sbr.rel (0) target = $region9
    $region8: #{gcn_forward.5} parent=1 // pred_region
      _
    $region9: #{gcn_forward.5} parent=1 // pred_fallthru
      _
    // Predicated region
    $region10: #{gcn_forward.5} parent=1 // pred_check
      _
    $region11: #{gcn_forward.5} parent=1 // pred_check_branch
      %25 = sbr.rel (0) target = $region13
    $region12: #{gcn_forward.5} parent=1 // pred_region
      _
    $region13: #{gcn_forward.5} parent=1 // pred_fallthru
      _
    // Predicated region
    $region14: #{gcn_forward.5} parent=1 // pred_check
      _
    $region15: #{gcn_forward.5} parent=1 // pred_check_branch
      %27 = sbr.rel (0) target = $region17
    $region16: #{gcn_forward.5} parent=1 // pred_region
      _
    $region17: #{gcn_forward.5} parent=1 // pred_fallthru
      _
    // Predicated region
    $region18: #{gcn_forward.5} parent=1 // pred_check
      _
    $region19: #{gcn_forward.5} parent=1 // pred_check_branch
      %29 = sbr.rel (0) target = $region21
    $region20: #{gcn_forward.5} parent=1 // pred_region
      _
    $region21: #{gcn_forward.5} parent=1 // pred_fallthru
      _
    // Predicated region
    $region22: #{gcn_forward.5} parent=1 // pred_check
      _
    $region23: #{gcn_forward.5} parent=1 // pred_check_branch
      %31 = sbr.rel (0) target = $region25
    $region24: #{gcn_forward.5} parent=1 // pred_region
      _
    $region25: #{gcn_forward.5} parent=1 // pred_fallthru
      _
    // Predicated region
    $region26: #{gcn_forward.5} parent=1 // pred_check
      _
    $region27: #{gcn_forward.5} parent=1 // pred_check_branch
      %33 = sbr.rel (0) target = $region29
    $region28: #{gcn_forward.5} parent=1 // pred_region
      _
    $region29: #{gcn_forward.5} parent=1 // pred_fallthru
      _
    // Predicated region
    $region30: #{gcn_forward.5} parent=1 // pred_check
      _
    $region31: #{gcn_forward.5} parent=1 // pred_check_branch
      %35 = sbr.rel (0) target = $region33
    $region32: #{gcn_forward.5} parent=1 // pred_region
      _
    $region33: #{gcn_forward.5} parent=1 // pred_fallthru
      _
    // Predicated region
    $region34: #{gcn_forward.5} parent=1 // pred_check
      _
    $region35: #{gcn_forward.5} parent=1 // pred_check_branch
      %37 = sbr.rel (0) target = $region37
    $region36: #{gcn_forward.5} parent=1 // pred_region
      _
    $region37: #{gcn_forward.5} parent=1 // pred_fallthru
      _
    // Predicated region
    $region38: #{gcn_forward.5} parent=1 // pred_check
      _
    $region39: #{gcn_forward.5} parent=1 // pred_check_branch
      %39 = sbr.rel (0) target = $region41
    $region40: #{gcn_forward.5} parent=1 // pred_region
      _
    $region41: #{gcn_forward.5} parent=1 // pred_fallthru
      _
    // Predicated region
    $region42: #{gcn_forward.5} parent=1 // pred_check
      _
    $region43: #{gcn_forward.5} parent=1 // pred_check_branch
      %41 = sbr.rel (0) target = $region45
    $region44: #{gcn_forward.5} parent=1 // pred_region
      _
    $region45: #{gcn_forward.5} parent=1 // pred_fallthru
      _
    // Predicated region
    $region46: #{gcn_forward.5} parent=1 // pred_check
      _
    $region47: #{gcn_forward.5} parent=1 // pred_check_branch
      %43 = sbr.rel (0) target = $region49
    $region48: #{gcn_forward.5} parent=1 // pred_region
      _
    $region49: #{gcn_forward.5} parent=1 // pred_fallthru
      _
    %v44 = vld [vmem:[%s0] sm:$0xff]
    %v45 = vld [vmem:[%s0 + $0x8] sm:$0xff]
    %v46 = vld [vmem:[%s0 + $0x10] sm:$0xff]
    %v47 = vld [vmem:[%s0 + $0x18] sm:$0xff]
    %v48 = vld [vmem:[%s1] sm:$0xff]
    %v49 = vld [vmem:[%s1 + $0x8] sm:$0xff]
    %v50 = vld [vmem:[%s1 + $0x10] sm:$0xff]
    %v51 = vld [vmem:[%s1 + $0x18] sm:$0xff]
    %v52 = vld [vmem:[%s1 + $0x20] sm:$0xff]
    %v53 = vld [vmem:[%s1 + $0x28] sm:$0xff]
    %v54 = vld [vmem:[%s1 + $0x30] sm:$0xff]
    %v55 = vld [vmem:[%s1 + $0x38] sm:$0xff]
    %v56 = vld [vmem:[%s2] sm:$0xff]
    %v57 = vld [vmem:[%s2 + $0x8] sm:$0xff]
    %v58 = vld [vmem:[%s2 + $0x10] sm:$0xff]
    %v59 = vld [vmem:[%s2 + $0x18] sm:$0xff]
    %v60 = vld [vmem:[%s2 + $0x20] sm:$0xff]
    %v61 = vld [vmem:[%s2 + $0x28] sm:$0xff]
    %v62 = vld [vmem:[%s2 + $0x30] sm:$0xff]
    %v63 = vld [vmem:[%s2 + $0x38] sm:$0xff]
    %v64 = vld [vmem:[%s3] sm:$0xff]
    %v65 = vld [vmem:[%s3 + $0x8] sm:$0xff]
    %v66 = vld [vmem:[%s3 + $0x10] sm:$0xff]
    %v67 = vld [vmem:[%s3 + $0x18] sm:$0xff]
    %v68 = vld [vmem:[%s3 + $0x20] sm:$0xff]
    %v69 = vld [vmem:[%s3 + $0x28] sm:$0xff]
    %v70 = vld [vmem:[%s3 + $0x30] sm:$0xff]
    %v71 = vld [vmem:[%s3 + $0x38] sm:$0xff]
    %v72 = vld [vmem:[%s4] sm:$0xff]
    %v73 = vld [vmem:[%s4 + $0x8] sm:$0xff]
    %v74 = vld [vmem:[%s4 + $0x10] sm:$0xff]
    %v75 = vld [vmem:[%s4 + $0x18] sm:$0xff]
    %v76 = vld [vmem:[%s5] sm:$0xff]
    %v77 = vld [vmem:[%s5 + $0x8] sm:$0xff]
    %v78 = vld [vmem:[%s5 + $0x10] sm:$0xff]
    %v79 = vld [vmem:[%s5 + $0x18] sm:$0xff]
    %v80 = vld [vmem:[%s5 + $0x20] sm:$0xff]
    %v81 = vld [vmem:[%s5 + $0x28] sm:$0xff]
    %v82 = vld [vmem:[%s5 + $0x30] sm:$0xff]
    %v83 = vld [vmem:[%s5 + $0x38] sm:$0xff]
    %v84 = vld [vmem:[%s6] sm:$0x1]
    %v85 = vld [vmem:[%s7] sm:$0xf]
    %v86 = vld [vmem:[%s8] sm:$0xff]
    %v87 = vld [vmem:[%s8 + $0x8] sm:$0xff]
    %v88 = vld [vmem:[%s8 + $0x10] sm:$0xff]
    %v89 = vld [vmem:[%s8 + $0x18] sm:$0xff]
    %v90 = vld [vmem:[%s8 + $0x20] sm:$0xff]
    %v91 = vld [vmem:[%s8 + $0x28] sm:$0xff]
    %v92 = vld [vmem:[%s8 + $0x30] sm:$0xff]
    %v93 = vld [vmem:[%s8 + $0x38] sm:$0xff]
    %v94 = vld [vmem:[%s9] sm:$0x1]
    %v96 = vperm.slane %v84, 0
    %vm98 = vcmask 523264
    %v100 = vsel %vm98, %v44, 0
    %v103 = vsel %vm98, %v45, 0
    %v106 = vsel %vm98, %v46, 0
    %v109 = vsel %vm98, %v47, 0
    %111 = vmatpush.msra.mxu0 0.0
    %112 = vmatpush.msra.mxu0 0.0
    %113 = vmatpush.msra.mxu0 0.0
    %114 = vmatpush.msra.mxu0 0.0
    %115 = vmatpush.msra.mxu0 0.0
    %116 = vmatpush.msra.mxu0 0.0
    %117 = vmatpush.msra.mxu0 0.0
    %118 = vmatpush.msra.mxu0 0.0
    %119 = vmatpush.msra.mxu0 %v83
    %120 = vmatpush.msra.mxu0 %v82
    %121 = vmatpush.msra.mxu0 %v81
    %122 = vmatpush.msra.mxu0 %v80
    %123 = vmatpush.msra.mxu0 %v79
    %124 = vmatpush.msra.mxu0 %v78
    %125 = vmatpush.msra.mxu0 %v77
    %126 = vmatpush.msra.mxu0 %v76
    %127 = vmatmul.f32.gmra.mxu0 %v100
    %v128 = vpop.f32.mrf.mxu0
    %v129 = vadd.f32 %v96, %v128
    %130 = vmatmul.f32.gmra.mxu0 %v103
    %v131 = vpop.f32.mrf.mxu0
    %v132 = vadd.f32 %v96, %v131
    %133 = vmatmul.f32.gmra.mxu0 %v106
    %v134 = vpop.f32.mrf.mxu0
    %v135 = vadd.f32 %v96, %v134
    %136 = vmatmul.f32.gmra.mxu0 %v109
    %v137 = vpop.f32.mrf.mxu0
    %v138 = vadd.f32 %v96, %v137
    %139 = vdwg.mxu0
    %vm140 = vcmask 31744
    %v142 = vsel %vm140, %v48, 0
    %v145 = vsel %vm140, %v49, 0
    %v148 = vsel %vm140, %v50, 0
    %v151 = vsel %vm140, %v51, 0
    %v154 = vsel %vm140, %v52, 0
    %v157 = vsel %vm140, %v53, 0
    %v160 = vsel %vm140, %v54, 0
    %v163 = vsel %vm140, %v55, 0
    %vm165 = vcmask 1043456
    %v167 = vsel %vm165, %v85, 0
    %169 = vmatpush.msra.mxu0 0.0
    %170 = vmatpush.msra.mxu0 0.0
    %171 = vmatpush.msra.mxu0 0.0
    %172 = vmatpush.msra.mxu0 0.0
    %173 = vmatpush.msra.mxu0 0.0
    %174 = vmatpush.msra.mxu0 0.0
    %175 = vmatpush.msra.mxu0 0.0
    %176 = vmatpush.msra.mxu0 0.0
    %177 = vmatpush.msra.mxu0 0.0
    %178 = vmatpush.msra.mxu0 0.0
    %179 = vmatpush.msra.mxu0 0.0
    %180 = vmatpush.msra.mxu0 0.0
    %181 = vmatpush.msra.mxu0 0.0
    %182 = vmatpush.msra.mxu0 0.0
    %183 = vmatpush.msra.mxu0 0.0
    %184 = vmatpush.msra.mxu0 %v167
    %185 = vmatmul.f32.gmra.mxu0 %v142
    %v186 = vpop.f32.mrf.mxu0
    %v187 = vadd.f32 0.0, %v186
    %188 = vmatmul.f32.gmra.mxu0 %v145
    %v189 = vpop.f32.mrf.mxu0
    %v190 = vadd.f32 0.0, %v189
    %191 = vmatmul.f32.gmra.mxu0 %v148
    %v192 = vpop.f32.mrf.mxu0
    %v193 = vadd.f32 0.0, %v192
    %194 = vmatmul.f32.gmra.mxu0 %v151
    %v195 = vpop.f32.mrf.mxu0
    %v196 = vadd.f32 0.0, %v195
    %197 = vmatmul.f32.gmra.mxu0 %v154
    %v198 = vpop.f32.mrf.mxu0
    %v199 = vadd.f32 0.0, %v198
    %200 = vmatmul.f32.gmra.mxu0 %v157
    %v201 = vpop.f32.mrf.mxu0
    %v202 = vadd.f32 0.0, %v201
    %203 = vmatmul.f32.gmra.mxu0 %v160
    %v204 = vpop.f32.mrf.mxu0
    %v205 = vadd.f32 0.0, %v204
    %206 = vmatmul.f32.gmra.mxu0 %v163
    %v207 = vpop.f32.mrf.mxu0
    %v208 = vadd.f32 0.0, %v207
    %209 = vdwg.mxu0
    %214 = vrot.lane.b32.xlu0 %v129, 64
    %v215 = vpop.permute.xlu0 %214
    %216 = vrot.lane.b32.xlu0 %v132, 64
    %v217 = vpop.permute.xlu0 %216
    %218 = vrot.lane.b32.xlu0 %v135, 64
    %v219 = vpop.permute.xlu0 %218
    %220 = vrot.lane.b32.xlu0 %v138, 64
    %v221 = vpop.permute.xlu0 %220
    %vm226 = vcmask 261120
    %v228 = vsel %vm226, %v64, 0
    %v231 = vsel %vm226, %v65, 0
    %v234 = vsel %vm226, %v66, 0
    %v237 = vsel %vm226, %v67, 0
    %v240 = vsel %vm226, %v68, 0
    %v243 = vsel %vm226, %v69, 0
    %v246 = vsel %vm226, %v70, 0
    %v249 = vsel %vm226, %v71, 0
    %251 = vmatpush.msra.mxu0 0.0
    %252 = vmatpush.msra.mxu0 0.0
    %253 = vmatpush.msra.mxu0 0.0
    %254 = vmatpush.msra.mxu0 0.0
    %255 = vmatpush.msra.mxu0 0.0
    %256 = vmatpush.msra.mxu0 0.0
    %257 = vmatpush.msra.mxu0 0.0
    %258 = vmatpush.msra.mxu0 0.0
    %259 = vmatpush.msra.mxu0 0.0
    %260 = vmatpush.msra.mxu0 0.0
    %261 = vmatpush.msra.mxu0 0.0
    %262 = vmatpush.msra.mxu0 0.0
    %263 = vmatpush.msra.mxu0 %v221
    %264 = vmatpush.msra.mxu0 %v219
    %265 = vmatpush.msra.mxu0 %v217
    %266 = vmatpush.msra.mxu0 %v215
    %267 = vmatmul.f32.gmra.mxu0 %v228
    %v268 = vpop.f32.mrf.mxu0
    %v269 = vadd.f32 0.0, %v268
    %270 = vmatmul.f32.gmra.mxu0 %v231
    %v271 = vpop.f32.mrf.mxu0
    %v272 = vadd.f32 0.0, %v271
    %273 = vmatmul.f32.gmra.mxu0 %v234
    %v274 = vpop.f32.mrf.mxu0
    %v275 = vadd.f32 0.0, %v274
    %276 = vmatmul.f32.gmra.mxu0 %v237
    %v277 = vpop.f32.mrf.mxu0
    %v278 = vadd.f32 0.0, %v277
    %279 = vmatmul.f32.gmra.mxu0 %v240
    %v280 = vpop.f32.mrf.mxu0
    %v281 = vadd.f32 0.0, %v280
    %282 = vmatmul.f32.gmra.mxu0 %v243
    %v283 = vpop.f32.mrf.mxu0
    %v284 = vadd.f32 0.0, %v283
    %285 = vmatmul.f32.gmra.mxu0 %v246
    %v286 = vpop.f32.mrf.mxu0
    %v287 = vadd.f32 0.0, %v286
    %288 = vmatmul.f32.gmra.mxu0 %v249
    %v289 = vpop.f32.mrf.mxu0
    %v290 = vadd.f32 0.0, %v289
    %291 = vdwg.mxu0
    %v293 = vsel %vm226, %v56, 0
    %v296 = vsel %vm226, %v57, 0
    %v299 = vsel %vm226, %v58, 0
    %v302 = vsel %vm226, %v59, 0
    %v305 = vsel %vm226, %v60, 0
    %v308 = vsel %vm226, %v61, 0
    %v311 = vsel %vm226, %v62, 0
    %v314 = vsel %vm226, %v63, 0
    %316 = vmatpush.msra.mxu0 0.0
    %317 = vmatpush.msra.mxu0 0.0
    %318 = vmatpush.msra.mxu0 0.0
    %319 = vmatpush.msra.mxu0 0.0
    %320 = vmatpush.msra.mxu0 0.0
    %321 = vmatpush.msra.mxu0 0.0
    %322 = vmatpush.msra.mxu0 0.0
    %323 = vmatpush.msra.mxu0 0.0
    %324 = vmatpush.msra.mxu0 0.0
    %325 = vmatpush.msra.mxu0 0.0
    %326 = vmatpush.msra.mxu0 0.0
    %327 = vmatpush.msra.mxu0 0.0
    %328 = vmatpush.msra.mxu0 %v138
    %329 = vmatpush.msra.mxu0 %v135
    %330 = vmatpush.msra.mxu0 %v132
    %331 = vmatpush.msra.mxu0 %v129
    %332 = vmatmul.f32.gmra.mxu0 %v293
    %v333 = vpop.f32.mrf.mxu0
    %v334 = vadd.f32 %v269, %v333
    %335 = vmatmul.f32.gmra.mxu0 %v296
    %v336 = vpop.f32.mrf.mxu0
    %v337 = vadd.f32 %v272, %v336
    %338 = vmatmul.f32.gmra.mxu0 %v299
    %v339 = vpop.f32.mrf.mxu0
    %v340 = vadd.f32 %v275, %v339
    %341 = vmatmul.f32.gmra.mxu0 %v302
    %v342 = vpop.f32.mrf.mxu0
    %v343 = vadd.f32 %v278, %v342
    %344 = vmatmul.f32.gmra.mxu0 %v305
    %v345 = vpop.f32.mrf.mxu0
    %v346 = vadd.f32 %v281, %v345
    %347 = vmatmul.f32.gmra.mxu0 %v308
    %v348 = vpop.f32.mrf.mxu0
    %v349 = vadd.f32 %v284, %v348
    %350 = vmatmul.f32.gmra.mxu0 %v311
    %v351 = vpop.f32.mrf.mxu0
    %v352 = vadd.f32 %v287, %v351
    %353 = vmatmul.f32.gmra.mxu0 %v314
    %v354 = vpop.f32.mrf.mxu0
    %v355 = vadd.f32 %v290, %v354
    %356 = vdwg.mxu0
    %v357 = vadd.f32 %v334, %v187
    %v358 = vadd.f32 %v337, %v190
    %v359 = vadd.f32 %v340, %v193
    %v360 = vadd.f32 %v343, %v196
    %v361 = vadd.f32 %v346, %v199
    %v362 = vadd.f32 %v349, %v202
    %v363 = vadd.f32 %v352, %v205
    %v364 = vadd.f32 %v355, %v208
    %vm365 = vcmp.gt.f32.partialorder %v357, 0.0
    %vm366 = vcmp.gt.f32.partialorder %v358, 0.0
    %vm367 = vcmp.gt.f32.partialorder %v359, 0.0
    %vm368 = vcmp.gt.f32.partialorder %v360, 0.0
    %vm369 = vcmp.gt.f32.partialorder %v361, 0.0
    %vm370 = vcmp.gt.f32.partialorder %v362, 0.0
    %vm371 = vcmp.gt.f32.partialorder %v363, 0.0
    %vm372 = vcmp.gt.f32.partialorder %v364, 0.0
    %v373 = vmul.f32 %v357, 0.2
    %v374 = vmul.f32 %v358, 0.2
    %v375 = vmul.f32 %v359, 0.2
    %v376 = vmul.f32 %v360, 0.2
    %v377 = vmul.f32 %v361, 0.2
    %v378 = vmul.f32 %v362, 0.2
    %v379 = vmul.f32 %v363, 0.2
    %v380 = vmul.f32 %v364, 0.2
    %v381 = vsel %vm365, %v357, %v373
    %v382 = vsel %vm366, %v358, %v374
    %v383 = vsel %vm367, %v359, %v375
    %v384 = vsel %vm368, %v360, %v376
    %v385 = vsel %vm369, %v361, %v377
    %v386 = vsel %vm370, %v362, %v378
    %v387 = vsel %vm371, %v363, %v379
    %v388 = vsel %vm372, %v364, %v380
    %v390 = vsel %vm98, %v381, 0
    %v393 = vsel %vm98, %v382, 0
    %v396 = vsel %vm98, %v383, 0
    %v399 = vsel %vm98, %v384, 0
    %v402 = vsel %vm98, %v385, 0
    %v405 = vsel %vm98, %v386, 0
    %v408 = vsel %vm98, %v387, 0
    %v411 = vsel %vm98, %v388, 0
    %413 = vmatpush.msra.mxu0 0.0
    %414 = vmatpush.msra.mxu0 0.0
    %415 = vmatpush.msra.mxu0 0.0
    %416 = vmatpush.msra.mxu0 0.0
    %417 = vmatpush.msra.mxu0 0.0
    %418 = vmatpush.msra.mxu0 0.0
    %419 = vmatpush.msra.mxu0 0.0
    %420 = vmatpush.msra.mxu0 0.0
    %421 = vmatpush.msra.mxu0 %v93
    %422 = vmatpush.msra.mxu0 %v92
    %423 = vmatpush.msra.mxu0 %v91
    %424 = vmatpush.msra.mxu0 %v90
    %425 = vmatpush.msra.mxu0 %v89
    %426 = vmatpush.msra.mxu0 %v88
    %427 = vmatpush.msra.mxu0 %v87
    %428 = vmatpush.msra.mxu0 %v86
    %429 = vmatmul.f32.gmra.mxu0 %v390
    %v430 = vpop.f32.mrf.mxu0
    %v431 = vadd.f32 0.0, %v430
    %432 = vmatmul.f32.gmra.mxu0 %v393
    %v433 = vpop.f32.mrf.mxu0
    %v434 = vadd.f32 0.0, %v433
    %435 = vmatmul.f32.gmra.mxu0 %v396
    %v436 = vpop.f32.mrf.mxu0
    %v437 = vadd.f32 0.0, %v436
    %438 = vmatmul.f32.gmra.mxu0 %v399
    %v439 = vpop.f32.mrf.mxu0
    %v440 = vadd.f32 0.0, %v439
    %441 = vmatmul.f32.gmra.mxu0 %v402
    %v442 = vpop.f32.mrf.mxu0
    %v443 = vadd.f32 0.0, %v442
    %444 = vmatmul.f32.gmra.mxu0 %v405
    %v445 = vpop.f32.mrf.mxu0
    %v446 = vadd.f32 0.0, %v445
    %447 = vmatmul.f32.gmra.mxu0 %v408
    %v448 = vpop.f32.mrf.mxu0
    %v449 = vadd.f32 0.0, %v448
    %450 = vmatmul.f32.gmra.mxu0 %v411
    %v451 = vpop.f32.mrf.mxu0
    %v452 = vadd.f32 0.0, %v451
    %453 = vdwg.mxu0
    %v455 = vsel %vm98, %v72, 0
    %v458 = vsel %vm98, %v73, 0
    %v461 = vsel %vm98, %v74, 0
    %v464 = vsel %vm98, %v75, 0
    %466 = vmatpush.msra.mxu0 0.0
    %467 = vmatpush.msra.mxu0 0.0
    %468 = vmatpush.msra.mxu0 0.0
    %469 = vmatpush.msra.mxu0 0.0
    %470 = vmatpush.msra.mxu0 0.0
    %471 = vmatpush.msra.mxu0 0.0
    %472 = vmatpush.msra.mxu0 0.0
    %473 = vmatpush.msra.mxu0 0.0
    %474 = vmatpush.msra.mxu0 %v63
    %475 = vmatpush.msra.mxu0 %v62
    %476 = vmatpush.msra.mxu0 %v61
    %477 = vmatpush.msra.mxu0 %v60
    %478 = vmatpush.msra.mxu0 %v59
    %479 = vmatpush.msra.mxu0 %v58
    %480 = vmatpush.msra.mxu0 %v57
    %481 = vmatpush.msra.mxu0 %v56
    %482 = vmatmul.f32.gmra.mxu0 %v455
    %v483 = vpop.f32.mrf.mxu0
    %v484 = vadd.f32 0.0, %v483
    %485 = vmatmul.f32.gmra.mxu0 %v458
    %v486 = vpop.f32.mrf.mxu0
    %v487 = vadd.f32 0.0, %v486
    %488 = vmatmul.f32.gmra.mxu0 %v461
    %v489 = vpop.f32.mrf.mxu0
    %v490 = vadd.f32 0.0, %v489
    %491 = vmatmul.f32.gmra.mxu0 %v464
    %v492 = vpop.f32.mrf.mxu0
    %v493 = vadd.f32 0.0, %v492
    %494 = vdwg.mxu0
    %vm495 = vcmp.gt.f32.partialorder %v484, 0.5
    %vm496 = vcmp.gt.f32.partialorder %v487, 0.5
    %vm497 = vcmp.gt.f32.partialorder %v490, 0.5
    %vm498 = vcmp.gt.f32.partialorder %v493, 0.5
    %500 = vset.pattern.permute.xlu0 0
    %501 = vperm.xlu0 %500, %v431
    %v502 = vpop.permute.xlu0 %501
    %505 = vset.pattern.permute.xlu0 0
    %506 = vperm.xlu0 %505, %v434
    %v507 = vpop.permute.xlu0 %506
    %510 = vset.pattern.permute.xlu0 0
    %511 = vperm.xlu0 %510, %v437
    %v512 = vpop.permute.xlu0 %511
    %515 = vset.pattern.permute.xlu0 0
    %516 = vperm.xlu0 %515, %v440
    %v517 = vpop.permute.xlu0 %516
    %520 = vset.pattern.permute.xlu0 0
    %521 = vperm.xlu0 %520, %v443
    %v522 = vpop.permute.xlu0 %521
    %525 = vset.pattern.permute.xlu0 0
    %526 = vperm.xlu0 %525, %v446
    %v527 = vpop.permute.xlu0 %526
    %530 = vset.pattern.permute.xlu0 0
    %531 = vperm.xlu0 %530, %v449
    %v532 = vpop.permute.xlu0 %531
    %535 = vset.pattern.permute.xlu0 0
    %536 = vperm.xlu0 %535, %v452
    %v537 = vpop.permute.xlu0 %536
    %v539 = vmul.f32 %v502, %v56
    %v540 = vmul.f32 %v507, %v57
    %v541 = vmul.f32 %v512, %v58
    %v542 = vmul.f32 %v517, %v59
    %v543 = vmul.f32 %v522, %v60
    %v544 = vmul.f32 %v527, %v61
    %v545 = vmul.f32 %v532, %v62
    %v546 = vmul.f32 %v537, %v63
    %547 = vmatpush.msra.mxu0 0.0
    %548 = vmatpush.msra.mxu0 0.0
    %549 = vmatpush.msra.mxu0 0.0
    %550 = vmatpush.msra.mxu0 0.0
    %551 = vmatpush.msra.mxu0 0.0
    %552 = vmatpush.msra.mxu0 0.0
    %553 = vmatpush.msra.mxu0 0.0
    %554 = vmatpush.msra.mxu0 0.0
    %555 = vmatpush.msra.mxu0 %v546
    %556 = vmatpush.msra.mxu0 %v545
    %557 = vmatpush.msra.mxu0 %v544
    %558 = vmatpush.msra.mxu0 %v543
    %559 = vmatpush.msra.mxu0 %v542
    %560 = vmatpush.msra.mxu0 %v541
    %561 = vmatpush.msra.mxu0 %v540
    %562 = vmatpush.msra.mxu0 %v539
    %563 = vmatmul.f32.gmra.mxu0 %v455
    %v564 = vpop.f32.mrf.mxu0
    %v565 = vadd.f32 0.0, %v564
    %566 = vmatmul.f32.gmra.mxu0 %v458
    %v567 = vpop.f32.mrf.mxu0
    %v568 = vadd.f32 0.0, %v567
    %569 = vmatmul.f32.gmra.mxu0 %v461
    %v570 = vpop.f32.mrf.mxu0
    %v571 = vadd.f32 0.0, %v570
    %572 = vmatmul.f32.gmra.mxu0 %v464
    %v573 = vpop.f32.mrf.mxu0
    %v574 = vadd.f32 0.0, %v573
    %575 = vdwg.mxu0
    %v576 = vsel %vm495, %v565, -1e+30
    %v577 = vsel %vm496, %v568, -1e+30
    %v578 = vsel %vm497, %v571, -1e+30
    %v579 = vsel %vm498, %v574, -1e+30
    %v580 = vsel %vm226, %v576, -inf
    %581 = vmax.xlane.f32.xlu0 %v580
    %v582 = vpop.xlane.xlu0 %581
    %v583 = vsel %vm226, %v577, -inf
    %584 = vmax.xlane.f32.xlu0 %v583
    %v585 = vpop.xlane.xlu0 %584
    %v586 = vsel %vm226, %v578, -inf
    %587 = vmax.xlane.f32.xlu0 %v586
    %v588 = vpop.xlane.xlu0 %587
    %v589 = vsel %vm226, %v579, -inf
    %590 = vmax.xlane.f32.xlu0 %v589
    %v591 = vpop.xlane.xlu0 %590
    %v592 = vsub.f32 %v576, %v582
    %v593 = vsub.f32 %v577, %v585
    %v594 = vsub.f32 %v578, %v588
    %v595 = vsub.f32 %v579, %v591
    %v596 = vmul.f32 %v592, 1.442695
    %v597 = vpow.pop %v596
    %v598 = vmul.f32 %v593, 1.442695
    %v599 = vpow.pop %v598
    %v600 = vmul.f32 %v594, 1.442695
    %v601 = vpow.pop %v600
    %v602 = vmul.f32 %v595, 1.442695
    %v603 = vpow.pop %v602
    %v604 = vsel %vm495, %v597, 0.0
    %v605 = vsel %vm496, %v599, 0.0
    %v606 = vsel %vm497, %v601, 0.0
    %v607 = vsel %vm498, %v603, 0.0
    %v608 = vsel %vm226, %v604, 0.0
    %609 = vadd.xlane.f32.xlu0 %v608
    %v610 = vpop.xlane.xlu0 %609
    %v611 = vsel %vm226, %v605, 0.0
    %612 = vadd.xlane.f32.xlu0 %v611
    %v613 = vpop.xlane.xlu0 %612
    %v614 = vsel %vm226, %v606, 0.0
    %615 = vadd.xlane.f32.xlu0 %v614
    %v616 = vpop.xlane.xlu0 %615
    %v617 = vsel %vm226, %v607, 0.0
    %618 = vadd.xlane.f32.xlu0 %v617
    %v619 = vpop.xlane.xlu0 %618
    %v620 = vadd.f32 %v610, 1e-16
    %v621 = vadd.f32 %v613, 1e-16
    %v622 = vadd.f32 %v616, 1e-16
    %v623 = vadd.f32 %v619, 1e-16
    %v624 = vrcp.pop %v620
    %v625 = vrcp.pop %v621
    %v626 = vrcp.pop %v622
    %v627 = vrcp.pop %v623
    %v628 = vmul.f32 %v604, %v624
    %v629 = vmul.f32 %v605, %v625
    %v630 = vmul.f32 %v606, %v626
    %v631 = vmul.f32 %v607, %v627
    %v633 = vsel %vm226, %v628, 0
    %v636 = vsel %vm226, %v629, 0
    %v639 = vsel %vm226, %v630, 0
    %v642 = vsel %vm226, %v631, 0
    %644 = vmatpush.msra.mxu0 0.0
    %645 = vmatpush.msra.mxu0 0.0
    %646 = vmatpush.msra.mxu0 0.0
    %647 = vmatpush.msra.mxu0 0.0
    %648 = vmatpush.msra.mxu0 0.0
    %649 = vmatpush.msra.mxu0 0.0
    %650 = vmatpush.msra.mxu0 0.0
    %651 = vmatpush.msra.mxu0 0.0
    %652 = vmatpush.msra.mxu0 0.0
    %653 = vmatpush.msra.mxu0 0.0
    %654 = vmatpush.msra.mxu0 0.0
    %655 = vmatpush.msra.mxu0 0.0
    %656 = vmatpush.msra.mxu0 %v138
    %657 = vmatpush.msra.mxu0 %v135
    %658 = vmatpush.msra.mxu0 %v132
    %659 = vmatpush.msra.mxu0 %v129
    %660 = vmatmul.f32.gmra.mxu0 %v633
    %v661 = vpop.f32.mrf.mxu0
    %v662 = vadd.f32 0.0, %v661
    %663 = vmatmul.f32.gmra.mxu0 %v636
    %v664 = vpop.f32.mrf.mxu0
    %v665 = vadd.f32 0.0, %v664
    %666 = vmatmul.f32.gmra.mxu0 %v639
    %v667 = vpop.f32.mrf.mxu0
    %v668 = vadd.f32 0.0, %v667
    %669 = vmatmul.f32.gmra.mxu0 %v642
    %v670 = vpop.f32.mrf.mxu0
    %v671 = vadd.f32 0.0, %v670
    %672 = vdwg.mxu0
    %673 = vset.pattern.permute.xlu0 1
    %674 = vperm.xlu0 %673, %v431
    %v675 = vpop.permute.xlu0 %674
    %677 = vset.pattern.permute.xlu0 1
    %678 = vperm.xlu0 %677, %v434
    %v679 = vpop.permute.xlu0 %678
    %681 = vset.pattern.permute.xlu0 1
    %682 = vperm.xlu0 %681, %v437
    %v683 = vpop.permute.xlu0 %682
    %685 = vset.pattern.permute.xlu0 1
    %686 = vperm.xlu0 %685, %v440
    %v687 = vpop.permute.xlu0 %686
    %689 = vset.pattern.permute.xlu0 1
    %690 = vperm.xlu0 %689, %v443
    %v691 = vpop.permute.xlu0 %690
    %693 = vset.pattern.permute.xlu0 1
    %694 = vperm.xlu0 %693, %v446
    %v695 = vpop.permute.xlu0 %694
    %697 = vset.pattern.permute.xlu0 1
    %698 = vperm.xlu0 %697, %v449
    %v699 = vpop.permute.xlu0 %698
    %701 = vset.pattern.permute.xlu0 1
    %702 = vperm.xlu0 %701, %v452
    %v703 = vpop.permute.xlu0 %702
    %v705 = vmul.f32 %v675, %v56
    %v706 = vmul.f32 %v679, %v57
    %v707 = vmul.f32 %v683, %v58
    %v708 = vmul.f32 %v687, %v59
    %v709 = vmul.f32 %v691, %v60
    %v710 = vmul.f32 %v695, %v61
    %v711 = vmul.f32 %v699, %v62
    %v712 = vmul.f32 %v703, %v63
    %713 = vmatpush.msra.mxu0 0.0
    %714 = vmatpush.msra.mxu0 0.0
    %715 = vmatpush.msra.mxu0 0.0
    %716 = vmatpush.msra.mxu0 0.0
    %717 = vmatpush.msra.mxu0 0.0
    %718 = vmatpush.msra.mxu0 0.0
    %719 = vmatpush.msra.mxu0 0.0
    %720 = vmatpush.msra.mxu0 0.0
    %721 = vmatpush.msra.mxu0 %v712
    %722 = vmatpush.msra.mxu0 %v711
    %723 = vmatpush.msra.mxu0 %v710
    %724 = vmatpush.msra.mxu0 %v709
    %725 = vmatpush.msra.mxu0 %v708
    %726 = vmatpush.msra.mxu0 %v707
    %727 = vmatpush.msra.mxu0 %v706
    %728 = vmatpush.msra.mxu0 %v705
    %729 = vmatmul.f32.gmra.mxu0 %v455
    %v730 = vpop.f32.mrf.mxu0
    %v731 = vadd.f32 0.0, %v730
    %732 = vmatmul.f32.gmra.mxu0 %v458
    %v733 = vpop.f32.mrf.mxu0
    %v734 = vadd.f32 0.0, %v733
    %735 = vmatmul.f32.gmra.mxu0 %v461
    %v736 = vpop.f32.mrf.mxu0
    %v737 = vadd.f32 0.0, %v736
    %738 = vmatmul.f32.gmra.mxu0 %v464
    %v739 = vpop.f32.mrf.mxu0
    %v740 = vadd.f32 0.0, %v739
    %741 = vdwg.mxu0
    %v742 = vsel %vm495, %v731, -1e+30
    %v743 = vsel %vm496, %v734, -1e+30
    %v744 = vsel %vm497, %v737, -1e+30
    %v745 = vsel %vm498, %v740, -1e+30
    %v746 = vsel %vm226, %v742, -inf
    %747 = vmax.xlane.f32.xlu0 %v746
    %v748 = vpop.xlane.xlu0 %747
    %v749 = vsel %vm226, %v743, -inf
    %750 = vmax.xlane.f32.xlu0 %v749
    %v751 = vpop.xlane.xlu0 %750
    %v752 = vsel %vm226, %v744, -inf
    %753 = vmax.xlane.f32.xlu0 %v752
    %v754 = vpop.xlane.xlu0 %753
    %v755 = vsel %vm226, %v745, -inf
    %756 = vmax.xlane.f32.xlu0 %v755
    %v757 = vpop.xlane.xlu0 %756
    %v758 = vsub.f32 %v742, %v748
    %v759 = vsub.f32 %v743, %v751
    %v760 = vsub.f32 %v744, %v754
    %v761 = vsub.f32 %v745, %v757
    %v762 = vmul.f32 %v758, 1.442695
    %v763 = vpow.pop %v762
    %v764 = vmul.f32 %v759, 1.442695
    %v765 = vpow.pop %v764
    %v766 = vmul.f32 %v760, 1.442695
    %v767 = vpow.pop %v766
    %v768 = vmul.f32 %v761, 1.442695
    %v769 = vpow.pop %v768
    %v770 = vsel %vm495, %v763, 0.0
    %v771 = vsel %vm496, %v765, 0.0
    %v772 = vsel %vm497, %v767, 0.0
    %v773 = vsel %vm498, %v769, 0.0
    %v774 = vsel %vm226, %v770, 0.0
    %775 = vadd.xlane.f32.xlu0 %v774
    %v776 = vpop.xlane.xlu0 %775
    %v777 = vsel %vm226, %v771, 0.0
    %778 = vadd.xlane.f32.xlu0 %v777
    %v779 = vpop.xlane.xlu0 %778
    %v780 = vsel %vm226, %v772, 0.0
    %781 = vadd.xlane.f32.xlu0 %v780
    %v782 = vpop.xlane.xlu0 %781
    %v783 = vsel %vm226, %v773, 0.0
    %784 = vadd.xlane.f32.xlu0 %v783
    %v785 = vpop.xlane.xlu0 %784
    %v786 = vadd.f32 %v776, 1e-16
    %v787 = vadd.f32 %v779, 1e-16
    %v788 = vadd.f32 %v782, 1e-16
    %v789 = vadd.f32 %v785, 1e-16
    %v790 = vrcp.pop %v786
    %v791 = vrcp.pop %v787
    %v792 = vrcp.pop %v788
    %v793 = vrcp.pop %v789
    %v794 = vmul.f32 %v770, %v790
    %v795 = vmul.f32 %v771, %v791
    %v796 = vmul.f32 %v772, %v792
    %v797 = vmul.f32 %v773, %v793
    %798 = vrot.lane.b32.xlu0 %v129, 96
    %v799 = vpop.permute.xlu0 %798
    %800 = vrot.lane.b32.xlu0 %v132, 96
    %v801 = vpop.permute.xlu0 %800
    %802 = vrot.lane.b32.xlu0 %v135, 96
    %v803 = vpop.permute.xlu0 %802
    %804 = vrot.lane.b32.xlu0 %v138, 96
    %v805 = vpop.permute.xlu0 %804
    %v811 = vsel %vm226, %v794, 0
    %v814 = vsel %vm226, %v795, 0
    %v817 = vsel %vm226, %v796, 0
    %v820 = vsel %vm226, %v797, 0
    %822 = vmatpush.msra.mxu0 0.0
    %823 = vmatpush.msra.mxu0 0.0
    %824 = vmatpush.msra.mxu0 0.0
    %825 = vmatpush.msra.mxu0 0.0
    %826 = vmatpush.msra.mxu0 0.0
    %827 = vmatpush.msra.mxu0 0.0
    %828 = vmatpush.msra.mxu0 0.0
    %829 = vmatpush.msra.mxu0 0.0
    %830 = vmatpush.msra.mxu0 0.0
    %831 = vmatpush.msra.mxu0 0.0
    %832 = vmatpush.msra.mxu0 0.0
    %833 = vmatpush.msra.mxu0 0.0
    %834 = vmatpush.msra.mxu0 %v805
    %835 = vmatpush.msra.mxu0 %v803
    %836 = vmatpush.msra.mxu0 %v801
    %837 = vmatpush.msra.mxu0 %v799
    %838 = vmatmul.f32.gmra.mxu0 %v811
    %v839 = vpop.f32.mrf.mxu0
    %v840 = vadd.f32 0.0, %v839
    %841 = vmatmul.f32.gmra.mxu0 %v814
    %v842 = vpop.f32.mrf.mxu0
    %v843 = vadd.f32 0.0, %v842
    %844 = vmatmul.f32.gmra.mxu0 %v817
    %v845 = vpop.f32.mrf.mxu0
    %v846 = vadd.f32 0.0, %v845
    %847 = vmatmul.f32.gmra.mxu0 %v820
    %v848 = vpop.f32.mrf.mxu0
    %v849 = vadd.f32 0.0, %v848
    %850 = vdwg.mxu0
    %855 = vrot.lane.b32.xlu0 %v840, 32
    %v856 = vpop.permute.xlu0 %855
    %857 = vrot.lane.b32.xlu0 %v843, 32
    %v858 = vpop.permute.xlu0 %857
    %859 = vrot.lane.b32.xlu0 %v846, 32
    %v860 = vpop.permute.xlu0 %859
    %861 = vrot.lane.b32.xlu0 %v849, 32
    %v862 = vpop.permute.xlu0 %861
    %v867 = vsel %vm226, %v662, %v856
    %v868 = vsel %vm226, %v665, %v858
    %v869 = vsel %vm226, %v668, %v860
    %v870 = vsel %vm226, %v671, %v862
    %v872 = vperm.slane %v94, 0
    %v874 = vadd.f32 %v867, %v872
    %v875 = vadd.f32 %v868, %v872
    %v876 = vadd.f32 %v869, %v872
    %v877 = vadd.f32 %v870, %v872
    %v878 = vxor.u32 %v874, 2147483648
    %v879 = vxor.u32 %v875, 2147483648
    %v880 = vxor.u32 %v876, 2147483648
    %v881 = vxor.u32 %v877, 2147483648
    %v882 = vmul.f32 %v878, 1.442695
    %v883 = vpow.pop %v882
    %v884 = vmul.f32 %v879, 1.442695
    %v885 = vpow.pop %v884
    %v886 = vmul.f32 %v880, 1.442695
    %v887 = vpow.pop %v886
    %v888 = vmul.f32 %v881, 1.442695
    %v889 = vpow.pop %v888
    %v890 = vadd.f32 %v883, 1.0
    %v891 = vadd.f32 %v885, 1.0
    %v892 = vadd.f32 %v887, 1.0
    %v893 = vadd.f32 %v889, 1.0
    %v894 = vrcp.pop %v890
    %v895 = vmul.f32 %v890, %v894
    %v896 = vsub.f32 1.0, %v895
    %v897 = vmul.f32 %v894, %v896
    %v898 = vadd.f32 %v894, %v897
    %vm899 = vweird.f32 %v890
    %vm900 = vweird.f32 %v894
    %vm901 = vmor %vm899, %vm900
    %v902 = vsel %vm901, %v894, %v898
    %v903 = vand.u32 2147483647, %v890
    %vm904 = vcmp.eq.f32.partialorder %v903, 8.507059e+37
    %v905 = vand.u32 %v890, 2147483648
    %v906 = vor.u32 1.1754944e-38, %v905
    %v907 = vsel %vm904, %v906, %v902
    %v908 = vmul.f32 1.0, %v907
    %v909 = vrcp.pop %v891
    %v910 = vmul.f32 %v891, %v909
    %v911 = vsub.f32 1.0, %v910
    %v912 = vmul.f32 %v909, %v911
    %v913 = vadd.f32 %v909, %v912
    %vm914 = vweird.f32 %v891
    %vm915 = vweird.f32 %v909
    %vm916 = vmor %vm914, %vm915
    %v917 = vsel %vm916, %v909, %v913
    %v918 = vand.u32 2147483647, %v891
    %vm919 = vcmp.eq.f32.partialorder %v918, 8.507059e+37
    %v920 = vand.u32 %v891, 2147483648
    %v921 = vor.u32 1.1754944e-38, %v920
    %v922 = vsel %vm919, %v921, %v917
    %v923 = vmul.f32 1.0, %v922
    %v924 = vrcp.pop %v892
    %v925 = vmul.f32 %v892, %v924
    %v926 = vsub.f32 1.0, %v925
    %v927 = vmul.f32 %v924, %v926
    %v928 = vadd.f32 %v924, %v927
    %vm929 = vweird.f32 %v892
    %vm930 = vweird.f32 %v924
    %vm931 = vmor %vm929, %vm930
    %v932 = vsel %vm931, %v924, %v928
    %v933 = vand.u32 2147483647, %v892
    %vm934 = vcmp.eq.f32.partialorder %v933, 8.507059e+37
    %v935 = vand.u32 %v892, 2147483648
    %v936 = vor.u32 1.1754944e-38, %v935
    %v937 = vsel %vm934, %v936, %v932
    %v938 = vmul.f32 1.0, %v937
    %v939 = vrcp.pop %v893
    %v940 = vmul.f32 %v893, %v939
    %v941 = vsub.f32 1.0, %v940
    %v942 = vmul.f32 %v939, %v941
    %v943 = vadd.f32 %v939, %v942
    %vm944 = vweird.f32 %v893
    %vm945 = vweird.f32 %v939
    %vm946 = vmor %vm944, %vm945
    %v947 = vsel %vm946, %v939, %v943
    %v948 = vand.u32 2147483647, %v893
    %vm949 = vcmp.eq.f32.partialorder %v948, 8.507059e+37
    %v950 = vand.u32 %v893, 2147483648
    %v951 = vor.u32 1.1754944e-38, %v950
    %v952 = vsel %vm949, %v951, %v947
    %v953 = vmul.f32 1.0, %v952
    %v954 = vmul.f32 %v874, %v908
    %v955 = vmul.f32 %v875, %v923
    %v956 = vmul.f32 %v876, %v938
    %v957 = vmul.f32 %v877, %v953
    %958 = vst.msk [vmem:[#allocation2] sm:$0xff] %vm98, %v954
    %959 = vst.msk [vmem:[#allocation2 + $0x8] sm:$0xff] %vm98, %v955
    %960 = vst.msk [vmem:[#allocation2 + $0x10] sm:$0xff] %vm98, %v956
    %961 = vst.msk [vmem:[#allocation2 + $0x18] sm:$0xff] %vm98, %v957
    %v962 = vld [vmem:[%s10] sm:$0xff]
    %v963 = vld [vmem:[%s10 + $0x8] sm:$0xff]
    %v964 = vld [vmem:[%s10 + $0x10] sm:$0xff]
    %v965 = vld [vmem:[%s10 + $0x18] sm:$0xff]
    %v966 = vld [vmem:[%s10 + $0x20] sm:$0xff]
    %v967 = vld [vmem:[%s10 + $0x28] sm:$0xff]
    %v968 = vld [vmem:[%s10 + $0x30] sm:$0xff]
    %v969 = vld [vmem:[%s10 + $0x38] sm:$0xff]
    %v970 = vld [vmem:[%s11] sm:$0x1]
    %v972 = vperm.slane %v970, 0
    %v975 = vsel %vm98, %v954, 0
    %v978 = vsel %vm98, %v955, 0
    %v981 = vsel %vm98, %v956, 0
    %v984 = vsel %vm98, %v957, 0
    %986 = vmatpush.msra.mxu0 0.0
    %987 = vmatpush.msra.mxu0 0.0
    %988 = vmatpush.msra.mxu0 0.0
    %989 = vmatpush.msra.mxu0 0.0
    %990 = vmatpush.msra.mxu0 0.0
    %991 = vmatpush.msra.mxu0 0.0
    %992 = vmatpush.msra.mxu0 0.0
    %993 = vmatpush.msra.mxu0 0.0
    %994 = vmatpush.msra.mxu0 %v969
    %995 = vmatpush.msra.mxu0 %v968
    %996 = vmatpush.msra.mxu0 %v967
    %997 = vmatpush.msra.mxu0 %v966
    %998 = vmatpush.msra.mxu0 %v965
    %999 = vmatpush.msra.mxu0 %v964
    %1000 = vmatpush.msra.mxu0 %v963
    %1001 = vmatpush.msra.mxu0 %v962
    %1002 = vmatmul.f32.gmra.mxu0 %v975
    %v1003 = vpop.f32.mrf.mxu0
    %v1004 = vadd.f32 %v972, %v1003
    %1005 = vmatmul.f32.gmra.mxu0 %v978
    %v1006 = vpop.f32.mrf.mxu0
    %v1007 = vadd.f32 %v972, %v1006
    %1008 = vmatmul.f32.gmra.mxu0 %v981
    %v1009 = vpop.f32.mrf.mxu0
    %v1010 = vadd.f32 %v972, %v1009
    %1011 = vmatmul.f32.gmra.mxu0 %v984
    %v1012 = vpop.f32.mrf.mxu0
    %v1013 = vadd.f32 %v972, %v1012
    %1014 = vdwg.mxu0
    %vm1015 = vcmask 64512
    %1016 = vst.msk [vmem:[%s13] sm:$0xff] %vm1015, %v1004
    %1017 = vst.msk [vmem:[%s13 + $0x8] sm:$0xff] %vm1015, %v1007
    %1018 = vst.msk [vmem:[%s13 + $0x10] sm:$0xff] %vm1015, %v1010
    %1019 = vst.msk [vmem:[%s13 + $0x18] sm:$0xff] %vm1015, %v1013
    // Predicated region
    $region50: #{gcn_forward.5} parent=1 // pred_check
      _
    $region51: #{gcn_forward.5} parent=1 // pred_check_branch
      %1021 = sbr.rel (0) target = $region53
    $region52: #{gcn_forward.5} parent=1 // pred_region
      %1023 = vsyncadd [#allocation3], 0
      %s1024 = sshll.u32 [#allocation2], 4
      %s1025 = int_to_ptr.vmem [resolvable:$true] %s1024
      %s1026 = sshll.u32 %s12, 4
      %s1027 = int_to_ptr.hbm [resolvable:$true] %s1026
      %1032 = dma.vmem_to_hbm [thread:$0]  %s1025, 512, %s1027, [#allocation3], 128, 128, 8
    $region53: #{gcn_forward.5} parent=1 // pred_fallthru
      _
    // Predicated region
    $region54: #{gcn_forward.5} parent=1 // pred_check
      _
    $region55: #{gcn_forward.5} parent=1 // pred_check_branch
      %1034 = sbr.rel (0) target = $region57
    $region56: #{gcn_forward.5} parent=1 // pred_region
      _
    $region57: #{gcn_forward.5} parent=1 // pred_fallthru
      _
    // Predicated region
    $region58: #{gcn_forward.5} parent=1 // pred_check
      _
    $region59: #{gcn_forward.5} parent=1 // pred_check_branch
      %1036 = sbr.rel (0) target = $region61
    $region60: #{gcn_forward.5} parent=1 // pred_region
      %1038 = dma.done [#allocation3], 512
    $region61: #{gcn_forward.5} parent=1 // pred_fallthru
      _
    // Predicated region
    $region62: #{gcn_forward.5} parent=1 // pred_check
      _
    $region63: #{gcn_forward.5} parent=1 // pred_check_branch
      %1040 = sbr.rel (0) target = $region65
    $region64: #{gcn_forward.5} parent=1 // pred_region
      _
    $region65: #{gcn_forward.5} parent=1 // pred_fallthru
      _
    %1041 = vsyncpa [#allocation3], 1

// kernel: gcn_forward.3
$region0: #{gcn_forward.3}
  #allocation0 [shape = 'u32[]', space=smem, size = 0x4, offset = 0x4, fixed_abs, tag = 'smem constant byte address 0x4 - core index']
  #allocation1 [shape = 'u32[72,128]{1,0:T(1,128)}', space=vmem, size = 0x9000, scoped, tag = 'internal scratch']
  %s0 = inlined_call_operand.vmem [shape: f32[32,16], index: 0, kind: input, shape index: {}]
  %s1 = inlined_call_operand.vmem [shape: f32[64,4], index: 1, kind: input, shape index: {}]
  %s2 = inlined_call_operand.vmem [shape: f32[64,32], index: 2, kind: input, shape index: {}]
  %s3 = inlined_call_operand.vmem [shape: f32[64,32], index: 3, kind: input, shape index: {}]
  %s4 = inlined_call_operand.vmem [shape: f32[32,64], index: 4, kind: input, shape index: {}]
  %s5 = inlined_call_operand.vmem [shape: f32[16,32], index: 5, kind: input, shape index: {}]
  %s6 = inlined_call_operand.vmem [shape: f32[1,32], index: 6, kind: input, shape index: {}]
  %s7 = inlined_call_operand.vmem [shape: f32[32,128], index: 7, kind: input, shape index: {}]
  %s8 = inlined_call_operand.vmem [shape: f32[1,128], index: 8, kind: input, shape index: {}]
  %s9 = inlined_call_operand.vmem [shape: f32[4,64], index: 9, kind: input, shape index: {}]
  %s10 = inlined_call_operand.vmem [shape: f32[64,2], index: 10, kind: input, shape index: {}]
  %s11 = inlined_call_operand.vmem [shape: f32[1,64], index: 11, kind: input, shape index: {}]
  %s12 = inlined_call_operand.vmem [shape: f32[1,64], index: 12, kind: input, shape index: {}]
  %s13 = inlined_call_operand.vmem [shape: f32[1,64], index: 13, kind: input, shape index: {}]
  %s14 = inlined_call_operand.vmem [shape: f32[1,64], index: 14, kind: input, shape index: {}]
  %s15 = inlined_call_operand.vmem [shape: f32[1,64], index: 15, kind: input, shape index: {}]
  %s16 = inlined_call_operand.vmem [shape: f32[32,64], index: 16, kind: output, shape index: {}]
  %s17 = sld [smem:[#allocation0]]
  $region74: #{gcn_forward.3} parent=0
    _
  %s19 = ssub.s32 1, %s17
  %s20 = scalar_select 0, %s19, %s17
  // Predicated region
  $region2: #{gcn_forward.3} parent=0 // pred_check
    _
  $region3: #{gcn_forward.3} parent=0 // pred_check_branch
    %22 = sbr.rel (0) target = $region5
  $region4: #{gcn_forward.3} parent=0 // pred_region
    _
  $region5: #{gcn_forward.3} parent=0 // pred_fallthru
    _
  // Predicated region
  $region6: #{gcn_forward.3} parent=0 // pred_check
    _
  $region7: #{gcn_forward.3} parent=0 // pred_check_branch
    %24 = sbr.rel (0) target = $region9
  $region8: #{gcn_forward.3} parent=0 // pred_region
    _
  $region9: #{gcn_forward.3} parent=0 // pred_fallthru
    _
  // Predicated region
  $region10: #{gcn_forward.3} parent=0 // pred_check
    _
  $region11: #{gcn_forward.3} parent=0 // pred_check_branch
    %26 = sbr.rel (0) target = $region13
  $region12: #{gcn_forward.3} parent=0 // pred_region
    _
  $region13: #{gcn_forward.3} parent=0 // pred_fallthru
    _
  // Predicated region
  $region14: #{gcn_forward.3} parent=0 // pred_check
    _
  $region15: #{gcn_forward.3} parent=0 // pred_check_branch
    %28 = sbr.rel (0) target = $region17
  $region16: #{gcn_forward.3} parent=0 // pred_region
    _
  $region17: #{gcn_forward.3} parent=0 // pred_fallthru
    _
  // Predicated region
  $region18: #{gcn_forward.3} parent=0 // pred_check
    _
  $region19: #{gcn_forward.3} parent=0 // pred_check_branch
    %30 = sbr.rel (0) target = $region21
  $region20: #{gcn_forward.3} parent=0 // pred_region
    _
  $region21: #{gcn_forward.3} parent=0 // pred_fallthru
    _
  // Predicated region
  $region22: #{gcn_forward.3} parent=0 // pred_check
    _
  $region23: #{gcn_forward.3} parent=0 // pred_check_branch
    %32 = sbr.rel (0) target = $region25
  $region24: #{gcn_forward.3} parent=0 // pred_region
    _
  $region25: #{gcn_forward.3} parent=0 // pred_fallthru
    _
  // Predicated region
  $region26: #{gcn_forward.3} parent=0 // pred_check
    _
  $region27: #{gcn_forward.3} parent=0 // pred_check_branch
    %34 = sbr.rel (0) target = $region29
  $region28: #{gcn_forward.3} parent=0 // pred_region
    _
  $region29: #{gcn_forward.3} parent=0 // pred_fallthru
    _
  // Predicated region
  $region30: #{gcn_forward.3} parent=0 // pred_check
    _
  $region31: #{gcn_forward.3} parent=0 // pred_check_branch
    %36 = sbr.rel (0) target = $region33
  $region32: #{gcn_forward.3} parent=0 // pred_region
    _
  $region33: #{gcn_forward.3} parent=0 // pred_fallthru
    _
  // Predicated region
  $region34: #{gcn_forward.3} parent=0 // pred_check
    _
  $region35: #{gcn_forward.3} parent=0 // pred_check_branch
    %38 = sbr.rel (0) target = $region37
  $region36: #{gcn_forward.3} parent=0 // pred_region
    _
  $region37: #{gcn_forward.3} parent=0 // pred_fallthru
    _
  // Predicated region
  $region38: #{gcn_forward.3} parent=0 // pred_check
    _
  $region39: #{gcn_forward.3} parent=0 // pred_check_branch
    %40 = sbr.rel (0) target = $region41
  $region40: #{gcn_forward.3} parent=0 // pred_region
    _
  $region41: #{gcn_forward.3} parent=0 // pred_fallthru
    _
  // Predicated region
  $region42: #{gcn_forward.3} parent=0 // pred_check
    _
  $region43: #{gcn_forward.3} parent=0 // pred_check_branch
    %42 = sbr.rel (0) target = $region45
  $region44: #{gcn_forward.3} parent=0 // pred_region
    _
  $region45: #{gcn_forward.3} parent=0 // pred_fallthru
    _
  // Predicated region
  $region46: #{gcn_forward.3} parent=0 // pred_check
    _
  $region47: #{gcn_forward.3} parent=0 // pred_check_branch
    %44 = sbr.rel (0) target = $region49
  $region48: #{gcn_forward.3} parent=0 // pred_region
    _
  $region49: #{gcn_forward.3} parent=0 // pred_fallthru
    _
  // Predicated region
  $region50: #{gcn_forward.3} parent=0 // pred_check
    _
  $region51: #{gcn_forward.3} parent=0 // pred_check_branch
    %46 = sbr.rel (0) target = $region53
  $region52: #{gcn_forward.3} parent=0 // pred_region
    _
  $region53: #{gcn_forward.3} parent=0 // pred_fallthru
    _
  // Predicated region
  $region54: #{gcn_forward.3} parent=0 // pred_check
    _
  $region55: #{gcn_forward.3} parent=0 // pred_check_branch
    %48 = sbr.rel (0) target = $region57
  $region56: #{gcn_forward.3} parent=0 // pred_region
    _
  $region57: #{gcn_forward.3} parent=0 // pred_fallthru
    _
  // Predicated region
  $region58: #{gcn_forward.3} parent=0 // pred_check
    _
  $region59: #{gcn_forward.3} parent=0 // pred_check_branch
    %50 = sbr.rel (0) target = $region61
  $region60: #{gcn_forward.3} parent=0 // pred_region
    _
  $region61: #{gcn_forward.3} parent=0 // pred_fallthru
    _
  // Predicated region
  $region62: #{gcn_forward.3} parent=0 // pred_check
    _
  $region63: #{gcn_forward.3} parent=0 // pred_check_branch
    %52 = sbr.rel (0) target = $region65
  $region64: #{gcn_forward.3} parent=0 // pred_region
    _
  $region65: #{gcn_forward.3} parent=0 // pred_fallthru
    _
  %v53 = vld [vmem:[%s0] sm:$0xff]
  %v54 = vld [vmem:[%s0 + $0x8] sm:$0xff]
  %v55 = vld [vmem:[%s0 + $0x10] sm:$0xff]
  %v56 = vld [vmem:[%s0 + $0x18] sm:$0xff]
  %v57 = vld [vmem:[%s5] sm:$0xff]
  %v58 = vld [vmem:[%s5 + $0x8] sm:$0xff]
  %v59 = vld [vmem:[%s6] sm:$0x1]
  %v61 = vperm.slane %v59, 0
  %vm63 = vcmask 130048
  %v65 = vsel %vm63, %v53, 0
  %v68 = vsel %vm63, %v54, 0
  %v71 = vsel %vm63, %v55, 0
  %v74 = vsel %vm63, %v56, 0
  %76 = vmatpush.msra.mxu0 0.0
  %77 = vmatpush.msra.mxu0 0.0
  %78 = vmatpush.msra.mxu0 0.0
  %79 = vmatpush.msra.mxu0 0.0
  %80 = vmatpush.msra.mxu0 0.0
  %81 = vmatpush.msra.mxu0 0.0
  %82 = vmatpush.msra.mxu0 0.0
  %83 = vmatpush.msra.mxu0 0.0
  %84 = vmatpush.msra.mxu0 0.0
  %85 = vmatpush.msra.mxu0 0.0
  %86 = vmatpush.msra.mxu0 0.0
  %87 = vmatpush.msra.mxu0 0.0
  %88 = vmatpush.msra.mxu0 0.0
  %89 = vmatpush.msra.mxu0 0.0
  %90 = vmatpush.msra.mxu0 %v58
  %91 = vmatpush.msra.mxu0 %v57
  %92 = vmatmul.f32.gmra.mxu0 %v65
  %v93 = vpop.f32.mrf.mxu0
  %v94 = vadd.f32 %v61, %v93
  %95 = vmatmul.f32.gmra.mxu0 %v68
  %v96 = vpop.f32.mrf.mxu0
  %v97 = vadd.f32 %v61, %v96
  %98 = vmatmul.f32.gmra.mxu0 %v71
  %v99 = vpop.f32.mrf.mxu0
  %v100 = vadd.f32 %v61, %v99
  %101 = vmatmul.f32.gmra.mxu0 %v74
  %v102 = vpop.f32.mrf.mxu0
  %v103 = vadd.f32 %v61, %v102
  %104 = vdwg.mxu0
  %v105 = vld [vmem:[%s1] sm:$0xff]
  %v106 = vld [vmem:[%s1 + $0x8] sm:$0xff]
  %v107 = vld [vmem:[%s1 + $0x10] sm:$0xff]
  %v108 = vld [vmem:[%s1 + $0x18] sm:$0xff]
  %v109 = vld [vmem:[%s1 + $0x20] sm:$0xff]
  %v110 = vld [vmem:[%s1 + $0x28] sm:$0xff]
  %v111 = vld [vmem:[%s1 + $0x30] sm:$0xff]
  %v112 = vld [vmem:[%s1 + $0x38] sm:$0xff]
  %v113 = vld [vmem:[%s2] sm:$0xff]
  %v114 = vld [vmem:[%s2 + $0x8] sm:$0xff]
  %v115 = vld [vmem:[%s2 + $0x10] sm:$0xff]
  %v116 = vld [vmem:[%s2 + $0x18] sm:$0xff]
  %v117 = vld [vmem:[%s2 + $0x20] sm:$0xff]
  %v118 = vld [vmem:[%s2 + $0x28] sm:$0xff]
  %v119 = vld [vmem:[%s2 + $0x30] sm:$0xff]
  %v120 = vld [vmem:[%s2 + $0x38] sm:$0xff]
  %v121 = vld [vmem:[%s3] sm:$0xff]
  %v122 = vld [vmem:[%s3 + $0x8] sm:$0xff]
  %v123 = vld [vmem:[%s3 + $0x10] sm:$0xff]
  %v124 = vld [vmem:[%s3 + $0x18] sm:$0xff]
  %v125 = vld [vmem:[%s3 + $0x20] sm:$0xff]
  %v126 = vld [vmem:[%s3 + $0x28] sm:$0xff]
  %v127 = vld [vmem:[%s3 + $0x30] sm:$0xff]
  %v128 = vld [vmem:[%s3 + $0x38] sm:$0xff]
  %v129 = vld [vmem:[%s4] sm:$0xff]
  %v130 = vld [vmem:[%s4 + $0x8] sm:$0xff]
  %v131 = vld [vmem:[%s4 + $0x10] sm:$0xff]
  %v132 = vld [vmem:[%s4 + $0x18] sm:$0xff]
  %v133 = vld [vmem:[%s7] sm:$0xff]
  %v134 = vld [vmem:[%s7 + $0x8] sm:$0xff]
  %v135 = vld [vmem:[%s7 + $0x10] sm:$0xff]
  %v136 = vld [vmem:[%s7 + $0x18] sm:$0xff]
  %v137 = vld [vmem:[%s8] sm:$0x1]
  %v138 = vld [vmem:[%s9] sm:$0xf]
  %v139 = vld [vmem:[%s10] sm:$0xff]
  %v140 = vld [vmem:[%s10 + $0x8] sm:$0xff]
  %v141 = vld [vmem:[%s10 + $0x10] sm:$0xff]
  %v142 = vld [vmem:[%s10 + $0x18] sm:$0xff]
  %v143 = vld [vmem:[%s10 + $0x20] sm:$0xff]
  %v144 = vld [vmem:[%s10 + $0x28] sm:$0xff]
  %v145 = vld [vmem:[%s10 + $0x30] sm:$0xff]
  %v146 = vld [vmem:[%s10 + $0x38] sm:$0xff]
  %v147 = vld [vmem:[%s11] sm:$0x1]
  %v149 = vperm.slane %v137, 0
  %vm151 = vcmask 261120
  %v153 = vsel %vm151, %v94, 0
  %v156 = vsel %vm151, %v97, 0
  %v159 = vsel %vm151, %v100, 0
  %v162 = vsel %vm151, %v103, 0
  %164 = vmatpush.msra.mxu0 0.0
  %165 = vmatpush.msra.mxu0 0.0
  %166 = vmatpush.msra.mxu0 0.0
  %167 = vmatpush.msra.mxu0 0.0
  %168 = vmatpush.msra.mxu0 0.0
  %169 = vmatpush.msra.mxu0 0.0
  %170 = vmatpush.msra.mxu0 0.0
  %171 = vmatpush.msra.mxu0 0.0
  %172 = vmatpush.msra.mxu0 0.0
  %173 = vmatpush.msra.mxu0 0.0
  %174 = vmatpush.msra.mxu0 0.0
  %175 = vmatpush.msra.mxu0 0.0
  %176 = vmatpush.msra.mxu0 %v136
  %177 = vmatpush.msra.mxu0 %v135
  %178 = vmatpush.msra.mxu0 %v134
  %179 = vmatpush.msra.mxu0 %v133
  %180 = vmatmul.f32.gmra.mxu0 %v153
  %v181 = vpop.f32.mrf.mxu0
  %v182 = vadd.f32 %v149, %v181
  %183 = vmatmul.f32.gmra.mxu0 %v156
  %v184 = vpop.f32.mrf.mxu0
  %v185 = vadd.f32 %v149, %v184
  %186 = vmatmul.f32.gmra.mxu0 %v159
  %v187 = vpop.f32.mrf.mxu0
  %v188 = vadd.f32 %v149, %v187
  %189 = vmatmul.f32.gmra.mxu0 %v162
  %v190 = vpop.f32.mrf.mxu0
  %v191 = vadd.f32 %v149, %v190
  %192 = vdwg.mxu0
  %vm193 = vcmask 31744
  %v195 = vsel %vm193, %v105, 0
  %v198 = vsel %vm193, %v106, 0
  %v201 = vsel %vm193, %v107, 0
  %v204 = vsel %vm193, %v108, 0
  %v207 = vsel %vm193, %v109, 0
  %v210 = vsel %vm193, %v110, 0
  %v213 = vsel %vm193, %v111, 0
  %v216 = vsel %vm193, %v112, 0
  %vm218 = vcmask 1043456
  %v220 = vsel %vm218, %v138, 0
  %222 = vmatpush.msra.mxu0 0.0
  %223 = vmatpush.msra.mxu0 0.0
  %224 = vmatpush.msra.mxu0 0.0
  %225 = vmatpush.msra.mxu0 0.0
  %226 = vmatpush.msra.mxu0 0.0
  %227 = vmatpush.msra.mxu0 0.0
  %228 = vmatpush.msra.mxu0 0.0
  %229 = vmatpush.msra.mxu0 0.0
  %230 = vmatpush.msra.mxu0 0.0
  %231 = vmatpush.msra.mxu0 0.0
  %232 = vmatpush.msra.mxu0 0.0
  %233 = vmatpush.msra.mxu0 0.0
  %234 = vmatpush.msra.mxu0 0.0
  %235 = vmatpush.msra.mxu0 0.0
  %236 = vmatpush.msra.mxu0 0.0
  %237 = vmatpush.msra.mxu0 %v220
  %238 = vmatmul.f32.gmra.mxu0 %v195
  %v239 = vpop.f32.mrf.mxu0
  %v240 = vadd.f32 0.0, %v239
  %241 = vmatmul.f32.gmra.mxu0 %v198
  %v242 = vpop.f32.mrf.mxu0
  %v243 = vadd.f32 0.0, %v242
  %244 = vmatmul.f32.gmra.mxu0 %v201
  %v245 = vpop.f32.mrf.mxu0
  %v246 = vadd.f32 0.0, %v245
  %247 = vmatmul.f32.gmra.mxu0 %v204
  %v248 = vpop.f32.mrf.mxu0
  %v249 = vadd.f32 0.0, %v248
  %250 = vmatmul.f32.gmra.mxu0 %v207
  %v251 = vpop.f32.mrf.mxu0
  %v252 = vadd.f32 0.0, %v251
  %253 = vmatmul.f32.gmra.mxu0 %v210
  %v254 = vpop.f32.mrf.mxu0
  %v255 = vadd.f32 0.0, %v254
  %256 = vmatmul.f32.gmra.mxu0 %v213
  %v257 = vpop.f32.mrf.mxu0
  %v258 = vadd.f32 0.0, %v257
  %259 = vmatmul.f32.gmra.mxu0 %v216
  %v260 = vpop.f32.mrf.mxu0
  %v261 = vadd.f32 0.0, %v260
  %262 = vdwg.mxu0
  %267 = vrot.lane.b32.xlu0 %v182, 64
  %v268 = vpop.permute.xlu0 %267
  %269 = vrot.lane.b32.xlu0 %v185, 64
  %v270 = vpop.permute.xlu0 %269
  %271 = vrot.lane.b32.xlu0 %v188, 64
  %v272 = vpop.permute.xlu0 %271
  %273 = vrot.lane.b32.xlu0 %v191, 64
  %v274 = vpop.permute.xlu0 %273
  %v280 = vsel %vm151, %v121, 0
  %v283 = vsel %vm151, %v122, 0
  %v286 = vsel %vm151, %v123, 0
  %v289 = vsel %vm151, %v124, 0
  %v292 = vsel %vm151, %v125, 0
  %v295 = vsel %vm151, %v126, 0
  %v298 = vsel %vm151, %v127, 0
  %v301 = vsel %vm151, %v128, 0
  %303 = vmatpush.msra.mxu0 0.0
  %304 = vmatpush.msra.mxu0 0.0
  %305 = vmatpush.msra.mxu0 0.0
  %306 = vmatpush.msra.mxu0 0.0
  %307 = vmatpush.msra.mxu0 0.0
  %308 = vmatpush.msra.mxu0 0.0
  %309 = vmatpush.msra.mxu0 0.0
  %310 = vmatpush.msra.mxu0 0.0
  %311 = vmatpush.msra.mxu0 0.0
  %312 = vmatpush.msra.mxu0 0.0
  %313 = vmatpush.msra.mxu0 0.0
  %314 = vmatpush.msra.mxu0 0.0
  %315 = vmatpush.msra.mxu0 %v274
  %316 = vmatpush.msra.mxu0 %v272
  %317 = vmatpush.msra.mxu0 %v270
  %318 = vmatpush.msra.mxu0 %v268
  %319 = vmatmul.f32.gmra.mxu0 %v280
  %v320 = vpop.f32.mrf.mxu0
  %v321 = vadd.f32 0.0, %v320
  %322 = vmatmul.f32.gmra.mxu0 %v283
  %v323 = vpop.f32.mrf.mxu0
  %v324 = vadd.f32 0.0, %v323
  %325 = vmatmul.f32.gmra.mxu0 %v286
  %v326 = vpop.f32.mrf.mxu0
  %v327 = vadd.f32 0.0, %v326
  %328 = vmatmul.f32.gmra.mxu0 %v289
  %v329 = vpop.f32.mrf.mxu0
  %v330 = vadd.f32 0.0, %v329
  %331 = vmatmul.f32.gmra.mxu0 %v292
  %v332 = vpop.f32.mrf.mxu0
  %v333 = vadd.f32 0.0, %v332
  %334 = vmatmul.f32.gmra.mxu0 %v295
  %v335 = vpop.f32.mrf.mxu0
  %v336 = vadd.f32 0.0, %v335
  %337 = vmatmul.f32.gmra.mxu0 %v298
  %v338 = vpop.f32.mrf.mxu0
  %v339 = vadd.f32 0.0, %v338
  %340 = vmatmul.f32.gmra.mxu0 %v301
  %v341 = vpop.f32.mrf.mxu0
  %v342 = vadd.f32 0.0, %v341
  %343 = vdwg.mxu0
  %v345 = vsel %vm151, %v113, 0
  %v348 = vsel %vm151, %v114, 0
  %v351 = vsel %vm151, %v115, 0
  %v354 = vsel %vm151, %v116, 0
  %v357 = vsel %vm151, %v117, 0
  %v360 = vsel %vm151, %v118, 0
  %v363 = vsel %vm151, %v119, 0
  %v366 = vsel %vm151, %v120, 0
  %368 = vmatpush.msra.mxu0 0.0
  %369 = vmatpush.msra.mxu0 0.0
  %370 = vmatpush.msra.mxu0 0.0
  %371 = vmatpush.msra.mxu0 0.0
  %372 = vmatpush.msra.mxu0 0.0
  %373 = vmatpush.msra.mxu0 0.0
  %374 = vmatpush.msra.mxu0 0.0
  %375 = vmatpush.msra.mxu0 0.0
  %376 = vmatpush.msra.mxu0 0.0
  %377 = vmatpush.msra.mxu0 0.0
  %378 = vmatpush.msra.mxu0 0.0
  %379 = vmatpush.msra.mxu0 0.0
  %380 = vmatpush.msra.mxu0 %v191
  %381 = vmatpush.msra.mxu0 %v188
  %382 = vmatpush.msra.mxu0 %v185
  %383 = vmatpush.msra.mxu0 %v182
  %384 = vmatmul.f32.gmra.mxu0 %v345
  %v385 = vpop.f32.mrf.mxu0
  %v386 = vadd.f32 %v321, %v385
  %387 = vmatmul.f32.gmra.mxu0 %v348
  %v388 = vpop.f32.mrf.mxu0
  %v389 = vadd.f32 %v324, %v388
  %390 = vmatmul.f32.gmra.mxu0 %v351
  %v391 = vpop.f32.mrf.mxu0
  %v392 = vadd.f32 %v327, %v391
  %393 = vmatmul.f32.gmra.mxu0 %v354
  %v394 = vpop.f32.mrf.mxu0
  %v395 = vadd.f32 %v330, %v394
  %396 = vmatmul.f32.gmra.mxu0 %v357
  %v397 = vpop.f32.mrf.mxu0
  %v398 = vadd.f32 %v333, %v397
  %399 = vmatmul.f32.gmra.mxu0 %v360
  %v400 = vpop.f32.mrf.mxu0
  %v401 = vadd.f32 %v336, %v400
  %402 = vmatmul.f32.gmra.mxu0 %v363
  %v403 = vpop.f32.mrf.mxu0
  %v404 = vadd.f32 %v339, %v403
  %405 = vmatmul.f32.gmra.mxu0 %v366
  %v406 = vpop.f32.mrf.mxu0
  %v407 = vadd.f32 %v342, %v406
  %408 = vdwg.mxu0
  %v409 = vadd.f32 %v386, %v240
  %v410 = vadd.f32 %v389, %v243
  %v411 = vadd.f32 %v392, %v246
  %v412 = vadd.f32 %v395, %v249
  %v413 = vadd.f32 %v398, %v252
  %v414 = vadd.f32 %v401, %v255
  %v415 = vadd.f32 %v404, %v258
  %v416 = vadd.f32 %v407, %v261
  %vm417 = vcmp.gt.f32.partialorder %v409, 0.0
  %vm418 = vcmp.gt.f32.partialorder %v410, 0.0
  %vm419 = vcmp.gt.f32.partialorder %v411, 0.0
  %vm420 = vcmp.gt.f32.partialorder %v412, 0.0
  %vm421 = vcmp.gt.f32.partialorder %v413, 0.0
  %vm422 = vcmp.gt.f32.partialorder %v414, 0.0
  %vm423 = vcmp.gt.f32.partialorder %v415, 0.0
  %vm424 = vcmp.gt.f32.partialorder %v416, 0.0
  %v425 = vmul.f32 %v409, 0.2
  %v426 = vmul.f32 %v410, 0.2
  %v427 = vmul.f32 %v411, 0.2
  %v428 = vmul.f32 %v412, 0.2
  %v429 = vmul.f32 %v413, 0.2
  %v430 = vmul.f32 %v414, 0.2
  %v431 = vmul.f32 %v415, 0.2
  %v432 = vmul.f32 %v416, 0.2
  %v433 = vsel %vm417, %v409, %v425
  %v434 = vsel %vm418, %v410, %v426
  %v435 = vsel %vm419, %v411, %v427
  %v436 = vsel %vm420, %v412, %v428
  %v437 = vsel %vm421, %v413, %v429
  %v438 = vsel %vm422, %v414, %v430
  %v439 = vsel %vm423, %v415, %v431
  %v440 = vsel %vm424, %v416, %v432
  %vm441 = vcmask 523264
  %v443 = vsel %vm441, %v433, 0
  %v446 = vsel %vm441, %v434, 0
  %v449 = vsel %vm441, %v435, 0
  %v452 = vsel %vm441, %v436, 0
  %v455 = vsel %vm441, %v437, 0
  %v458 = vsel %vm441, %v438, 0
  %v461 = vsel %vm441, %v439, 0
  %v464 = vsel %vm441, %v440, 0
  %466 = vmatpush.msra.mxu0 0.0
  %467 = vmatpush.msra.mxu0 0.0
  %468 = vmatpush.msra.mxu0 0.0
  %469 = vmatpush.msra.mxu0 0.0
  %470 = vmatpush.msra.mxu0 0.0
  %471 = vmatpush.msra.mxu0 0.0
  %472 = vmatpush.msra.mxu0 0.0
  %473 = vmatpush.msra.mxu0 0.0
  %474 = vmatpush.msra.mxu0 %v146
  %475 = vmatpush.msra.mxu0 %v145
  %476 = vmatpush.msra.mxu0 %v144
  %477 = vmatpush.msra.mxu0 %v143
  %478 = vmatpush.msra.mxu0 %v142
  %479 = vmatpush.msra.mxu0 %v141
  %480 = vmatpush.msra.mxu0 %v140
  %481 = vmatpush.msra.mxu0 %v139
  %482 = vmatmul.f32.gmra.mxu0 %v443
  %v483 = vpop.f32.mrf.mxu0
  %v484 = vadd.f32 0.0, %v483
  %485 = vmatmul.f32.gmra.mxu0 %v446
  %v486 = vpop.f32.mrf.mxu0
  %v487 = vadd.f32 0.0, %v486
  %488 = vmatmul.f32.gmra.mxu0 %v449
  %v489 = vpop.f32.mrf.mxu0
  %v490 = vadd.f32 0.0, %v489
  %491 = vmatmul.f32.gmra.mxu0 %v452
  %v492 = vpop.f32.mrf.mxu0
  %v493 = vadd.f32 0.0, %v492
  %494 = vmatmul.f32.gmra.mxu0 %v455
  %v495 = vpop.f32.mrf.mxu0
  %v496 = vadd.f32 0.0, %v495
  %497 = vmatmul.f32.gmra.mxu0 %v458
  %v498 = vpop.f32.mrf.mxu0
  %v499 = vadd.f32 0.0, %v498
  %500 = vmatmul.f32.gmra.mxu0 %v461
  %v501 = vpop.f32.mrf.mxu0
  %v502 = vadd.f32 0.0, %v501
  %503 = vmatmul.f32.gmra.mxu0 %v464
  %v504 = vpop.f32.mrf.mxu0
  %v505 = vadd.f32 0.0, %v504
  %506 = vdwg.mxu0
  %v508 = vsel %vm441, %v129, 0
  %v511 = vsel %vm441, %v130, 0
  %v514 = vsel %vm441, %v131, 0
  %v517 = vsel %vm441, %v132, 0
  %519 = vmatpush.msra.mxu0 0.0
  %520 = vmatpush.msra.mxu0 0.0
  %521 = vmatpush.msra.mxu0 0.0
  %522 = vmatpush.msra.mxu0 0.0
  %523 = vmatpush.msra.mxu0 0.0
  %524 = vmatpush.msra.mxu0 0.0
  %525 = vmatpush.msra.mxu0 0.0
  %526 = vmatpush.msra.mxu0 0.0
  %527 = vmatpush.msra.mxu0 %v120
  %528 = vmatpush.msra.mxu0 %v119
  %529 = vmatpush.msra.mxu0 %v118
  %530 = vmatpush.msra.mxu0 %v117
  %531 = vmatpush.msra.mxu0 %v116
  %532 = vmatpush.msra.mxu0 %v115
  %533 = vmatpush.msra.mxu0 %v114
  %534 = vmatpush.msra.mxu0 %v113
  %535 = vmatmul.f32.gmra.mxu0 %v508
  %v536 = vpop.f32.mrf.mxu0
  %v537 = vadd.f32 0.0, %v536
  %538 = vmatmul.f32.gmra.mxu0 %v511
  %v539 = vpop.f32.mrf.mxu0
  %v540 = vadd.f32 0.0, %v539
  %541 = vmatmul.f32.gmra.mxu0 %v514
  %v542 = vpop.f32.mrf.mxu0
  %v543 = vadd.f32 0.0, %v542
  %544 = vmatmul.f32.gmra.mxu0 %v517
  %v545 = vpop.f32.mrf.mxu0
  %v546 = vadd.f32 0.0, %v545
  %547 = vdwg.mxu0
  %vm548 = vcmp.gt.f32.partialorder %v537, 0.5
  %vm549 = vcmp.gt.f32.partialorder %v540, 0.5
  %vm550 = vcmp.gt.f32.partialorder %v543, 0.5
  %vm551 = vcmp.gt.f32.partialorder %v546, 0.5
  %553 = vset.pattern.permute.xlu0 0
  %554 = vperm.xlu0 %553, %v484
  %v555 = vpop.permute.xlu0 %554
  %558 = vset.pattern.permute.xlu0 0
  %559 = vperm.xlu0 %558, %v487
  %v560 = vpop.permute.xlu0 %559
  %563 = vset.pattern.permute.xlu0 0
  %564 = vperm.xlu0 %563, %v490
  %v565 = vpop.permute.xlu0 %564
  %568 = vset.pattern.permute.xlu0 0
  %569 = vperm.xlu0 %568, %v493
  %v570 = vpop.permute.xlu0 %569
  %573 = vset.pattern.permute.xlu0 0
  %574 = vperm.xlu0 %573, %v496
  %v575 = vpop.permute.xlu0 %574
  %578 = vset.pattern.permute.xlu0 0
  %579 = vperm.xlu0 %578, %v499
  %v580 = vpop.permute.xlu0 %579
  %583 = vset.pattern.permute.xlu0 0
  %584 = vperm.xlu0 %583, %v502
  %v585 = vpop.permute.xlu0 %584
  %588 = vset.pattern.permute.xlu0 0
  %589 = vperm.xlu0 %588, %v505
  %v590 = vpop.permute.xlu0 %589
  %v592 = vmul.f32 %v555, %v113
  %v593 = vmul.f32 %v560, %v114
  %v594 = vmul.f32 %v565, %v115
  %v595 = vmul.f32 %v570, %v116
  %v596 = vmul.f32 %v575, %v117
  %v597 = vmul.f32 %v580, %v118
  %v598 = vmul.f32 %v585, %v119
  %v599 = vmul.f32 %v590, %v120
  %600 = vmatpush.msra.mxu0 0.0
  %601 = vmatpush.msra.mxu0 0.0
  %602 = vmatpush.msra.mxu0 0.0
  %603 = vmatpush.msra.mxu0 0.0
  %604 = vmatpush.msra.mxu0 0.0
  %605 = vmatpush.msra.mxu0 0.0
  %606 = vmatpush.msra.mxu0 0.0
  %607 = vmatpush.msra.mxu0 0.0
  %608 = vmatpush.msra.mxu0 %v599
  %609 = vmatpush.msra.mxu0 %v598
  %610 = vmatpush.msra.mxu0 %v597
  %611 = vmatpush.msra.mxu0 %v596
  %612 = vmatpush.msra.mxu0 %v595
  %613 = vmatpush.msra.mxu0 %v594
  %614 = vmatpush.msra.mxu0 %v593
  %615 = vmatpush.msra.mxu0 %v592
  %616 = vmatmul.f32.gmra.mxu0 %v508
  %v617 = vpop.f32.mrf.mxu0
  %v618 = vadd.f32 0.0, %v617
  %619 = vmatmul.f32.gmra.mxu0 %v511
  %v620 = vpop.f32.mrf.mxu0
  %v621 = vadd.f32 0.0, %v620
  %622 = vmatmul.f32.gmra.mxu0 %v514
  %v623 = vpop.f32.mrf.mxu0
  %v624 = vadd.f32 0.0, %v623
  %625 = vmatmul.f32.gmra.mxu0 %v517
  %v626 = vpop.f32.mrf.mxu0
  %v627 = vadd.f32 0.0, %v626
  %628 = vdwg.mxu0
  %v629 = vsel %vm548, %v618, -1e+30
  %v630 = vsel %vm549, %v621, -1e+30
  %v631 = vsel %vm550, %v624, -1e+30
  %v632 = vsel %vm551, %v627, -1e+30
  %v633 = vsel %vm151, %v629, -inf
  %634 = vmax.xlane.f32.xlu0 %v633
  %v635 = vpop.xlane.xlu0 %634
  %v636 = vsel %vm151, %v630, -inf
  %637 = vmax.xlane.f32.xlu0 %v636
  %v638 = vpop.xlane.xlu0 %637
  %v639 = vsel %vm151, %v631, -inf
  %640 = vmax.xlane.f32.xlu0 %v639
  %v641 = vpop.xlane.xlu0 %640
  %v642 = vsel %vm151, %v632, -inf
  %643 = vmax.xlane.f32.xlu0 %v642
  %v644 = vpop.xlane.xlu0 %643
  %v645 = vsub.f32 %v629, %v635
  %v646 = vsub.f32 %v630, %v638
  %v647 = vsub.f32 %v631, %v641
  %v648 = vsub.f32 %v632, %v644
  %v649 = vmul.f32 %v645, 1.442695
  %v650 = vpow.pop %v649
  %v651 = vmul.f32 %v646, 1.442695
  %v652 = vpow.pop %v651
  %v653 = vmul.f32 %v647, 1.442695
  %v654 = vpow.pop %v653
  %v655 = vmul.f32 %v648, 1.442695
  %v656 = vpow.pop %v655
  %v657 = vsel %vm548, %v650, 0.0
  %v658 = vsel %vm549, %v652, 0.0
  %v659 = vsel %vm550, %v654, 0.0
  %v660 = vsel %vm551, %v656, 0.0
  %v661 = vsel %vm151, %v657, 0.0
  %662 = vadd.xlane.f32.xlu0 %v661
  %v663 = vpop.xlane.xlu0 %662
  %v664 = vsel %vm151, %v658, 0.0
  %665 = vadd.xlane.f32.xlu0 %v664
  %v666 = vpop.xlane.xlu0 %665
  %v667 = vsel %vm151, %v659, 0.0
  %668 = vadd.xlane.f32.xlu0 %v667
  %v669 = vpop.xlane.xlu0 %668
  %v670 = vsel %vm151, %v660, 0.0
  %671 = vadd.xlane.f32.xlu0 %v670
  %v672 = vpop.xlane.xlu0 %671
  %v673 = vadd.f32 %v663, 1e-16
  %v674 = vadd.f32 %v666, 1e-16
  %v675 = vadd.f32 %v669, 1e-16
  %v676 = vadd.f32 %v672, 1e-16
  %v677 = vrcp.pop %v673
  %v678 = vrcp.pop %v674
  %v679 = vrcp.pop %v675
  %v680 = vrcp.pop %v676
  %v681 = vmul.f32 %v657, %v677
  %v682 = vmul.f32 %v658, %v678
  %v683 = vmul.f32 %v659, %v679
  %v684 = vmul.f32 %v660, %v680
  %v686 = vsel %vm151, %v681, 0
  %v689 = vsel %vm151, %v682, 0
  %v692 = vsel %vm151, %v683, 0
  %v695 = vsel %vm151, %v684, 0
  %697 = vmatpush.msra.mxu0 0.0
  %698 = vmatpush.msra.mxu0 0.0
  %699 = vmatpush.msra.mxu0 0.0
  %700 = vmatpush.msra.mxu0 0.0
  %701 = vmatpush.msra.mxu0 0.0
  %702 = vmatpush.msra.mxu0 0.0
  %703 = vmatpush.msra.mxu0 0.0
  %704 = vmatpush.msra.mxu0 0.0
  %705 = vmatpush.msra.mxu0 0.0
  %706 = vmatpush.msra.mxu0 0.0
  %707 = vmatpush.msra.mxu0 0.0
  %708 = vmatpush.msra.mxu0 0.0
  %709 = vmatpush.msra.mxu0 %v191
  %710 = vmatpush.msra.mxu0 %v188
  %711 = vmatpush.msra.mxu0 %v185
  %712 = vmatpush.msra.mxu0 %v182
  %713 = vmatmul.f32.gmra.mxu0 %v686
  %v714 = vpop.f32.mrf.mxu0
  %v715 = vadd.f32 0.0, %v714
  %716 = vmatmul.f32.gmra.mxu0 %v689
  %v717 = vpop.f32.mrf.mxu0
  %v718 = vadd.f32 0.0, %v717
  %719 = vmatmul.f32.gmra.mxu0 %v692
  %v720 = vpop.f32.mrf.mxu0
  %v721 = vadd.f32 0.0, %v720
  %722 = vmatmul.f32.gmra.mxu0 %v695
  %v723 = vpop.f32.mrf.mxu0
  %v724 = vadd.f32 0.0, %v723
  %725 = vdwg.mxu0
  %726 = vset.pattern.permute.xlu0 1
  %727 = vperm.xlu0 %726, %v484
  %v728 = vpop.permute.xlu0 %727
  %730 = vset.pattern.permute.xlu0 1
  %731 = vperm.xlu0 %730, %v487
  %v732 = vpop.permute.xlu0 %731
  %734 = vset.pattern.permute.xlu0 1
  %735 = vperm.xlu0 %734, %v490
  %v736 = vpop.permute.xlu0 %735
  %738 = vset.pattern.permute.xlu0 1
  %739 = vperm.xlu0 %738, %v493
  %v740 = vpop.permute.xlu0 %739
  %742 = vset.pattern.permute.xlu0 1
  %743 = vperm.xlu0 %742, %v496
  %v744 = vpop.permute.xlu0 %743
  %746 = vset.pattern.permute.xlu0 1
  %747 = vperm.xlu0 %746, %v499
  %v748 = vpop.permute.xlu0 %747
  %750 = vset.pattern.permute.xlu0 1
  %751 = vperm.xlu0 %750, %v502
  %v752 = vpop.permute.xlu0 %751
  %754 = vset.pattern.permute.xlu0 1
  %755 = vperm.xlu0 %754, %v505
  %v756 = vpop.permute.xlu0 %755
  %v758 = vmul.f32 %v728, %v113
  %v759 = vmul.f32 %v732, %v114
  %v760 = vmul.f32 %v736, %v115
  %v761 = vmul.f32 %v740, %v116
  %v762 = vmul.f32 %v744, %v117
  %v763 = vmul.f32 %v748, %v118
  %v764 = vmul.f32 %v752, %v119
  %v765 = vmul.f32 %v756, %v120
  %766 = vmatpush.msra.mxu0 0.0
  %767 = vmatpush.msra.mxu0 0.0
  %768 = vmatpush.msra.mxu0 0.0
  %769 = vmatpush.msra.mxu0 0.0
  %770 = vmatpush.msra.mxu0 0.0
  %771 = vmatpush.msra.mxu0 0.0
  %772 = vmatpush.msra.mxu0 0.0
  %773 = vmatpush.msra.mxu0 0.0
  %774 = vmatpush.msra.mxu0 %v765
  %775 = vmatpush.msra.mxu0 %v764
  %776 = vmatpush.msra.mxu0 %v763
  %777 = vmatpush.msra.mxu0 %v762
  %778 = vmatpush.msra.mxu0 %v761
  %779 = vmatpush.msra.mxu0 %v760
  %780 = vmatpush.msra.mxu0 %v759
  %781 = vmatpush.msra.mxu0 %v758
  %782 = vmatmul.f32.gmra.mxu0 %v508
  %v783 = vpop.f32.mrf.mxu0
  %v784 = vadd.f32 0.0, %v783
  %785 = vmatmul.f32.gmra.mxu0 %v511
  %v786 = vpop.f32.mrf.mxu0
  %v787 = vadd.f32 0.0, %v786
  %788 = vmatmul.f32.gmra.mxu0 %v514
  %v789 = vpop.f32.mrf.mxu0
  %v790 = vadd.f32 0.0, %v789
  %791 = vmatmul.f32.gmra.mxu0 %v517
  %v792 = vpop.f32.mrf.mxu0
  %v793 = vadd.f32 0.0, %v792
  %794 = vdwg.mxu0
  %v795 = vsel %vm548, %v784, -1e+30
  %v796 = vsel %vm549, %v787, -1e+30
  %v797 = vsel %vm550, %v790, -1e+30
  %v798 = vsel %vm551, %v793, -1e+30
  %v799 = vsel %vm151, %v795, -inf
  %800 = vmax.xlane.f32.xlu0 %v799
  %v801 = vpop.xlane.xlu0 %800
  %v802 = vsel %vm151, %v796, -inf
  %803 = vmax.xlane.f32.xlu0 %v802
  %v804 = vpop.xlane.xlu0 %803
  %v805 = vsel %vm151, %v797, -inf
  %806 = vmax.xlane.f32.xlu0 %v805
  %v807 = vpop.xlane.xlu0 %806
  %v808 = vsel %vm151, %v798, -inf
  %809 = vmax.xlane.f32.xlu0 %v808
  %v810 = vpop.xlane.xlu0 %809
  %v811 = vsub.f32 %v795, %v801
  %v812 = vsub.f32 %v796, %v804
  %v813 = vsub.f32 %v797, %v807
  %v814 = vsub.f32 %v798, %v810
  %v815 = vmul.f32 %v811, 1.442695
  %v816 = vpow.pop %v815
  %v817 = vmul.f32 %v812, 1.442695
  %v818 = vpow.pop %v817
  %v819 = vmul.f32 %v813, 1.442695
  %v820 = vpow.pop %v819
  %v821 = vmul.f32 %v814, 1.442695
  %v822 = vpow.pop %v821
  %v823 = vsel %vm548, %v816, 0.0
  %v824 = vsel %vm549, %v818, 0.0
  %v825 = vsel %vm550, %v820, 0.0
  %v826 = vsel %vm551, %v822, 0.0
  %v827 = vsel %vm151, %v823, 0.0
  %828 = vadd.xlane.f32.xlu0 %v827
  %v829 = vpop.xlane.xlu0 %828
  %v830 = vsel %vm151, %v824, 0.0
  %831 = vadd.xlane.f32.xlu0 %v830
  %v832 = vpop.xlane.xlu0 %831
  %v833 = vsel %vm151, %v825, 0.0
  %834 = vadd.xlane.f32.xlu0 %v833
  %v835 = vpop.xlane.xlu0 %834
  %v836 = vsel %vm151, %v826, 0.0
  %837 = vadd.xlane.f32.xlu0 %v836
  %v838 = vpop.xlane.xlu0 %837
  %v839 = vadd.f32 %v829, 1e-16
  %v840 = vadd.f32 %v832, 1e-16
  %v841 = vadd.f32 %v835, 1e-16
  %v842 = vadd.f32 %v838, 1e-16
  %v843 = vrcp.pop %v839
  %v844 = vrcp.pop %v840
  %v845 = vrcp.pop %v841
  %v846 = vrcp.pop %v842
  %v847 = vmul.f32 %v823, %v843
  %v848 = vmul.f32 %v824, %v844
  %v849 = vmul.f32 %v825, %v845
  %v850 = vmul.f32 %v826, %v846
  %851 = vrot.lane.b32.xlu0 %v182, 96
  %v852 = vpop.permute.xlu0 %851
  %853 = vrot.lane.b32.xlu0 %v185, 96
  %v854 = vpop.permute.xlu0 %853
  %855 = vrot.lane.b32.xlu0 %v188, 96
  %v856 = vpop.permute.xlu0 %855
  %857 = vrot.lane.b32.xlu0 %v191, 96
  %v858 = vpop.permute.xlu0 %857
  %v864 = vsel %vm151, %v847, 0
  %v867 = vsel %vm151, %v848, 0
  %v870 = vsel %vm151, %v849, 0
  %v873 = vsel %vm151, %v850, 0
  %875 = vmatpush.msra.mxu0 0.0
  %876 = vmatpush.msra.mxu0 0.0
  %877 = vmatpush.msra.mxu0 0.0
  %878 = vmatpush.msra.mxu0 0.0
  %879 = vmatpush.msra.mxu0 0.0
  %880 = vmatpush.msra.mxu0 0.0
  %881 = vmatpush.msra.mxu0 0.0
  %882 = vmatpush.msra.mxu0 0.0
  %883 = vmatpush.msra.mxu0 0.0
  %884 = vmatpush.msra.mxu0 0.0
  %885 = vmatpush.msra.mxu0 0.0
  %886 = vmatpush.msra.mxu0 0.0
  %887 = vmatpush.msra.mxu0 %v858
  %888 = vmatpush.msra.mxu0 %v856
  %889 = vmatpush.msra.mxu0 %v854
  %890 = vmatpush.msra.mxu0 %v852
  %891 = vmatmul.f32.gmra.mxu0 %v864
  %v892 = vpop.f32.mrf.mxu0
  %v893 = vadd.f32 0.0, %v892
  %894 = vmatmul.f32.gmra.mxu0 %v867
  %v895 = vpop.f32.mrf.mxu0
  %v896 = vadd.f32 0.0, %v895
  %897 = vmatmul.f32.gmra.mxu0 %v870
  %v898 = vpop.f32.mrf.mxu0
  %v899 = vadd.f32 0.0, %v898
  %900 = vmatmul.f32.gmra.mxu0 %v873
  %v901 = vpop.f32.mrf.mxu0
  %v902 = vadd.f32 0.0, %v901
  %903 = vdwg.mxu0
  %908 = vrot.lane.b32.xlu0 %v893, 32
  %v909 = vpop.permute.xlu0 %908
  %910 = vrot.lane.b32.xlu0 %v896, 32
  %v911 = vpop.permute.xlu0 %910
  %912 = vrot.lane.b32.xlu0 %v899, 32
  %v913 = vpop.permute.xlu0 %912
  %914 = vrot.lane.b32.xlu0 %v902, 32
  %v915 = vpop.permute.xlu0 %914
  %v920 = vsel %vm151, %v715, %v909
  %v921 = vsel %vm151, %v718, %v911
  %v922 = vsel %vm151, %v721, %v913
  %v923 = vsel %vm151, %v724, %v915
  %v925 = vperm.slane %v147, 0
  %v927 = vadd.f32 %v920, %v925
  %v928 = vadd.f32 %v921, %v925
  %v929 = vadd.f32 %v922, %v925
  %v930 = vadd.f32 %v923, %v925
  %v931 = vld [vmem:[%s12] sm:$0x1]
  %v932 = vld [vmem:[%s13] sm:$0x1]
  %v933 = vld [vmem:[%s14] sm:$0x1]
  %v934 = vld [vmem:[%s15] sm:$0x1]
  %v936 = vperm.slane %v933, 0
  %v938 = vsub.f32 %v927, %v936
  %v939 = vsub.f32 %v928, %v936
  %v940 = vsub.f32 %v929, %v936
  %v941 = vsub.f32 %v930, %v936
  %v942 = vadd.f32 %v934, 1e-05
  %v943 = vrsqrt.pop %v942
  %v944 = vmul.f32 %v943, %v942
  %v945 = vmul.f32 %v944, %v943
  %v946 = vmul.f32 0.5, %v945
  %v947 = vsub.f32 1.5, %v946
  %v948 = vmul.f32 %v943, %v947
  %vm949 = vweird.f32 %v942
  %vm950 = vweird.f32 %v943
  %vm951 = vmor %vm949, %vm950
  %v952 = vsel %vm951, %v943, %v948
  %v954 = vperm.slane %v952, 0
  %v956 = vmul.f32 %v938, %v954
  %v957 = vmul.f32 %v939, %v954
  %v958 = vmul.f32 %v940, %v954
  %v959 = vmul.f32 %v941, %v954
  %v961 = vperm.slane %v931, 0
  %v963 = vmul.f32 %v956, %v961
  %v964 = vmul.f32 %v957, %v961
  %v965 = vmul.f32 %v958, %v961
  %v966 = vmul.f32 %v959, %v961
  %v968 = vperm.slane %v932, 0
  %v970 = vadd.f32 %v963, %v968
  %v971 = vadd.f32 %v964, %v968
  %v972 = vadd.f32 %v965, %v968
  %v973 = vadd.f32 %v966, %v968
  %v974 = vxor.u32 %v970, 2147483648
  %v975 = vxor.u32 %v971, 2147483648
  %v976 = vxor.u32 %v972, 2147483648
  %v977 = vxor.u32 %v973, 2147483648
  %v978 = vmul.f32 %v974, 1.442695
  %v979 = vpow.pop %v978
  %v980 = vmul.f32 %v975, 1.442695
  %v981 = vpow.pop %v980
  %v982 = vmul.f32 %v976, 1.442695
  %v983 = vpow.pop %v982
  %v984 = vmul.f32 %v977, 1.442695
  %v985 = vpow.pop %v984
  %v986 = vadd.f32 %v979, 1.0
  %v987 = vadd.f32 %v981, 1.0
  %v988 = vadd.f32 %v983, 1.0
  %v989 = vadd.f32 %v985, 1.0
  %v990 = vrcp.pop %v986
  %v991 = vmul.f32 %v986, %v990
  %v992 = vsub.f32 1.0, %v991
  %v993 = vmul.f32 %v990, %v992
  %v994 = vadd.f32 %v990, %v993
  %vm995 = vweird.f32 %v986
  %vm996 = vweird.f32 %v990
  %vm997 = vmor %vm995, %vm996
  %v998 = vsel %vm997, %v990, %v994
  %v999 = vand.u32 2147483647, %v986
  %vm1000 = vcmp.eq.f32.partialorder %v999, 8.507059e+37
  %v1001 = vand.u32 %v986, 2147483648
  %v1002 = vor.u32 1.1754944e-38, %v1001
  %v1003 = vsel %vm1000, %v1002, %v998
  %v1004 = vmul.f32 1.0, %v1003
  %v1005 = vrcp.pop %v987
  %v1006 = vmul.f32 %v987, %v1005
  %v1007 = vsub.f32 1.0, %v1006
  %v1008 = vmul.f32 %v1005, %v1007
  %v1009 = vadd.f32 %v1005, %v1008
  %vm1010 = vweird.f32 %v987
  %vm1011 = vweird.f32 %v1005
  %vm1012 = vmor %vm1010, %vm1011
  %v1013 = vsel %vm1012, %v1005, %v1009
  %v1014 = vand.u32 2147483647, %v987
  %vm1015 = vcmp.eq.f32.partialorder %v1014, 8.507059e+37
  %v1016 = vand.u32 %v987, 2147483648
  %v1017 = vor.u32 1.1754944e-38, %v1016
  %v1018 = vsel %vm1015, %v1017, %v1013
  %v1019 = vmul.f32 1.0, %v1018
  %v1020 = vrcp.pop %v988
  %v1021 = vmul.f32 %v988, %v1020
  %v1022 = vsub.f32 1.0, %v1021
  %v1023 = vmul.f32 %v1020, %v1022
  %v1024 = vadd.f32 %v1020, %v1023
  %vm1025 = vweird.f32 %v988
  %vm1026 = vweird.f32 %v1020
  %vm1027 = vmor %vm1025, %vm1026
  %v1028 = vsel %vm1027, %v1020, %v1024
  %v1029 = vand.u32 2147483647, %v988
  %vm1030 = vcmp.eq.f32.partialorder %v1029, 8.507059e+37
  %v1031 = vand.u32 %v988, 2147483648
  %v1032 = vor.u32 1.1754944e-38, %v1031
  %v1033 = vsel %vm1030, %v1032, %v1028
  %v1034 = vmul.f32 1.0, %v1033
  %v1035 = vrcp.pop %v989
  %v1036 = vmul.f32 %v989, %v1035
  %v1037 = vsub.f32 1.0, %v1036
  %v1038 = vmul.f32 %v1035, %v1037
  %v1039 = vadd.f32 %v1035, %v1038
  %vm1040 = vweird.f32 %v989
  %vm1041 = vweird.f32 %v1035
  %vm1042 = vmor %vm1040, %vm1041
  %v1043 = vsel %vm1042, %v1035, %v1039
  %v1044 = vand.u32 2147483647, %v989
  %vm1045 = vcmp.eq.f32.partialorder %v1044, 8.507059e+37
  %v1046 = vand.u32 %v989, 2147483648
  %v1047 = vor.u32 1.1754944e-38, %v1046
  %v1048 = vsel %vm1045, %v1047, %v1043
  %v1049 = vmul.f32 1.0, %v1048
  %v1050 = vmul.f32 %v970, %v1004
  %v1051 = vmul.f32 %v971, %v1019
  %v1052 = vmul.f32 %v972, %v1034
  %v1053 = vmul.f32 %v973, %v1049
  %1054 = vst.msk [vmem:[%s16] sm:$0xff] %vm441, %v1050
  %1055 = vst.msk [vmem:[%s16 + $0x8] sm:$0xff] %vm441, %v1051
  %1056 = vst.msk [vmem:[%s16 + $0x10] sm:$0xff] %vm441, %v1052
  %1057 = vst.msk [vmem:[%s16 + $0x18] sm:$0xff] %vm441, %v1053
  // Predicated region
  $region66: #{gcn_forward.3} parent=0 // pred_check
    _
  $region67: #{gcn_forward.3} parent=0 // pred_check_branch
    %1059 = sbr.rel (0) target = $region69
  $region68: #{gcn_forward.3} parent=0 // pred_region
    _
  $region69: #{gcn_forward.3} parent=0 // pred_fallthru
    _
  // Predicated region
  $region70: #{gcn_forward.3} parent=0 // pred_check
    _
  $region71: #{gcn_forward.3} parent=0 // pred_check_branch
    %1061 = sbr.rel (0) target = $region73
  $region72: #{gcn_forward.3} parent=0 // pred_region
    _
  $region73: #{gcn_forward.3} parent=0 // pred_fallthru
    _

</llo_original>
